<compile_context>
chip_gen: v6e
topology: v6e:2x2x1
jax: 0.10.0
libtpu: 0.0.40
codegen_flags: <defaults>
</compile_context>

<pallas_src>
import functools

import jax
import jax.numpy as jnp
from jax import lax
from jax.experimental import pallas as pl
from jax.experimental.pallas import tpu as pltpu

_PAD = 2  # max halo needed by any conv in the module ((1,5)/(5,1) -> pad 2)


# ------------------------------------------------------------------ in-kernel helpers
def _im2col(pad_ref, kh, kw, cin, c0, h2, w2, dot_dtype):
    """Gather Kh*Kw shifted slices of the zero-padded source staged at channel
    offset `c0` of pad_ref; return the (H2*W2, Kh*Kw*Cin) im2col operand."""
    ph, pw = kh // 2, kw // 2
    taps = []
    for dy in range(kh):
        for dx in range(kw):
            oy = _PAD + dy - ph
            ox = _PAD + dx - pw
            taps.append(pad_ref[oy:oy + h2, ox:ox + w2, c0:c0 + cin])
    cols = taps[0] if len(taps) == 1 else jnp.concatenate(taps, axis=-1)
    return cols.reshape(h2 * w2, kh * kw * cin).astype(dot_dtype)


def _conv_from_scratch(pad_ref, kh, kw, cin, c0, h2, w2, w, b, dot_dtype):
    """'SAME' zero-padded conv as a single im2col matmul; returns (H2*W2, Cout) f32."""
    cols = _im2col(pad_ref, kh, kw, cin, c0, h2, w2, dot_dtype)
    out = jnp.dot(cols, w, preferred_element_type=jnp.float32)
    return out if b is None else out + b


def _attn_branch(pad_ref, src, kh, kw, wa, ba, wb, bb, dot_dtype):
    """conv -> ReLU -> conv -> sigmoid gate; returns src * gate as (H2*W2, C) f32.
    src: (H2, W2, C) float32; spatial convs stage `src` into the scratch working
    channels so the zero border of the scratch provides the conv padding."""
    h2, w2, c = src.shape
    r = wa.shape[-1]
    work = 4 * c  # working-channel offset inside pad_ref (after the 4C concat region)
    flat = src.reshape(h2 * w2, c)
    if kh == 1 and kw == 1:  # 1x1 branch: plain matmuls, no spatial staging
        h = jnp.dot(flat.astype(dot_dtype), wa, preferred_element_type=jnp.float32) + ba
        h = jnp.maximum(h, 0.0)
        a = jnp.dot(h.astype(dot_dtype), wb, preferred_element_type=jnp.float32) + bb
    else:
        pad_ref[_PAD:_PAD + h2, _PAD:_PAD + w2, work:work + c] = src
        h = _conv_from_scratch(pad_ref, kh, kw, c, work, h2, w2, wa, ba, dot_dtype)
        h = jnp.maximum(h, 0.0)
        pad_ref[_PAD:_PAD + h2, _PAD:_PAD + w2, work:work + r] = h.reshape(h2, w2, r)
        a = _conv_from_scratch(pad_ref, kh, kw, r, work, h2, w2, wb, bb, dot_dtype)
    return flat * jax.nn.sigmoid(a)


# ------------------------------------------------------------------ Pallas kernel
def _raindrop_kernel(
    x_ref,
    lf_wa_ref, lf_ba_ref, lf_wb_ref, lf_bb_ref,
    h_wa_ref, h_ba_ref, h_wb_ref, h_bb_ref,
    v_wa_ref, v_ba_ref, v_wb_ref, v_bb_ref,
    d_wa_ref, d_ba_ref, d_wb_ref, d_bb_ref,
    f_w_ref, f_b_ref, bn_scale_ref, bn_shift_ref,
    o_wt_ref, o_bt_ref,
    conv_out_ref, attn_out_ref,
    pad_ref,
    *, dot_dtype,
):
    blk = x_ref[...]                          # (1, H2, 2, W2, 2C) float32
    _, h2, _, w2, twoc = blk.shape
    c = twoc // 2

    # 2x2 polyphase components of the full-resolution image
    xe = blk[0, :, 0, :, :]                   # rows 2i   -> (H2, W2, 2C)
    xo = blk[0, :, 1, :, :]                   # rows 2i+1
    x00, x01 = xe[:, :, :c], xe[:, :, c:]
    x10, x11 = xo[:, :, :c], xo[:, :, c:]

    # Haar DWT, J=1, mode='zero' (even H/W => no boundary padding).
    # Matches pytorch_wavelets AFB2D with pywt 'haar' filters: per axis
    # lo=(even+odd)/sqrt2, hi=(even-odd)/sqrt2, and
    # yH[0][:,:,0]=lo_w*hi_h, [:,:,1]=hi_w*lo_h, [:,:,2]=hi_w*hi_h.
    yl = 0.5 * (x00 + x01 + x10 + x11)
    yhh = 0.5 * (x00 + x01 - x10 - x11)
    yhv = 0.5 * (x00 - x01 + x10 - x11)
    yhd = 0.5 * (x00 - x01 - x10 + x11)

    # Zero the padded scratch: its (never-written) border supplies the zero padding
    # of every subsequent conv; interiors are always written before being read.
    pad_ref[...] = jnp.zeros(pad_ref.shape, pad_ref.dtype)

    def stage(idx, flat):  # write one gated branch into the 4C concat region
        pad_ref[_PAD:_PAD + h2, _PAD:_PAD + w2, idx * c:(idx + 1) * c] = (
            flat.reshape(h2, w2, c))

    # Branches one at a time, staged immediately (low peak live intermediates).
    stage(0, _attn_branch(pad_ref, yl, 1, 1, lf_wa_ref[...], lf_ba_ref[...],
                          lf_wb_ref[...], lf_bb_ref[...], dot_dtype))
    stage(1, _attn_branch(pad_ref, yhh, 1, 5, h_wa_ref[...], h_ba_ref[...],
                          h_wb_ref[...], h_bb_ref[...], dot_dtype))
    stage(2, _attn_branch(pad_ref, yhv, 5, 1, v_wa_ref[...], v_ba_ref[...],
                          v_wb_ref[...], v_bb_ref[...], dot_dtype))
    stage(3, _attn_branch(pad_ref, yhd, 3, 3, d_wa_ref[...], d_ba_ref[...],
                          d_wb_ref[...], d_bb_ref[...], dot_dtype))

    # Fusion conv: one 3x3 conv over the channel-concatenated 4C staging region
    # (single matmul with K = 9*4C), then folded eval-mode BatchNorm + ReLU.
    fused = _conv_from_scratch(pad_ref, 3, 3, 4 * c, 0, h2, w2,
                               f_w_ref[...], f_b_ref[...], dot_dtype)
    attn = jnp.maximum(fused * bn_scale_ref[...] + bn_shift_ref[...], 0.0)  # (H2*W2, C)
    attn_sp = attn.reshape(h2, w2, c)

    # RainDropFeatureExtractor.conv: 3x3 + ReLU, computed channel-major via an
    # a@b.T-style dot_general so the primary output stores lane-dense rows of
    # length H2*W2 with no in-kernel transpose.
    work = 4 * c
    pad_ref[_PAD:_PAD + h2, _PAD:_PAD + w2, work:work + c] = attn_sp
    cols_o = _im2col(pad_ref, 3, 3, c, work, h2, w2, dot_dtype)             # (H2*W2, 9C)
    conv_t = lax.dot_general(o_wt_ref[...], cols_o, (((1,), (1,)), ((), ())),
                             preferred_element_type=jnp.float32)            # (Cout, H2*W2)
    conv_t = jnp.maximum(conv_t + o_bt_ref[...], 0.0)

    conv_out_ref[0] = conv_t.astype(conv_out_ref.dtype)
    attn_out_ref[0] = attn_sp.astype(attn_out_ref.dtype)


# ------------------------------------------------------------------ wrapper
def raindrop_feature_extractor(x_nchw, params, *, dot_dtype=jnp.bfloat16):
    """Returns (conv_out, attention_out) in NCHW, like the PyTorch module.
    Set dot_dtype=jnp.float32 for bit-parity with an f32 reference."""
    N, C, H, W = x_nchw.shape
    assert H % 2 == 0 and W % 2 == 0, "Haar DWT path assumes even spatial dims"
    H2, W2 = H // 2, W // 2
    M = H2 * W2
    Cout = params["o_w"].shape[-1]

    # NCHW -> NHWC -> (N, H2, 2, W2, 2C): one layout pass; the 2x2 polyphase
    # split of the Haar DWT is done inside the kernel (no extra HBM arrays).
    x = jnp.transpose(x_nchw, (0, 2, 3, 1)).astype(jnp.float32)
    x = x.reshape(N, H2, 2, W2, 2 * C)

    def w2d(w):  # (Kh,Kw,Cin,Co) -> im2col form (Kh*Kw*Cin, Co), cast for the MXU
        kh, kw, cin, co = w.shape
        return w.reshape(kh * kw * cin, co).astype(dot_dtype)

    # eval-mode BatchNorm folded to per-channel scale/shift (f32)
    eps = 1e-5
    bn_scale = (params["bn_g"] * jax.lax.rsqrt(params["bn_v"] + eps)).reshape(1, C)
    bn_shift = (params["bn_b"] - params["bn_m"] * bn_scale).reshape(1, C)
    bn_scale = bn_scale.astype(jnp.float32)
    bn_shift = bn_shift.astype(jnp.float32)

    o_wt = jnp.transpose(w2d(params["o_w"]))                 # (Cout, 9C)
    o_bt = params["o_b"].reshape(Cout, 1).astype(jnp.float32)

    ins = [
        x,
        w2d(params["lf_w1"]), params["lf_b1"], w2d(params["lf_w2"]), params["lf_b2"],
        w2d(params["h_w1"]), params["h_b1"], w2d(params["h_w2"]), params["h_b2"],
        w2d(params["v_w1"]), params["v_b1"], w2d(params["v_w2"]), params["v_b2"],
        w2d(params["d_w1"]), params["d_b1"], w2d(params["d_w2"]), params["d_b2"],
        w2d(params["f_w"]), params["f_b"], bn_scale, bn_shift,
        o_wt, o_bt,
    ]

    def batch_spec(shape):
        nd = len(shape)
        return pl.BlockSpec((1,) + tuple(shape[1:]),
                            lambda n, nd=nd: (n,) + (0,) * (nd - 1))

    def rep_spec(arr):
        nd = arr.ndim
        return pl.BlockSpec(tuple(arr.shape), lambda n, nd=nd: (0,) * nd)

    in_specs = [batch_spec(x.shape)] + [rep_spec(a) for a in ins[1:]]
    out_specs = (batch_spec((N, Cout, M)), batch_spec((N, H2, W2, C)))
    out_shape = (jax.ShapeDtypeStruct((N, Cout, M), jnp.float32),
                 jax.ShapeDtypeStruct((N, H2, W2, C), jnp.float32))

    kernel = functools.partial(_raindrop_kernel, dot_dtype=dot_dtype)
    conv_out, attn_out = pl.pallas_call(
        kernel,
        grid=(N,),
        in_specs=in_specs,
        out_specs=out_specs,
        out_shape=out_shape,
        # One zero-padded scratch: channels [0:4C] = concat staging for the fusion
        # conv, channels [4C:5C] = working area for the per-branch / final convs.
        scratch_shapes=[pltpu.VMEM((H2 + 2 * _PAD, W2 + 2 * _PAD, 5 * C), jnp.float32)],
        compiler_params=pltpu.CompilerParams(dimension_semantics=("parallel",)),
    )(*ins)

    # back to the PyTorch NCHW convention (main output needs only a free reshape)
    conv_out = conv_out.reshape(N, Cout, H2, W2)
    attn_out = jnp.transpose(attn_out, (0, 3, 1, 2))
    return conv_out, attn_out


# ------------------------------------------------------------------ parameter init
def init_params(key, in_channels, out_channels, reduction=16):
    C = in_channels
    R = max(C // reduction, 1)
    keys = jax.random.split(key, 32)
    k = iter(keys)

    def w(shape):
        return 0.1 * jax.random.normal(next(k), shape, jnp.float32)

    def b(n):
        return 0.1 * jax.random.normal(next(k), (1, n), jnp.float32)

    return {
        # low_freq_attention: 1x1 -> ReLU -> 1x1 -> Sigmoid
        "lf_w1": w((1, 1, C, R)), "lf_b1": b(R),
        "lf_w2": w((1, 1, R, C)), "lf_b2": b(C),
        # horizontal: (1,5) strips
        "h_w1": w((1, 5, C, R)), "h_b1": b(R),
        "h_w2": w((1, 5, R, C)), "h_b2": b(C),
        # vertical: (5,1) strips
        "v_w1": w((5, 1, C, R)), "v_b1": b(R),
        "v_w2": w((5, 1, R, C)), "v_b2": b(C),
        # diagonal: 3x3
        "d_w1": w((3, 3, C, R)), "d_b1": b(R),
        "d_w2": w((3, 3, R, C)), "d_b2": b(C),
        # fusion conv 4C -> C, 3x3, + BatchNorm (eval-mode, PyTorch init stats)
        "f_w": w((3, 3, 4 * C, C)), "f_b": b(C),
        "bn_g": jnp.ones((1, C), jnp.float32),
        "bn_b": jnp.zeros((1, C), jnp.float32),
        "bn_m": jnp.zeros((1, C), jnp.float32),
        "bn_v": jnp.ones((1, C), jnp.float32),
        # RainDropFeatureExtractor.conv: 3x3, C -> out_channels
        "o_w": w((3, 3, C, out_channels)), "o_b": b(out_channels),
    }


if __name__ == "__main__":
    key = jax.random.PRNGKey(0)
    k_param, k_x = jax.random.split(key)

    N, C, H, W = 2, 4, 16, 16
    OUT_C = 8

    params = init_params(k_param, C, OUT_C)
    x = jax.random.normal(k_x, (N, C, H, W), jnp.float32)

    conv_out, attn_out = raindrop_feature_extractor(x, params)
    jax.block_until_ready((conv_out, attn_out))

    assert conv_out.shape == (N, OUT_C, H // 2, W // 2), conv_out.shape
    assert attn_out.shape == (N, C, H // 2, W // 2), attn_out.shape
    assert bool(jnp.all(jnp.isfinite(conv_out))) and bool(jnp.all(jnp.isfinite(attn_out)))
    print("KERNEL_OK")
</pallas_src>

<mosaic_0001>
module attributes {stable_mosaic.version = 11 : i64} {
  func.func @_raindrop_kernel(%arg0: i32, %arg1: memref<1x8x2x8x8xf32, #tpu.memory_space<vmem>>, %arg2: memref<4x1xbf16, #tpu.memory_space<vmem>>, %arg3: memref<1x1xf32, #tpu.memory_space<vmem>>, %arg4: memref<1x4xbf16, #tpu.memory_space<vmem>>, %arg5: memref<1x4xf32, #tpu.memory_space<vmem>>, %arg6: memref<20x1xbf16, #tpu.memory_space<vmem>>, %arg7: memref<1x1xf32, #tpu.memory_space<vmem>>, %arg8: memref<5x4xbf16, #tpu.memory_space<vmem>>, %arg9: memref<1x4xf32, #tpu.memory_space<vmem>>, %arg10: memref<20x1xbf16, #tpu.memory_space<vmem>>, %arg11: memref<1x1xf32, #tpu.memory_space<vmem>>, %arg12: memref<5x4xbf16, #tpu.memory_space<vmem>>, %arg13: memref<1x4xf32, #tpu.memory_space<vmem>>, %arg14: memref<36x1xbf16, #tpu.memory_space<vmem>>, %arg15: memref<1x1xf32, #tpu.memory_space<vmem>>, %arg16: memref<9x4xbf16, #tpu.memory_space<vmem>>, %arg17: memref<1x4xf32, #tpu.memory_space<vmem>>, %arg18: memref<144x4xbf16, #tpu.memory_space<vmem>>, %arg19: memref<1x4xf32, #tpu.memory_space<vmem>>, %arg20: memref<1x4xf32, #tpu.memory_space<vmem>>, %arg21: memref<1x4xf32, #tpu.memory_space<vmem>>, %arg22: memref<8x36xbf16, #tpu.memory_space<vmem>>, %arg23: memref<8x1xf32, #tpu.memory_space<vmem>>, %arg24: memref<1x8x64xf32, #tpu.memory_space<vmem>>, %arg25: memref<1x8x8x4xf32, #tpu.memory_space<vmem>>, %arg26: memref<12x12x20xf32, #tpu.memory_space<vmem>>) attributes {dimension_semantics = [#tpu.dimension_semantics<parallel>], iteration_bounds = array<i64: 2>, scalar_prefetch = 0 : i64, scratch_operands = 1 : i64, tpu.core_type = #tpu.core_type<tc>, window_params = [{transform_indices = @transform_0, window_bounds = array<i64: 1, 8, 2, 8, 8>}, {pipeline_mode = #tpu.pipeline_mode<synchronous>, transform_indices = @transform_1, window_bounds = array<i64: 4, 1>}, {pipeline_mode = #tpu.pipeline_mode<synchronous>, transform_indices = @transform_2, window_bounds = array<i64: 1, 1>}, {pipeline_mode = #tpu.pipeline_mode<synchronous>, transform_indices = @transform_3, window_bounds = array<i64: 1, 4>}, {pipeline_mode = #tpu.pipeline_mode<synchronous>, transform_indices = @transform_4, window_bounds = array<i64: 1, 4>}, {pipeline_mode = #tpu.pipeline_mode<synchronous>, transform_indices = @transform_5, window_bounds = array<i64: 20, 1>}, {pipeline_mode = #tpu.pipeline_mode<synchronous>, transform_indices = @transform_6, window_bounds = array<i64: 1, 1>}, {pipeline_mode = #tpu.pipeline_mode<synchronous>, transform_indices = @transform_7, window_bounds = array<i64: 5, 4>}, {pipeline_mode = #tpu.pipeline_mode<synchronous>, transform_indices = @transform_8, window_bounds = array<i64: 1, 4>}, {pipeline_mode = #tpu.pipeline_mode<synchronous>, transform_indices = @transform_9, window_bounds = array<i64: 20, 1>}, {pipeline_mode = #tpu.pipeline_mode<synchronous>, transform_indices = @transform_10, window_bounds = array<i64: 1, 1>}, {pipeline_mode = #tpu.pipeline_mode<synchronous>, transform_indices = @transform_11, window_bounds = array<i64: 5, 4>}, {pipeline_mode = #tpu.pipeline_mode<synchronous>, transform_indices = @transform_12, window_bounds = array<i64: 1, 4>}, {pipeline_mode = #tpu.pipeline_mode<synchronous>, transform_indices = @transform_13, window_bounds = array<i64: 36, 1>}, {pipeline_mode = #tpu.pipeline_mode<synchronous>, transform_indices = @transform_14, window_bounds = array<i64: 1, 1>}, {pipeline_mode = #tpu.pipeline_mode<synchronous>, transform_indices = @transform_15, window_bounds = array<i64: 9, 4>}, {pipeline_mode = #tpu.pipeline_mode<synchronous>, transform_indices = @transform_16, window_bounds = array<i64: 1, 4>}, {pipeline_mode = #tpu.pipeline_mode<synchronous>, transform_indices = @transform_17, window_bounds = array<i64: 144, 4>}, {pipeline_mode = #tpu.pipeline_mode<synchronous>, transform_indices = @transform_18, window_bounds = array<i64: 1, 4>}, {pipeline_mode = #tpu.pipeline_mode<synchronous>, transform_indices = @transform_19, window_bounds = array<i64: 1, 4>}, {pipeline_mode = #tpu.pipeline_mode<synchronous>, transform_indices = @transform_20, window_bounds = array<i64: 1, 4>}, {pipeline_mode = #tpu.pipeline_mode<synchronous>, transform_indices = @transform_21, window_bounds = array<i64: 8, 36>}, {pipeline_mode = #tpu.pipeline_mode<synchronous>, transform_indices = @transform_22, window_bounds = array<i64: 8, 1>}, {transform_indices = @transform_23, window_bounds = array<i64: 1, 8, 64>}, {transform_indices = @transform_24, window_bounds = array<i64: 1, 8, 8, 4>}]} {
    %c0 = arith.constant 0 : index
    %c0_0 = arith.constant 0 : index
    %c0_1 = arith.constant 0 : index
    %c0_2 = arith.constant 0 : index
    %c0_3 = arith.constant 0 : index
    %0 = vector.load %arg1[%c0, %c0_0, %c0_1, %c0_2, %c0_3] : memref<1x8x2x8x8xf32, #tpu.memory_space<vmem>>, vector<1x8x2x8x8xf32>
    %1 = vector.extract_strided_slice %0 {offsets = [0, 0, 0, 0, 0], sizes = [1, 8, 1, 8, 8], strides = [1, 1, 1, 1, 1]} : vector<1x8x2x8x8xf32> to vector<1x8x1x8x8xf32>
    %2 = vector.shape_cast %1 : vector<1x8x1x8x8xf32> to vector<8x8x8xf32>
    %3 = vector.extract_strided_slice %0 {offsets = [0, 0, 1, 0, 0], sizes = [1, 8, 1, 8, 8], strides = [1, 1, 1, 1, 1]} : vector<1x8x2x8x8xf32> to vector<1x8x1x8x8xf32>
    %4 = vector.shape_cast %3 : vector<1x8x1x8x8xf32> to vector<8x8x8xf32>
    %5 = vector.extract_strided_slice %2 {offsets = [0, 0, 0], sizes = [8, 8, 4], strides = [1, 1, 1]} : vector<8x8x8xf32> to vector<8x8x4xf32>
    %6 = vector.extract_strided_slice %2 {offsets = [0, 0, 4], sizes = [8, 8, 4], strides = [1, 1, 1]} : vector<8x8x8xf32> to vector<8x8x4xf32>
    %7 = vector.extract_strided_slice %4 {offsets = [0, 0, 0], sizes = [8, 8, 4], strides = [1, 1, 1]} : vector<8x8x8xf32> to vector<8x8x4xf32>
    %8 = vector.extract_strided_slice %4 {offsets = [0, 0, 4], sizes = [8, 8, 4], strides = [1, 1, 1]} : vector<8x8x8xf32> to vector<8x8x4xf32>
    %9 = arith.addf %5, %6 : vector<8x8x4xf32>
    %10 = arith.addf %9, %7 : vector<8x8x4xf32>
    %11 = arith.addf %10, %8 : vector<8x8x4xf32>
    %cst = arith.constant 5.000000e-01 : f32
    %12 = vector.broadcast %cst : f32 to vector<8x8x4xf32>
    %13 = arith.mulf %12, %11 : vector<8x8x4xf32>
    %14 = arith.addf %5, %6 : vector<8x8x4xf32>
    %15 = arith.subf %14, %7 : vector<8x8x4xf32>
    %16 = arith.subf %15, %8 : vector<8x8x4xf32>
    %cst_4 = arith.constant 5.000000e-01 : f32
    %17 = vector.broadcast %cst_4 : f32 to vector<8x8x4xf32>
    %18 = arith.mulf %17, %16 : vector<8x8x4xf32>
    %19 = arith.subf %5, %6 : vector<8x8x4xf32>
    %20 = arith.addf %19, %7 : vector<8x8x4xf32>
    %21 = arith.subf %20, %8 : vector<8x8x4xf32>
    %cst_5 = arith.constant 5.000000e-01 : f32
    %22 = vector.broadcast %cst_5 : f32 to vector<8x8x4xf32>
    %23 = arith.mulf %22, %21 : vector<8x8x4xf32>
    %24 = arith.subf %5, %6 : vector<8x8x4xf32>
    %25 = arith.subf %24, %7 : vector<8x8x4xf32>
    %26 = arith.addf %25, %8 : vector<8x8x4xf32>
    %cst_6 = arith.constant 5.000000e-01 : f32
    %27 = vector.broadcast %cst_6 : f32 to vector<8x8x4xf32>
    %28 = arith.mulf %27, %26 : vector<8x8x4xf32>
    %cst_7 = arith.constant 0.000000e+00 : f32
    %29 = vector.broadcast %cst_7 : f32 to vector<12x12x20xf32>
    %c0_8 = arith.constant 0 : index
    %c0_9 = arith.constant 0 : index
    %c0_10 = arith.constant 0 : index
    %30 = vector.load %arg26[%c0_8, %c0_9, %c0_10] : memref<12x12x20xf32, #tpu.memory_space<vmem>>, vector<12x12x20xf32>
    tpu.vector_store %arg26[%c0_8, %c0_9, %c0_10], %29 {strides = array<i32>} : memref<12x12x20xf32, #tpu.memory_space<vmem>>, vector<12x12x20xf32>,
    %c0_11 = arith.constant 0 : index
    %c0_12 = arith.constant 0 : index
    %31 = vector.load %arg2[%c0_11, %c0_12] : memref<4x1xbf16, #tpu.memory_space<vmem>>, vector<4x1xbf16>
    %c0_13 = arith.constant 0 : index
    %c0_14 = arith.constant 0 : index
    %32 = vector.load %arg3[%c0_13, %c0_14] : memref<1x1xf32, #tpu.memory_space<vmem>>, vector<1x1xf32>
    %c0_15 = arith.constant 0 : index
    %c0_16 = arith.constant 0 : index
    %33 = vector.load %arg4[%c0_15, %c0_16] : memref<1x4xbf16, #tpu.memory_space<vmem>>, vector<1x4xbf16>
    %c0_17 = arith.constant 0 : index
    %c0_18 = arith.constant 0 : index
    %34 = vector.load %arg5[%c0_17, %c0_18] : memref<1x4xf32, #tpu.memory_space<vmem>>, vector<1x4xf32>
    %35 = vector.shape_cast %13 : vector<8x8x4xf32> to vector<64x4xf32>
    %36 = arith.truncf %35 : vector<64x4xf32> to vector<64x4xbf16>
    %cst_19 = arith.constant dense<0.000000e+00> : vector<64x1xf32>
    %37 = tpu.matmul %36, %31, %cst_19 {dimension_numbers = #tpu.dot_dimension_numbers<[1], [0], [0], [1], [0, 0, 1, 1], [], []>} : vector<64x4xbf16>, vector<4x1xbf16>, vector<64x1xf32> -> vector<64x1xf32>
    %38 = vector.broadcast %32 : vector<1x1xf32> to vector<64x1xf32>
    %39 = arith.addf %37, %38 : vector<64x1xf32>
    %cst_20 = arith.constant 0.000000e+00 : f32
    %40 = vector.broadcast %cst_20 : f32 to vector<64x1xf32>
    %41 = arith.maximumf %39, %40 : vector<64x1xf32>
    %42 = arith.truncf %41 : vector<64x1xf32> to vector<64x1xbf16>
    %cst_21 = arith.constant dense<0.000000e+00> : vector<64x4xf32>
    %43 = tpu.matmul %42, %33, %cst_21 {dimension_numbers = #tpu.dot_dimension_numbers<[1], [0], [0], [1], [0, 0, 1, 1], [], []>} : vector<64x1xbf16>, vector<1x4xbf16>, vector<64x4xf32> -> vector<64x4xf32>
    %44 = vector.broadcast %34 : vector<1x4xf32> to vector<64x4xf32>
    %45 = arith.addf %43, %44 : vector<64x4xf32>
    %46 = arith.negf %45 : vector<64x4xf32>
    %47 = math.exp %46 : vector<64x4xf32>
    %cst_22 = arith.constant 1.000000e+00 : f32
    %48 = vector.broadcast %cst_22 : f32 to vector<64x4xf32>
    %49 = arith.addf %48, %47 : vector<64x4xf32>
    %50 = arith.divf %48, %49 : vector<64x4xf32>
    %51 = arith.mulf %35, %50 : vector<64x4xf32>
    %52 = vector.shape_cast %51 : vector<64x4xf32> to vector<8x8x4xf32>
    %c2 = arith.constant 2 : index
    %c2_23 = arith.constant 2 : index
    %c0_24 = arith.constant 0 : index
    %53 = vector.load %arg26[%c2, %c2_23, %c0_24] : memref<12x12x20xf32, #tpu.memory_space<vmem>>, vector<8x8x4xf32>
    tpu.vector_store %arg26[%c2, %c2_23, %c0_24], %52 {strides = array<i32>} : memref<12x12x20xf32, #tpu.memory_space<vmem>>, vector<8x8x4xf32>,
    %c0_25 = arith.constant 0 : index
    %c0_26 = arith.constant 0 : index
    %54 = vector.load %arg6[%c0_25, %c0_26] : memref<20x1xbf16, #tpu.memory_space<vmem>>, vector<20x1xbf16>
    %c0_27 = arith.constant 0 : index
    %c0_28 = arith.constant 0 : index
    %55 = vector.load %arg7[%c0_27, %c0_28] : memref<1x1xf32, #tpu.memory_space<vmem>>, vector<1x1xf32>
    %c0_29 = arith.constant 0 : index
    %c0_30 = arith.constant 0 : index
    %56 = vector.load %arg8[%c0_29, %c0_30] : memref<5x4xbf16, #tpu.memory_space<vmem>>, vector<5x4xbf16>
    %c0_31 = arith.constant 0 : index
    %c0_32 = arith.constant 0 : index
    %57 = vector.load %arg9[%c0_31, %c0_32] : memref<1x4xf32, #tpu.memory_space<vmem>>, vector<1x4xf32>
    %58 = vector.shape_cast %18 : vector<8x8x4xf32> to vector<64x4xf32>
    %c2_33 = arith.constant 2 : index
    %c2_34 = arith.constant 2 : index
    %c16 = arith.constant 16 : index
    %59 = vector.load %arg26[%c2_33, %c2_34, %c16] : memref<12x12x20xf32, #tpu.memory_space<vmem>>, vector<8x8x4xf32>
    tpu.vector_store %arg26[%c2_33, %c2_34, %c16], %18 {strides = array<i32>} : memref<12x12x20xf32, #tpu.memory_space<vmem>>, vector<8x8x4xf32>,
    %c2_35 = arith.constant 2 : index
    %c0_36 = arith.constant 0 : index
    %c16_37 = arith.constant 16 : index
    %60 = vector.load %arg26[%c2_35, %c0_36, %c16_37] : memref<12x12x20xf32, #tpu.memory_space<vmem>>, vector<8x8x4xf32>
    %c2_38 = arith.constant 2 : index
    %c1 = arith.constant 1 : index
    %c16_39 = arith.constant 16 : index
    %61 = vector.load %arg26[%c2_38, %c1, %c16_39] : memref<12x12x20xf32, #tpu.memory_space<vmem>>, vector<8x8x4xf32>
    %c2_40 = arith.constant 2 : index
    %c2_41 = arith.constant 2 : index
    %c16_42 = arith.constant 16 : index
    %62 = vector.load %arg26[%c2_40, %c2_41, %c16_42] : memref<12x12x20xf32, #tpu.memory_space<vmem>>, vector<8x8x4xf32>
    %c2_43 = arith.constant 2 : index
    %c3 = arith.constant 3 : index
    %c16_44 = arith.constant 16 : index
    %63 = vector.load %arg26[%c2_43, %c3, %c16_44] : memref<12x12x20xf32, #tpu.memory_space<vmem>>, vector<8x8x4xf32>
    %c2_45 = arith.constant 2 : index
    %c4 = arith.constant 4 : index
    %c16_46 = arith.constant 16 : index
    %64 = vector.load %arg26[%c2_45, %c4, %c16_46] : memref<12x12x20xf32, #tpu.memory_space<vmem>>, vector<8x8x4xf32>
    %65 = tpu.concatenate %60, %61, %62, %63, %64 in 2 : vector<8x8x4xf32>, vector<8x8x4xf32>, vector<8x8x4xf32>, vector<8x8x4xf32>, vector<8x8x4xf32> -> vector<8x8x20xf32>
    %66 = vector.shape_cast %65 : vector<8x8x20xf32> to vector<64x20xf32>
    %67 = arith.truncf %66 : vector<64x20xf32> to vector<64x20xbf16>
    %cst_47 = arith.constant dense<0.000000e+00> : vector<64x1xf32>
    %68 = tpu.matmul %67, %54, %cst_47 {dimension_numbers = #tpu.dot_dimension_numbers<[1], [0], [0], [1], [0, 0, 1, 1], [], []>} : vector<64x20xbf16>, vector<20x1xbf16>, vector<64x1xf32> -> vector<64x1xf32>
    %69 = vector.broadcast %55 : vector<1x1xf32> to vector<64x1xf32>
    %70 = arith.addf %68, %69 : vector<64x1xf32>
    %cst_48 = arith.constant 0.000000e+00 : f32
    %71 = vector.broadcast %cst_48 : f32 to vector<64x1xf32>
    %72 = arith.maximumf %70, %71 : vector<64x1xf32>
    %73 = vector.shape_cast %72 : vector<64x1xf32> to vector<8x8x1xf32>
    %c2_49 = arith.constant 2 : index
    %c2_50 = arith.constant 2 : index
    %c16_51 = arith.constant 16 : index
    %74 = vector.load %arg26[%c2_49, %c2_50, %c16_51] : memref<12x12x20xf32, #tpu.memory_space<vmem>>, vector<8x8x1xf32>
    tpu.vector_store %arg26[%c2_49, %c2_50, %c16_51], %73 {strides = array<i32>} : memref<12x12x20xf32, #tpu.memory_space<vmem>>, vector<8x8x1xf32>,
    %c2_52 = arith.constant 2 : index
    %c0_53 = arith.constant 0 : index
    %c16_54 = arith.constant 16 : index
    %75 = vector.load %arg26[%c2_52, %c0_53, %c16_54] : memref<12x12x20xf32, #tpu.memory_space<vmem>>, vector<8x8x1xf32>
    %c2_55 = arith.constant 2 : index
    %c1_56 = arith.constant 1 : index
    %c16_57 = arith.constant 16 : index
    %76 = vector.load %arg26[%c2_55, %c1_56, %c16_57] : memref<12x12x20xf32, #tpu.memory_space<vmem>>, vector<8x8x1xf32>
    %c2_58 = arith.constant 2 : index
    %c2_59 = arith.constant 2 : index
    %c16_60 = arith.constant 16 : index
    %77 = vector.load %arg26[%c2_58, %c2_59, %c16_60] : memref<12x12x20xf32, #tpu.memory_space<vmem>>, vector<8x8x1xf32>
    %c2_61 = arith.constant 2 : index
    %c3_62 = arith.constant 3 : index
    %c16_63 = arith.constant 16 : index
    %78 = vector.load %arg26[%c2_61, %c3_62, %c16_63] : memref<12x12x20xf32, #tpu.memory_space<vmem>>, vector<8x8x1xf32>
    %c2_64 = arith.constant 2 : index
    %c4_65 = arith.constant 4 : index
    %c16_66 = arith.constant 16 : index
    %79 = vector.load %arg26[%c2_64, %c4_65, %c16_66] : memref<12x12x20xf32, #tpu.memory_space<vmem>>, vector<8x8x1xf32>
    %80 = tpu.concatenate %75, %76, %77, %78, %79 in 2 : vector<8x8x1xf32>, vector<8x8x1xf32>, vector<8x8x1xf32>, vector<8x8x1xf32>, vector<8x8x1xf32> -> vector<8x8x5xf32>
    %81 = vector.shape_cast %80 : vector<8x8x5xf32> to vector<64x5xf32>
    %82 = arith.truncf %81 : vector<64x5xf32> to vector<64x5xbf16>
    %cst_67 = arith.constant dense<0.000000e+00> : vector<64x4xf32>
    %83 = tpu.matmul %82, %56, %cst_67 {dimension_numbers = #tpu.dot_dimension_numbers<[1], [0], [0], [1], [0, 0, 1, 1], [], []>} : vector<64x5xbf16>, vector<5x4xbf16>, vector<64x4xf32> -> vector<64x4xf32>
    %84 = vector.broadcast %57 : vector<1x4xf32> to vector<64x4xf32>
    %85 = arith.addf %83, %84 : vector<64x4xf32>
    %86 = arith.negf %85 : vector<64x4xf32>
    %87 = math.exp %86 : vector<64x4xf32>
    %cst_68 = arith.constant 1.000000e+00 : f32
    %88 = vector.broadcast %cst_68 : f32 to vector<64x4xf32>
    %89 = arith.addf %88, %87 : vector<64x4xf32>
    %90 = arith.divf %88, %89 : vector<64x4xf32>
    %91 = arith.mulf %58, %90 : vector<64x4xf32>
    %92 = vector.shape_cast %91 : vector<64x4xf32> to vector<8x8x4xf32>
    %c2_69 = arith.constant 2 : index
    %c2_70 = arith.constant 2 : index
    %c4_71 = arith.constant 4 : index
    %93 = vector.load %arg26[%c2_69, %c2_70, %c4_71] : memref<12x12x20xf32, #tpu.memory_space<vmem>>, vector<8x8x4xf32>
    tpu.vector_store %arg26[%c2_69, %c2_70, %c4_71], %92 {strides = array<i32>} : memref<12x12x20xf32, #tpu.memory_space<vmem>>, vector<8x8x4xf32>,
    %c0_72 = arith.constant 0 : index
    %c0_73 = arith.constant 0 : index
    %94 = vector.load %arg10[%c0_72, %c0_73] : memref<20x1xbf16, #tpu.memory_space<vmem>>, vector<20x1xbf16>
    %c0_74 = arith.constant 0 : index
    %c0_75 = arith.constant 0 : index
    %95 = vector.load %arg11[%c0_74, %c0_75] : memref<1x1xf32, #tpu.memory_space<vmem>>, vector<1x1xf32>
    %c0_76 = arith.constant 0 : index
    %c0_77 = arith.constant 0 : index
    %96 = vector.load %arg12[%c0_76, %c0_77] : memref<5x4xbf16, #tpu.memory_space<vmem>>, vector<5x4xbf16>
    %c0_78 = arith.constant 0 : index
    %c0_79 = arith.constant 0 : index
    %97 = vector.load %arg13[%c0_78, %c0_79] : memref<1x4xf32, #tpu.memory_space<vmem>>, vector<1x4xf32>
    %98 = vector.shape_cast %23 : vector<8x8x4xf32> to vector<64x4xf32>
    %c2_80 = arith.constant 2 : index
    %c2_81 = arith.constant 2 : index
    %c16_82 = arith.constant 16 : index
    %99 = vector.load %arg26[%c2_80, %c2_81, %c16_82] : memref<12x12x20xf32, #tpu.memory_space<vmem>>, vector<8x8x4xf32>
    tpu.vector_store %arg26[%c2_80, %c2_81, %c16_82], %23 {strides = array<i32>} : memref<12x12x20xf32, #tpu.memory_space<vmem>>, vector<8x8x4xf32>,
    %c0_83 = arith.constant 0 : index
    %c2_84 = arith.constant 2 : index
    %c16_85 = arith.constant 16 : index
    %100 = vector.load %arg26[%c0_83, %c2_84, %c16_85] : memref<12x12x20xf32, #tpu.memory_space<vmem>>, vector<8x8x4xf32>
    %c1_86 = arith.constant 1 : index
    %c2_87 = arith.constant 2 : index
    %c16_88 = arith.constant 16 : index
    %101 = vector.load %arg26[%c1_86, %c2_87, %c16_88] : memref<12x12x20xf32, #tpu.memory_space<vmem>>, vector<8x8x4xf32>
    %c2_89 = arith.constant 2 : index
    %c2_90 = arith.constant 2 : index
    %c16_91 = arith.constant 16 : index
    %102 = vector.load %arg26[%c2_89, %c2_90, %c16_91] : memref<12x12x20xf32, #tpu.memory_space<vmem>>, vector<8x8x4xf32>
    %c3_92 = arith.constant 3 : index
    %c2_93 = arith.constant 2 : index
    %c16_94 = arith.constant 16 : index
    %103 = vector.load %arg26[%c3_92, %c2_93, %c16_94] : memref<12x12x20xf32, #tpu.memory_space<vmem>>, vector<8x8x4xf32>
    %c4_95 = arith.constant 4 : index
    %c2_96 = arith.constant 2 : index
    %c16_97 = arith.constant 16 : index
    %104 = vector.load %arg26[%c4_95, %c2_96, %c16_97] : memref<12x12x20xf32, #tpu.memory_space<vmem>>, vector<8x8x4xf32>
    %105 = tpu.concatenate %100, %101, %102, %103, %104 in 2 : vector<8x8x4xf32>, vector<8x8x4xf32>, vector<8x8x4xf32>, vector<8x8x4xf32>, vector<8x8x4xf32> -> vector<8x8x20xf32>
    %106 = vector.shape_cast %105 : vector<8x8x20xf32> to vector<64x20xf32>
    %107 = arith.truncf %106 : vector<64x20xf32> to vector<64x20xbf16>
    %cst_98 = arith.constant dense<0.000000e+00> : vector<64x1xf32>
    %108 = tpu.matmul %107, %94, %cst_98 {dimension_numbers = #tpu.dot_dimension_numbers<[1], [0], [0], [1], [0, 0, 1, 1], [], []>} : vector<64x20xbf16>, vector<20x1xbf16>, vector<64x1xf32> -> vector<64x1xf32>
    %109 = vector.broadcast %95 : vector<1x1xf32> to vector<64x1xf32>
    %110 = arith.addf %108, %109 : vector<64x1xf32>
    %cst_99 = arith.constant 0.000000e+00 : f32
    %111 = vector.broadcast %cst_99 : f32 to vector<64x1xf32>
    %112 = arith.maximumf %110, %111 : vector<64x1xf32>
    %113 = vector.shape_cast %112 : vector<64x1xf32> to vector<8x8x1xf32>
    %c2_100 = arith.constant 2 : index
    %c2_101 = arith.constant 2 : index
    %c16_102 = arith.constant 16 : index
    %114 = vector.load %arg26[%c2_100, %c2_101, %c16_102] : memref<12x12x20xf32, #tpu.memory_space<vmem>>, vector<8x8x1xf32>
    tpu.vector_store %arg26[%c2_100, %c2_101, %c16_102], %113 {strides = array<i32>} : memref<12x12x20xf32, #tpu.memory_space<vmem>>, vector<8x8x1xf32>,
    %c0_103 = arith.constant 0 : index
    %c2_104 = arith.constant 2 : index
    %c16_105 = arith.constant 16 : index
    %115 = vector.load %arg26[%c0_103, %c2_104, %c16_105] : memref<12x12x20xf32, #tpu.memory_space<vmem>>, vector<8x8x1xf32>
    %c1_106 = arith.constant 1 : index
    %c2_107 = arith.constant 2 : index
    %c16_108 = arith.constant 16 : index
    %116 = vector.load %arg26[%c1_106, %c2_107, %c16_108] : memref<12x12x20xf32, #tpu.memory_space<vmem>>, vector<8x8x1xf32>
    %c2_109 = arith.constant 2 : index
    %c2_110 = arith.constant 2 : index
    %c16_111 = arith.constant 16 : index
    %117 = vector.load %arg26[%c2_109, %c2_110, %c16_111] : memref<12x12x20xf32, #tpu.memory_space<vmem>>, vector<8x8x1xf32>
    %c3_112 = arith.constant 3 : index
    %c2_113 = arith.constant 2 : index
    %c16_114 = arith.constant 16 : index
    %118 = vector.load %arg26[%c3_112, %c2_113, %c16_114] : memref<12x12x20xf32, #tpu.memory_space<vmem>>, vector<8x8x1xf32>
    %c4_115 = arith.constant 4 : index
    %c2_116 = arith.constant 2 : index
    %c16_117 = arith.constant 16 : index
    %119 = vector.load %arg26[%c4_115, %c2_116, %c16_117] : memref<12x12x20xf32, #tpu.memory_space<vmem>>, vector<8x8x1xf32>
    %120 = tpu.concatenate %115, %116, %117, %118, %119 in 2 : vector<8x8x1xf32>, vector<8x8x1xf32>, vector<8x8x1xf32>, vector<8x8x1xf32>, vector<8x8x1xf32> -> vector<8x8x5xf32>
    %121 = vector.shape_cast %120 : vector<8x8x5xf32> to vector<64x5xf32>
    %122 = arith.truncf %121 : vector<64x5xf32> to vector<64x5xbf16>
    %cst_118 = arith.constant dense<0.000000e+00> : vector<64x4xf32>
    %123 = tpu.matmul %122, %96, %cst_118 {dimension_numbers = #tpu.dot_dimension_numbers<[1], [0], [0], [1], [0, 0, 1, 1], [], []>} : vector<64x5xbf16>, vector<5x4xbf16>, vector<64x4xf32> -> vector<64x4xf32>
    %124 = vector.broadcast %97 : vector<1x4xf32> to vector<64x4xf32>
    %125 = arith.addf %123, %124 : vector<64x4xf32>
    %126 = arith.negf %125 : vector<64x4xf32>
    %127 = math.exp %126 : vector<64x4xf32>
    %cst_119 = arith.constant 1.000000e+00 : f32
    %128 = vector.broadcast %cst_119 : f32 to vector<64x4xf32>
    %129 = arith.addf %128, %127 : vector<64x4xf32>
    %130 = arith.divf %128, %129 : vector<64x4xf32>
    %131 = arith.mulf %98, %130 : vector<64x4xf32>
    %132 = vector.shape_cast %131 : vector<64x4xf32> to vector<8x8x4xf32>
    %c2_120 = arith.constant 2 : index
    %c2_121 = arith.constant 2 : index
    %c8 = arith.constant 8 : index
    %133 = vector.load %arg26[%c2_120, %c2_121, %c8] : memref<12x12x20xf32, #tpu.memory_space<vmem>>, vector<8x8x4xf32>
    tpu.vector_store %arg26[%c2_120, %c2_121, %c8], %132 {strides = array<i32>} : memref<12x12x20xf32, #tpu.memory_space<vmem>>, vector<8x8x4xf32>,
    %c0_122 = arith.constant 0 : index
    %c0_123 = arith.constant 0 : index
    %134 = vector.load %arg14[%c0_122, %c0_123] : memref<36x1xbf16, #tpu.memory_space<vmem>>, vector<36x1xbf16>
    %c0_124 = arith.constant 0 : index
    %c0_125 = arith.constant 0 : index
    %135 = vector.load %arg15[%c0_124, %c0_125] : memref<1x1xf32, #tpu.memory_space<vmem>>, vector<1x1xf32>
    %c0_126 = arith.constant 0 : index
    %c0_127 = arith.constant 0 : index
    %136 = vector.load %arg16[%c0_126, %c0_127] : memref<9x4xbf16, #tpu.memory_space<vmem>>, vector<9x4xbf16>
    %c0_128 = arith.constant 0 : index
    %c0_129 = arith.constant 0 : index
    %137 = vector.load %arg17[%c0_128, %c0_129] : memref<1x4xf32, #tpu.memory_space<vmem>>, vector<1x4xf32>
    %138 = vector.shape_cast %28 : vector<8x8x4xf32> to vector<64x4xf32>
    %c2_130 = arith.constant 2 : index
    %c2_131 = arith.constant 2 : index
    %c16_132 = arith.constant 16 : index
    %139 = vector.load %arg26[%c2_130, %c2_131, %c16_132] : memref<12x12x20xf32, #tpu.memory_space<vmem>>, vector<8x8x4xf32>
    tpu.vector_store %arg26[%c2_130, %c2_131, %c16_132], %28 {strides = array<i32>} : memref<12x12x20xf32, #tpu.memory_space<vmem>>, vector<8x8x4xf32>,
    %c1_133 = arith.constant 1 : index
    %c1_134 = arith.constant 1 : index
    %c16_135 = arith.constant 16 : index
    %140 = vector.load %arg26[%c1_133, %c1_134, %c16_135] : memref<12x12x20xf32, #tpu.memory_space<vmem>>, vector<8x8x4xf32>
    %c1_136 = arith.constant 1 : index
    %c2_137 = arith.constant 2 : index
    %c16_138 = arith.constant 16 : index
    %141 = vector.load %arg26[%c1_136, %c2_137, %c16_138] : memref<12x12x20xf32, #tpu.memory_space<vmem>>, vector<8x8x4xf32>
    %c1_139 = arith.constant 1 : index
    %c3_140 = arith.constant 3 : index
    %c16_141 = arith.constant 16 : index
    %142 = vector.load %arg26[%c1_139, %c3_140, %c16_141] : memref<12x12x20xf32, #tpu.memory_space<vmem>>, vector<8x8x4xf32>
    %c2_142 = arith.constant 2 : index
    %c1_143 = arith.constant 1 : index
    %c16_144 = arith.constant 16 : index
    %143 = vector.load %arg26[%c2_142, %c1_143, %c16_144] : memref<12x12x20xf32, #tpu.memory_space<vmem>>, vector<8x8x4xf32>
    %c2_145 = arith.constant 2 : index
    %c2_146 = arith.constant 2 : index
    %c16_147 = arith.constant 16 : index
    %144 = vector.load %arg26[%c2_145, %c2_146, %c16_147] : memref<12x12x20xf32, #tpu.memory_space<vmem>>, vector<8x8x4xf32>
    %c2_148 = arith.constant 2 : index
    %c3_149 = arith.constant 3 : index
    %c16_150 = arith.constant 16 : index
    %145 = vector.load %arg26[%c2_148, %c3_149, %c16_150] : memref<12x12x20xf32, #tpu.memory_space<vmem>>, vector<8x8x4xf32>
    %c3_151 = arith.constant 3 : index
    %c1_152 = arith.constant 1 : index
    %c16_153 = arith.constant 16 : index
    %146 = vector.load %arg26[%c3_151, %c1_152, %c16_153] : memref<12x12x20xf32, #tpu.memory_space<vmem>>, vector<8x8x4xf32>
    %c3_154 = arith.constant 3 : index
    %c2_155 = arith.constant 2 : index
    %c16_156 = arith.constant 16 : index
    %147 = vector.load %arg26[%c3_154, %c2_155, %c16_156] : memref<12x12x20xf32, #tpu.memory_space<vmem>>, vector<8x8x4xf32>
    %c3_157 = arith.constant 3 : index
    %c3_158 = arith.constant 3 : index
    %c16_159 = arith.constant 16 : index
    %148 = vector.load %arg26[%c3_157, %c3_158, %c16_159] : memref<12x12x20xf32, #tpu.memory_space<vmem>>, vector<8x8x4xf32>
    %149 = tpu.concatenate %140, %141, %142, %143, %144, %145, %146, %147, %148 in 2 : vector<8x8x4xf32>, vector<8x8x4xf32>, vector<8x8x4xf32>, vector<8x8x4xf32>, vector<8x8x4xf32>, vector<8x8x4xf32>, vector<8x8x4xf32>, vector<8x8x4xf32>, vector<8x8x4xf32> -> vector<8x8x36xf32>
    %150 = vector.shape_cast %149 : vector<8x8x36xf32> to vector<64x36xf32>
    %151 = arith.truncf %150 : vector<64x36xf32> to vector<64x36xbf16>
    %cst_160 = arith.constant dense<0.000000e+00> : vector<64x1xf32>
    %152 = tpu.matmul %151, %134, %cst_160 {dimension_numbers = #tpu.dot_dimension_numbers<[1], [0], [0], [1], [0, 0, 1, 1], [], []>} : vector<64x36xbf16>, vector<36x1xbf16>, vector<64x1xf32> -> vector<64x1xf32>
    %153 = vector.broadcast %135 : vector<1x1xf32> to vector<64x1xf32>
    %154 = arith.addf %152, %153 : vector<64x1xf32>
    %cst_161 = arith.constant 0.000000e+00 : f32
    %155 = vector.broadcast %cst_161 : f32 to vector<64x1xf32>
    %156 = arith.maximumf %154, %155 : vector<64x1xf32>
    %157 = vector.shape_cast %156 : vector<64x1xf32> to vector<8x8x1xf32>
    %c2_162 = arith.constant 2 : index
    %c2_163 = arith.constant 2 : index
    %c16_164 = arith.constant 16 : index
    %158 = vector.load %arg26[%c2_162, %c2_163, %c16_164] : memref<12x12x20xf32, #tpu.memory_space<vmem>>, vector<8x8x1xf32>
    tpu.vector_store %arg26[%c2_162, %c2_163, %c16_164], %157 {strides = array<i32>} : memref<12x12x20xf32, #tpu.memory_space<vmem>>, vector<8x8x1xf32>,
    %c1_165 = arith.constant 1 : index
    %c1_166 = arith.constant 1 : index
    %c16_167 = arith.constant 16 : index
    %159 = vector.load %arg26[%c1_165, %c1_166, %c16_167] : memref<12x12x20xf32, #tpu.memory_space<vmem>>, vector<8x8x1xf32>
    %c1_168 = arith.constant 1 : index
    %c2_169 = arith.constant 2 : index
    %c16_170 = arith.constant 16 : index
    %160 = vector.load %arg26[%c1_168, %c2_169, %c16_170] : memref<12x12x20xf32, #tpu.memory_space<vmem>>, vector<8x8x1xf32>
    %c1_171 = arith.constant 1 : index
    %c3_172 = arith.constant 3 : index
    %c16_173 = arith.constant 16 : index
    %161 = vector.load %arg26[%c1_171, %c3_172, %c16_173] : memref<12x12x20xf32, #tpu.memory_space<vmem>>, vector<8x8x1xf32>
    %c2_174 = arith.constant 2 : index
    %c1_175 = arith.constant 1 : index
    %c16_176 = arith.constant 16 : index
    %162 = vector.load %arg26[%c2_174, %c1_175, %c16_176] : memref<12x12x20xf32, #tpu.memory_space<vmem>>, vector<8x8x1xf32>
    %c2_177 = arith.constant 2 : index
    %c2_178 = arith.constant 2 : index
    %c16_179 = arith.constant 16 : index
    %163 = vector.load %arg26[%c2_177, %c2_178, %c16_179] : memref<12x12x20xf32, #tpu.memory_space<vmem>>, vector<8x8x1xf32>
    %c2_180 = arith.constant 2 : index
    %c3_181 = arith.constant 3 : index
    %c16_182 = arith.constant 16 : index
    %164 = vector.load %arg26[%c2_180, %c3_181, %c16_182] : memref<12x12x20xf32, #tpu.memory_space<vmem>>, vector<8x8x1xf32>
    %c3_183 = arith.constant 3 : index
    %c1_184 = arith.constant 1 : index
    %c16_185 = arith.constant 16 : index
    %165 = vector.load %arg26[%c3_183, %c1_184, %c16_185] : memref<12x12x20xf32, #tpu.memory_space<vmem>>, vector<8x8x1xf32>
    %c3_186 = arith.constant 3 : index
    %c2_187 = arith.constant 2 : index
    %c16_188 = arith.constant 16 : index
    %166 = vector.load %arg26[%c3_186, %c2_187, %c16_188] : memref<12x12x20xf32, #tpu.memory_space<vmem>>, vector<8x8x1xf32>
    %c3_189 = arith.constant 3 : index
    %c3_190 = arith.constant 3 : index
    %c16_191 = arith.constant 16 : index
    %167 = vector.load %arg26[%c3_189, %c3_190, %c16_191] : memref<12x12x20xf32, #tpu.memory_space<vmem>>, vector<8x8x1xf32>
    %168 = tpu.concatenate %159, %160, %161, %162, %163, %164, %165, %166, %167 in 2 : vector<8x8x1xf32>, vector<8x8x1xf32>, vector<8x8x1xf32>, vector<8x8x1xf32>, vector<8x8x1xf32>, vector<8x8x1xf32>, vector<8x8x1xf32>, vector<8x8x1xf32>, vector<8x8x1xf32> -> vector<8x8x9xf32>
    %169 = vector.shape_cast %168 : vector<8x8x9xf32> to vector<64x9xf32>
    %170 = arith.truncf %169 : vector<64x9xf32> to vector<64x9xbf16>
    %cst_192 = arith.constant dense<0.000000e+00> : vector<64x4xf32>
    %171 = tpu.matmul %170, %136, %cst_192 {dimension_numbers = #tpu.dot_dimension_numbers<[1], [0], [0], [1], [0, 0, 1, 1], [], []>} : vector<64x9xbf16>, vector<9x4xbf16>, vector<64x4xf32> -> vector<64x4xf32>
    %172 = vector.broadcast %137 : vector<1x4xf32> to vector<64x4xf32>
    %173 = arith.addf %171, %172 : vector<64x4xf32>
    %174 = arith.negf %173 : vector<64x4xf32>
    %175 = math.exp %174 : vector<64x4xf32>
    %cst_193 = arith.constant 1.000000e+00 : f32
    %176 = vector.broadcast %cst_193 : f32 to vector<64x4xf32>
    %177 = arith.addf %176, %175 : vector<64x4xf32>
    %178 = arith.divf %176, %177 : vector<64x4xf32>
    %179 = arith.mulf %138, %178 : vector<64x4xf32>
    %180 = vector.shape_cast %179 : vector<64x4xf32> to vector<8x8x4xf32>
    %c2_194 = arith.constant 2 : index
    %c2_195 = arith.constant 2 : index
    %c12 = arith.constant 12 : index
    %181 = vector.load %arg26[%c2_194, %c2_195, %c12] : memref<12x12x20xf32, #tpu.memory_space<vmem>>, vector<8x8x4xf32>
    tpu.vector_store %arg26[%c2_194, %c2_195, %c12], %180 {strides = array<i32>} : memref<12x12x20xf32, #tpu.memory_space<vmem>>, vector<8x8x4xf32>,
    %c0_196 = arith.constant 0 : index
    %c0_197 = arith.constant 0 : index
    %182 = vector.load %arg18[%c0_196, %c0_197] : memref<144x4xbf16, #tpu.memory_space<vmem>>, vector<144x4xbf16>
    %c0_198 = arith.constant 0 : index
    %c0_199 = arith.constant 0 : index
    %183 = vector.load %arg19[%c0_198, %c0_199] : memref<1x4xf32, #tpu.memory_space<vmem>>, vector<1x4xf32>
    %c1_200 = arith.constant 1 : index
    %c1_201 = arith.constant 1 : index
    %c0_202 = arith.constant 0 : index
    %184 = vector.load %arg26[%c1_200, %c1_201, %c0_202] : memref<12x12x20xf32, #tpu.memory_space<vmem>>, vector<8x8x16xf32>
    %c1_203 = arith.constant 1 : index
    %c2_204 = arith.constant 2 : index
    %c0_205 = arith.constant 0 : index
    %185 = vector.load %arg26[%c1_203, %c2_204, %c0_205] : memref<12x12x20xf32, #tpu.memory_space<vmem>>, vector<8x8x16xf32>
    %c1_206 = arith.constant 1 : index
    %c3_207 = arith.constant 3 : index
    %c0_208 = arith.constant 0 : index
    %186 = vector.load %arg26[%c1_206, %c3_207, %c0_208] : memref<12x12x20xf32, #tpu.memory_space<vmem>>, vector<8x8x16xf32>
    %c2_209 = arith.constant 2 : index
    %c1_210 = arith.constant 1 : index
    %c0_211 = arith.constant 0 : index
    %187 = vector.load %arg26[%c2_209, %c1_210, %c0_211] : memref<12x12x20xf32, #tpu.memory_space<vmem>>, vector<8x8x16xf32>
    %c2_212 = arith.constant 2 : index
    %c2_213 = arith.constant 2 : index
    %c0_214 = arith.constant 0 : index
    %188 = vector.load %arg26[%c2_212, %c2_213, %c0_214] : memref<12x12x20xf32, #tpu.memory_space<vmem>>, vector<8x8x16xf32>
    %c2_215 = arith.constant 2 : index
    %c3_216 = arith.constant 3 : index
    %c0_217 = arith.constant 0 : index
    %189 = vector.load %arg26[%c2_215, %c3_216, %c0_217] : memref<12x12x20xf32, #tpu.memory_space<vmem>>, vector<8x8x16xf32>
    %c3_218 = arith.constant 3 : index
    %c1_219 = arith.constant 1 : index
    %c0_220 = arith.constant 0 : index
    %190 = vector.load %arg26[%c3_218, %c1_219, %c0_220] : memref<12x12x20xf32, #tpu.memory_space<vmem>>, vector<8x8x16xf32>
    %c3_221 = arith.constant 3 : index
    %c2_222 = arith.constant 2 : index
    %c0_223 = arith.constant 0 : index
    %191 = vector.load %arg26[%c3_221, %c2_222, %c0_223] : memref<12x12x20xf32, #tpu.memory_space<vmem>>, vector<8x8x16xf32>
    %c3_224 = arith.constant 3 : index
    %c3_225 = arith.constant 3 : index
    %c0_226 = arith.constant 0 : index
    %192 = vector.load %arg26[%c3_224, %c3_225, %c0_226] : memref<12x12x20xf32, #tpu.memory_space<vmem>>, vector<8x8x16xf32>
    %193 = tpu.concatenate %184, %185, %186, %187, %188, %189, %190, %191, %192 in 2 : vector<8x8x16xf32>, vector<8x8x16xf32>, vector<8x8x16xf32>, vector<8x8x16xf32>, vector<8x8x16xf32>, vector<8x8x16xf32>, vector<8x8x16xf32>, vector<8x8x16xf32>, vector<8x8x16xf32> -> vector<8x8x144xf32>
    %194 = vector.shape_cast %193 : vector<8x8x144xf32> to vector<64x144xf32>
    %195 = arith.truncf %194 : vector<64x144xf32> to vector<64x144xbf16>
    %cst_227 = arith.constant dense<0.000000e+00> : vector<64x4xf32>
    %196 = tpu.matmul %195, %182, %cst_227 {dimension_numbers = #tpu.dot_dimension_numbers<[1], [0], [0], [1], [0, 0, 1, 1], [], []>} : vector<64x144xbf16>, vector<144x4xbf16>, vector<64x4xf32> -> vector<64x4xf32>
    %197 = vector.broadcast %183 : vector<1x4xf32> to vector<64x4xf32>
    %198 = arith.addf %196, %197 : vector<64x4xf32>
    %c0_228 = arith.constant 0 : index
    %c0_229 = arith.constant 0 : index
    %199 = vector.load %arg20[%c0_228, %c0_229] : memref<1x4xf32, #tpu.memory_space<vmem>>, vector<1x4xf32>
    %200 = vector.broadcast %199 : vector<1x4xf32> to vector<64x4xf32>
    %201 = arith.mulf %198, %200 : vector<64x4xf32>
    %c0_230 = arith.constant 0 : index
    %c0_231 = arith.constant 0 : index
    %202 = vector.load %arg21[%c0_230, %c0_231] : memref<1x4xf32, #tpu.memory_space<vmem>>, vector<1x4xf32>
    %203 = vector.broadcast %202 : vector<1x4xf32> to vector<64x4xf32>
    %204 = arith.addf %201, %203 : vector<64x4xf32>
    %cst_232 = arith.constant 0.000000e+00 : f32
    %205 = vector.broadcast %cst_232 : f32 to vector<64x4xf32>
    %206 = arith.maximumf %204, %205 : vector<64x4xf32>
    %207 = vector.shape_cast %206 : vector<64x4xf32> to vector<8x8x4xf32>
    %c2_233 = arith.constant 2 : index
    %c2_234 = arith.constant 2 : index
    %c16_235 = arith.constant 16 : index
    %208 = vector.load %arg26[%c2_233, %c2_234, %c16_235] : memref<12x12x20xf32, #tpu.memory_space<vmem>>, vector<8x8x4xf32>
    tpu.vector_store %arg26[%c2_233, %c2_234, %c16_235], %207 {strides = array<i32>} : memref<12x12x20xf32, #tpu.memory_space<vmem>>, vector<8x8x4xf32>,
    %c1_236 = arith.constant 1 : index
    %c1_237 = arith.constant 1 : index
    %c16_238 = arith.constant 16 : index
    %209 = vector.load %arg26[%c1_236, %c1_237, %c16_238] : memref<12x12x20xf32, #tpu.memory_space<vmem>>, vector<8x8x4xf32>
    %c1_239 = arith.constant 1 : index
    %c2_240 = arith.constant 2 : index
    %c16_241 = arith.constant 16 : index
    %210 = vector.load %arg26[%c1_239, %c2_240, %c16_241] : memref<12x12x20xf32, #tpu.memory_space<vmem>>, vector<8x8x4xf32>
    %c1_242 = arith.constant 1 : index
    %c3_243 = arith.constant 3 : index
    %c16_244 = arith.constant 16 : index
    %211 = vector.load %arg26[%c1_242, %c3_243, %c16_244] : memref<12x12x20xf32, #tpu.memory_space<vmem>>, vector<8x8x4xf32>
    %c2_245 = arith.constant 2 : index
    %c1_246 = arith.constant 1 : index
    %c16_247 = arith.constant 16 : index
    %212 = vector.load %arg26[%c2_245, %c1_246, %c16_247] : memref<12x12x20xf32, #tpu.memory_space<vmem>>, vector<8x8x4xf32>
    %c2_248 = arith.constant 2 : index
    %c2_249 = arith.constant 2 : index
    %c16_250 = arith.constant 16 : index
    %213 = vector.load %arg26[%c2_248, %c2_249, %c16_250] : memref<12x12x20xf32, #tpu.memory_space<vmem>>, vector<8x8x4xf32>
    %c2_251 = arith.constant 2 : index
    %c3_252 = arith.constant 3 : index
    %c16_253 = arith.constant 16 : index
    %214 = vector.load %arg26[%c2_251, %c3_252, %c16_253] : memref<12x12x20xf32, #tpu.memory_space<vmem>>, vector<8x8x4xf32>
    %c3_254 = arith.constant 3 : index
    %c1_255 = arith.constant 1 : index
    %c16_256 = arith.constant 16 : index
    %215 = vector.load %arg26[%c3_254, %c1_255, %c16_256] : memref<12x12x20xf32, #tpu.memory_space<vmem>>, vector<8x8x4xf32>
    %c3_257 = arith.constant 3 : index
    %c2_258 = arith.constant 2 : index
    %c16_259 = arith.constant 16 : index
    %216 = vector.load %arg26[%c3_257, %c2_258, %c16_259] : memref<12x12x20xf32, #tpu.memory_space<vmem>>, vector<8x8x4xf32>
    %c3_260 = arith.constant 3 : index
    %c3_261 = arith.constant 3 : index
    %c16_262 = arith.constant 16 : index
    %217 = vector.load %arg26[%c3_260, %c3_261, %c16_262] : memref<12x12x20xf32, #tpu.memory_space<vmem>>, vector<8x8x4xf32>
    %218 = tpu.concatenate %209, %210, %211, %212, %213, %214, %215, %216, %217 in 2 : vector<8x8x4xf32>, vector<8x8x4xf32>, vector<8x8x4xf32>, vector<8x8x4xf32>, vector<8x8x4xf32>, vector<8x8x4xf32>, vector<8x8x4xf32>, vector<8x8x4xf32>, vector<8x8x4xf32> -> vector<8x8x36xf32>
    %219 = vector.shape_cast %218 : vector<8x8x36xf32> to vector<64x36xf32>
    %220 = arith.truncf %219 : vector<64x36xf32> to vector<64x36xbf16>
    %c0_263 = arith.constant 0 : index
    %c0_264 = arith.constant 0 : index
    %221 = vector.load %arg22[%c0_263, %c0_264] : memref<8x36xbf16, #tpu.memory_space<vmem>>, vector<8x36xbf16>
    %cst_265 = arith.constant dense<0.000000e+00> : vector<8x64xf32>
    %222 = tpu.matmul %221, %220, %cst_265 {dimension_numbers = #tpu.dot_dimension_numbers<[1], [1], [0], [0], [0, 0, 1, 0], [], []>} : vector<8x36xbf16>, vector<64x36xbf16>, vector<8x64xf32> -> vector<8x64xf32>
    %c0_266 = arith.constant 0 : index
    %c0_267 = arith.constant 0 : index
    %223 = vector.load %arg23[%c0_266, %c0_267] : memref<8x1xf32, #tpu.memory_space<vmem>>, vector<8x1xf32>
    %224 = vector.broadcast %223 : vector<8x1xf32> to vector<8x64xf32>
    %225 = arith.addf %222, %224 : vector<8x64xf32>
    %cst_268 = arith.constant 0.000000e+00 : f32
    %226 = vector.broadcast %cst_268 : f32 to vector<8x64xf32>
    %227 = arith.maximumf %225, %226 : vector<8x64xf32>
    %c0_269 = arith.constant 0 : index
    %c0_270 = arith.constant 0 : index
    %c0_271 = arith.constant 0 : index
    %228 = vector.load %arg24[%c0_269, %c0_270, %c0_271] : memref<1x8x64xf32, #tpu.memory_space<vmem>>, vector<1x8x64xf32>
    %229 = vector.shape_cast %228 : vector<1x8x64xf32> to vector<8x64xf32>
    %230 = vector.shape_cast %227 : vector<8x64xf32> to vector<1x8x64xf32>
    tpu.vector_store %arg24[%c0_269, %c0_270, %c0_271], %230 {strides = array<i32>} : memref<1x8x64xf32, #tpu.memory_space<vmem>>, vector<1x8x64xf32>,
    %c0_272 = arith.constant 0 : index
    %c0_273 = arith.constant 0 : index
    %c0_274 = arith.constant 0 : index
    %c0_275 = arith.constant 0 : index
    %231 = vector.load %arg25[%c0_272, %c0_273, %c0_274, %c0_275] : memref<1x8x8x4xf32, #tpu.memory_space<vmem>>, vector<1x8x8x4xf32>
    %232 = vector.shape_cast %231 : vector<1x8x8x4xf32> to vector<8x8x4xf32>
    %233 = vector.shape_cast %207 : vector<8x8x4xf32> to vector<1x8x8x4xf32>
    tpu.vector_store %arg25[%c0_272, %c0_273, %c0_274, %c0_275], %233 {strides = array<i32>} : memref<1x8x8x4xf32, #tpu.memory_space<vmem>>, vector<1x8x8x4xf32>,
    return
  }
  func.func @transform_0(%arg0: i32) -> (i32, i32, i32, i32, i32) {
    %c0_i32 = arith.constant 0 : i32
    %c0_i32_0 = arith.constant 0 : i32
    %c0_i32_1 = arith.constant 0 : i32
    %c0_i32_2 = arith.constant 0 : i32
    %c0_i32_3 = arith.constant 0 : i32
    return %arg0, %c0_i32, %c0_i32_0, %c0_i32_1, %c0_i32_2 : i32, i32, i32, i32, i32
  }
  func.func @transform_1(%arg0: i32) -> (i32, i32) {
    %c0_i32 = arith.constant 0 : i32
    %c0_i32_0 = arith.constant 0 : i32
    %c0_i32_1 = arith.constant 0 : i32
    return %c0_i32, %c0_i32_0 : i32, i32
  }
  func.func @transform_2(%arg0: i32) -> (i32, i32) {
    %c0_i32 = arith.constant 0 : i32
    %c0_i32_0 = arith.constant 0 : i32
    %c0_i32_1 = arith.constant 0 : i32
    return %c0_i32, %c0_i32_0 : i32, i32
  }
  func.func @transform_3(%arg0: i32) -> (i32, i32) {
    %c0_i32 = arith.constant 0 : i32
    %c0_i32_0 = arith.constant 0 : i32
    %c0_i32_1 = arith.constant 0 : i32
    return %c0_i32, %c0_i32_0 : i32, i32
  }
  func.func @transform_4(%arg0: i32) -> (i32, i32) {
    %c0_i32 = arith.constant 0 : i32
    %c0_i32_0 = arith.constant 0 : i32
    %c0_i32_1 = arith.constant 0 : i32
    return %c0_i32, %c0_i32_0 : i32, i32
  }
  func.func @transform_5(%arg0: i32) -> (i32, i32) {
    %c0_i32 = arith.constant 0 : i32
    %c0_i32_0 = arith.constant 0 : i32
    %c0_i32_1 = arith.constant 0 : i32
    return %c0_i32, %c0_i32_0 : i32, i32
  }
  func.func @transform_6(%arg0: i32) -> (i32, i32) {
    %c0_i32 = arith.constant 0 : i32
    %c0_i32_0 = arith.constant 0 : i32
    %c0_i32_1 = arith.constant 0 : i32
    return %c0_i32, %c0_i32_0 : i32, i32
  }
  func.func @transform_7(%arg0: i32) -> (i32, i32) {
    %c0_i32 = arith.constant 0 : i32
    %c0_i32_0 = arith.constant 0 : i32
    %c0_i32_1 = arith.constant 0 : i32
    return %c0_i32, %c0_i32_0 : i32, i32
  }
  func.func @transform_8(%arg0: i32) -> (i32, i32) {
    %c0_i32 = arith.constant 0 : i32
    %c0_i32_0 = arith.constant 0 : i32
    %c0_i32_1 = arith.constant 0 : i32
    return %c0_i32, %c0_i32_0 : i32, i32
  }
  func.func @transform_9(%arg0: i32) -> (i32, i32) {
    %c0_i32 = arith.constant 0 : i32
    %c0_i32_0 = arith.constant 0 : i32
    %c0_i32_1 = arith.constant 0 : i32
    return %c0_i32, %c0_i32_0 : i32, i32
  }
  func.func @transform_10(%arg0: i32) -> (i32, i32) {
    %c0_i32 = arith.constant 0 : i32
    %c0_i32_0 = arith.constant 0 : i32
    %c0_i32_1 = arith.constant 0 : i32
    return %c0_i32, %c0_i32_0 : i32, i32
  }
  func.func @transform_11(%arg0: i32) -> (i32, i32) {
    %c0_i32 = arith.constant 0 : i32
    %c0_i32_0 = arith.constant 0 : i32
    %c0_i32_1 = arith.constant 0 : i32
    return %c0_i32, %c0_i32_0 : i32, i32
  }
  func.func @transform_12(%arg0: i32) -> (i32, i32) {
    %c0_i32 = arith.constant 0 : i32
    %c0_i32_0 = arith.constant 0 : i32
    %c0_i32_1 = arith.constant 0 : i32
    return %c0_i32, %c0_i32_0 : i32, i32
  }
  func.func @transform_13(%arg0: i32) -> (i32, i32) {
    %c0_i32 = arith.constant 0 : i32
    %c0_i32_0 = arith.constant 0 : i32
    %c0_i32_1 = arith.constant 0 : i32
    return %c0_i32, %c0_i32_0 : i32, i32
  }
  func.func @transform_14(%arg0: i32) -> (i32, i32) {
    %c0_i32 = arith.constant 0 : i32
    %c0_i32_0 = arith.constant 0 : i32
    %c0_i32_1 = arith.constant 0 : i32
    return %c0_i32, %c0_i32_0 : i32, i32
  }
  func.func @transform_15(%arg0: i32) -> (i32, i32) {
    %c0_i32 = arith.constant 0 : i32
    %c0_i32_0 = arith.constant 0 : i32
    %c0_i32_1 = arith.constant 0 : i32
    return %c0_i32, %c0_i32_0 : i32, i32
  }
  func.func @transform_16(%arg0: i32) -> (i32, i32) {
    %c0_i32 = arith.constant 0 : i32
    %c0_i32_0 = arith.constant 0 : i32
    %c0_i32_1 = arith.constant 0 : i32
    return %c0_i32, %c0_i32_0 : i32, i32
  }
  func.func @transform_17(%arg0: i32) -> (i32, i32) {
    %c0_i32 = arith.constant 0 : i32
    %c0_i32_0 = arith.constant 0 : i32
    %c0_i32_1 = arith.constant 0 : i32
    return %c0_i32, %c0_i32_0 : i32, i32
  }
  func.func @transform_18(%arg0: i32) -> (i32, i32) {
    %c0_i32 = arith.constant 0 : i32
    %c0_i32_0 = arith.constant 0 : i32
    %c0_i32_1 = arith.constant 0 : i32
    return %c0_i32, %c0_i32_0 : i32, i32
  }
  func.func @transform_19(%arg0: i32) -> (i32, i32) {
    %c0_i32 = arith.constant 0 : i32
    %c0_i32_0 = arith.constant 0 : i32
    %c0_i32_1 = arith.constant 0 : i32
    return %c0_i32, %c0_i32_0 : i32, i32
  }
  func.func @transform_20(%arg0: i32) -> (i32, i32) {
    %c0_i32 = arith.constant 0 : i32
    %c0_i32_0 = arith.constant 0 : i32
    %c0_i32_1 = arith.constant 0 : i32
    return %c0_i32, %c0_i32_0 : i32, i32
  }
  func.func @transform_21(%arg0: i32) -> (i32, i32) {
    %c0_i32 = arith.constant 0 : i32
    %c0_i32_0 = arith.constant 0 : i32
    %c0_i32_1 = arith.constant 0 : i32
    return %c0_i32, %c0_i32_0 : i32, i32
  }
  func.func @transform_22(%arg0: i32) -> (i32, i32) {
    %c0_i32 = arith.constant 0 : i32
    %c0_i32_0 = arith.constant 0 : i32
    %c0_i32_1 = arith.constant 0 : i32
    return %c0_i32, %c0_i32_0 : i32, i32
  }
  func.func @transform_23(%arg0: i32) -> (i32, i32, i32) {
    %c0_i32 = arith.constant 0 : i32
    %c0_i32_0 = arith.constant 0 : i32
    %c0_i32_1 = arith.constant 0 : i32
    return %arg0, %c0_i32, %c0_i32_0 : i32, i32, i32
  }
  func.func @transform_24(%arg0: i32) -> (i32, i32, i32, i32) {
    %c0_i32 = arith.constant 0 : i32
    %c0_i32_0 = arith.constant 0 : i32
    %c0_i32_1 = arith.constant 0 : i32
    %c0_i32_2 = arith.constant 0 : i32
    return %arg0, %c0_i32, %c0_i32_0, %c0_i32_1 : i32, i32, i32, i32
  }
}

</mosaic_0001>

<llo_original>
// kernel: tpu_custom_call.1
$region0: #{tpu_custom_call.1}
  #allocation0 [shape = 'u32[]', space=smem, size = 0x4, offset = 0x4, fixed_abs, tag = 'smem constant byte address 0x4 - core index']
  #allocation1 [shape = 'u32[144,128]{1,0:T(1,128)}', space=vmem, size = 0x12000, scoped, tag = 'internal scratch']
  #allocation2 [shape = 'f32[12,12,20]{2,1,0:T(8,128)}', space=vmem, size = 0x18000, scoped, tag = 'scratch operand']
  #allocation3 [shape = 'f32[1,1]{1,0:T(1,128)S(1)}', space=vmem, size = 0x200, scoped, tag = 'scoped memory for tpu_custom_call.1']
  #allocation4 [shape = 'f32[1,1]{1,0:T(1,128)S(1)}', space=vmem, size = 0x200, scoped, tag = 'scoped memory for tpu_custom_call.1']
  #allocation5 [shape = 'f32[1,1]{1,0:T(1,128)S(1)}', space=vmem, size = 0x200, scoped, tag = 'scoped memory for tpu_custom_call.1']
  #allocation6 [shape = 'f32[1,1]{1,0:T(1,128)S(1)}', space=vmem, size = 0x200, scoped, tag = 'scoped memory for tpu_custom_call.1']
  %s0 = inlined_call_operand.hbm [shape: f32[2,8,2,8,8], index: 0, kind: input, shape index: {}]
  %s1 = inlined_call_operand.vmem [shape: bf16[4,1], index: 1, kind: input, shape index: {}]
  %s2 = inlined_call_operand.<no memory space> [shape: f32[1,1], index: 2, kind: input, shape index: {}]
  %s3 = inlined_call_operand.vmem [shape: bf16[1,4], index: 3, kind: input, shape index: {}]
  %s4 = inlined_call_operand.vmem [shape: f32[1,4], index: 4, kind: input, shape index: {}]
  %s5 = inlined_call_operand.vmem [shape: bf16[20,1], index: 5, kind: input, shape index: {}]
  %s6 = inlined_call_operand.<no memory space> [shape: f32[1,1], index: 6, kind: input, shape index: {}]
  %s7 = inlined_call_operand.vmem [shape: bf16[5,4], index: 7, kind: input, shape index: {}]
  %s8 = inlined_call_operand.vmem [shape: f32[1,4], index: 8, kind: input, shape index: {}]
  %s9 = inlined_call_operand.vmem [shape: bf16[20,1], index: 9, kind: input, shape index: {}]
  %s10 = inlined_call_operand.<no memory space> [shape: f32[1,1], index: 10, kind: input, shape index: {}]
  %s11 = inlined_call_operand.vmem [shape: bf16[5,4], index: 11, kind: input, shape index: {}]
  %s12 = inlined_call_operand.vmem [shape: f32[1,4], index: 12, kind: input, shape index: {}]
  %s13 = inlined_call_operand.vmem [shape: bf16[36,1], index: 13, kind: input, shape index: {}]
  %s14 = inlined_call_operand.<no memory space> [shape: f32[1,1], index: 14, kind: input, shape index: {}]
  %s15 = inlined_call_operand.vmem [shape: bf16[9,4], index: 15, kind: input, shape index: {}]
  %s16 = inlined_call_operand.vmem [shape: f32[1,4], index: 16, kind: input, shape index: {}]
  %s17 = inlined_call_operand.vmem [shape: bf16[144,4], index: 17, kind: input, shape index: {}]
  %s18 = inlined_call_operand.vmem [shape: f32[1,4], index: 18, kind: input, shape index: {}]
  %s19 = inlined_call_operand.vmem [shape: f32[1,4], index: 19, kind: input, shape index: {}]
  %s20 = inlined_call_operand.vmem [shape: f32[1,4], index: 20, kind: input, shape index: {}]
  %s21 = inlined_call_operand.vmem [shape: bf16[8,36], index: 21, kind: input, shape index: {}]
  %s22 = inlined_call_operand.vmem [shape: f32[8,1], index: 22, kind: input, shape index: {}]
  %s23 = inlined_call_operand.hbm [shape: f32[2,8,64], index: 23, kind: output, shape index: {0}]
  %s24 = inlined_call_operand.vmem [shape: f32[2,8,8,4], index: 24, kind: output, shape index: {1}]
  %25 = xla_tuple %s23, %s24
  %s26 = sld [smem:[#allocation0]]
  $region137: #{tpu_custom_call.1} parent=0
    _
  %s28 = ssub.s32 1, %s26
  %s29 = scalar_select 0, %s28, %s26
  %v30 = vstv %s2
  %31 = vst [vmem:[#allocation3] sm:$0x1] %v30
  %v32 = vstv %s6
  %33 = vst [vmem:[#allocation4] sm:$0x1] %v32
  %v34 = vstv %s10
  %35 = vst [vmem:[#allocation5] sm:$0x1] %v34
  %v36 = vstv %s14
  %37 = vst [vmem:[#allocation6] sm:$0x1] %v36
  $region1: #{tpu_custom_call.1} parent=0
    #allocation7 [shape = 'u8[131072]{0}', space=vmem, size = 0x20000, scoped, tag = 'input window, operand 0']
    #allocation8 [shape = 's32[2]{0}', space=sflag, size = 0x8, scoped, tag = 'scoped memory for tpu_custom_call.1']
    #allocation9 [shape = 's32[2]{0}', space=sflag, size = 0x8, scoped, tag = 'scoped memory for tpu_custom_call.1']
    #allocation10 [shape = 'u8[8192]{0}', space=vmem, size = 0x2000, scoped, tag = 'output window, operand 0']
    %38 = vsyncpa [#allocation8], 0
    %s39 = scalar_lea.sflag [#allocation8], 1
    %40 = vsyncpa %s39, 0
    %41 = vsyncpa [#allocation9], 0
    %s42 = scalar_lea.sflag [#allocation9], 1
    %43 = vsyncpa %s42, 0
    loop: start=0, step=1, limit=4
    $region2: #{tpu_custom_call.1} parent=1 // loop_pre_header
      _
    $region3: #{tpu_custom_call.1} parent=1 // loop_header
      %s45 = sphi 0, %s49
      %p46 = scmp.ge.s32.totalorder %s45, 4
      %s55 = sphi 0, %s57
      %s58 = sphi 0, %s55
      %s59 = sphi 0, %s58
      %s75 = sphi 0, %s59
      %s79 = sphi 0, %s79
      %s81 = sphi 0, %s79
      %s82 = sphi 0, %s81
      %s96 = sphi 0, %s82
      %s100 = sphi 0, %s100
      %s102 = sphi 0, %s100
      %s103 = sphi 0, %s102
      %s117 = sphi 0, %s103
      %s121 = sphi 0, %s121
      %s123 = sphi 0, %s121
      %s124 = sphi 0, %s123
      %s138 = sphi 0, %s124
      %s142 = sphi 0, %s142
      %s144 = sphi 0, %s142
      %s145 = sphi 0, %s144
      %s159 = sphi 0, %s145
      %s163 = sphi 0, %s163
      %s165 = sphi 0, %s163
      %s166 = sphi 0, %s165
      %s180 = sphi 0, %s166
      %s184 = sphi 0, %s184
      %s186 = sphi 0, %s184
      %s187 = sphi 0, %s186
      %s201 = sphi 0, %s187
      %s205 = sphi 0, %s205
      %s207 = sphi 0, %s205
      %s208 = sphi 0, %s207
      %s222 = sphi 0, %s208
      %s226 = sphi 0, %s226
      %s228 = sphi 0, %s226
      %s229 = sphi 0, %s228
      %s243 = sphi 0, %s229
      %s247 = sphi 0, %s247
      %s249 = sphi 0, %s247
      %s250 = sphi 0, %s249
      %s264 = sphi 0, %s250
      %s268 = sphi 0, %s268
      %s270 = sphi 0, %s268
      %s271 = sphi 0, %s270
      %s285 = sphi 0, %s271
      %s289 = sphi 0, %s289
      %s291 = sphi 0, %s289
      %s292 = sphi 0, %s291
      %s306 = sphi 0, %s292
      %s310 = sphi 0, %s310
      %s312 = sphi 0, %s310
      %s313 = sphi 0, %s312
      %s327 = sphi 0, %s313
      %s331 = sphi 0, %s331
      %s333 = sphi 0, %s331
      %s334 = sphi 0, %s333
      %s348 = sphi 0, %s334
      %s352 = sphi 0, %s352
      %s354 = sphi 0, %s352
      %s355 = sphi 0, %s354
      %s369 = sphi 0, %s355
      %s373 = sphi 0, %s373
      %s375 = sphi 0, %s373
      %s376 = sphi 0, %s375
      %s390 = sphi 0, %s376
      %s394 = sphi 0, %s394
      %s396 = sphi 0, %s394
      %s397 = sphi 0, %s396
      %s411 = sphi 0, %s397
      %s415 = sphi 0, %s415
      %s417 = sphi 0, %s415
      %s418 = sphi 0, %s417
      %s432 = sphi 0, %s418
      %s436 = sphi 0, %s436
      %s438 = sphi 0, %s436
      %s439 = sphi 0, %s438
      %s453 = sphi 0, %s439
      %s457 = sphi 0, %s457
      %s459 = sphi 0, %s457
      %s460 = sphi 0, %s459
      %s474 = sphi 0, %s460
      %s478 = sphi 0, %s478
      %s480 = sphi 0, %s478
      %s481 = sphi 0, %s480
      %s495 = sphi 0, %s481
      %s499 = sphi 0, %s499
      %s501 = sphi 0, %s499
      %s502 = sphi 0, %s501
      %s516 = sphi 0, %s502
      %s520 = sphi 0, %s520
      %s522 = sphi 0, %s520
      %s523 = sphi 0, %s522
      %s537 = sphi 0, %s523
      %s543 = sphi 0, %s545
      %s546 = sphi 0, %s543
      %s547 = sphi 0, %s546
      %s563 = sphi 0, %s547
      %s569 = sphi 0, %s571
      %s572 = sphi 0, %s569
      %s573 = sphi 0, %s572
      %s589 = sphi 0, %s573
    $region4: #{tpu_custom_call.1} parent=1 // loop_header_branch
      %48 = sbr.rel (%p46) target = $region8
    $region5: #{tpu_custom_call.1} parent=1 // loop_body
      %s50 = ssub.s32 %s45, 1
      %s51 = ssub.s32 %s45, 2
      %s52 = sadd.s32 %s45, 1
      %s53 = ssub.s32 %s45, %s52
      %p54 = scmp.eq.s32.totalorder %s53, 0
      %s56 = sadd.s32 %s55, 1
      %s57 = scalar_select %p54, %s55, %s56
      %p60 = pneg %p54
      %p61 = scmp.eq.s32.totalorder %s45, 1
      %p62 = por %p60, %p61
      %p63 = scmp.ne.s32.totalorder %s55, %s58
      %p64 = scmp.eq.s32.totalorder %s45, 0
      %p65 = por %p63, %p64
      %p66 = scmp.ne.s32.totalorder %s55, %s58
      %p67 = scmp.eq.s32.totalorder %s50, 1
      %p68 = por %p66, %p67
      %p69 = scmp.ne.s32.totalorder %s58, %s59
      %p70 = scmp.eq.s32.totalorder %s50, 0
      %p71 = por %p69, %p70
      %p72 = scmp.ne.s32.totalorder %s58, %s59
      %p73 = scmp.eq.s32.totalorder %s51, 1
      %p74 = por %p72, %p73
      %p76 = scmp.ne.s32.totalorder %s59, %s75
      %p77 = scmp.eq.s32.totalorder %s51, 0
      %p78 = por %p76, %p77
      %s80 = sadd.s32 %s79, 1
      %p83 = scmp.eq.s32.totalorder %s45, 1
      %p84 = scmp.ne.s32.totalorder %s79, %s81
      %p85 = scmp.eq.s32.totalorder %s45, 0
      %p86 = por %p84, %p85
      %p87 = scmp.ne.s32.totalorder %s79, %s81
      %p88 = scmp.eq.s32.totalorder %s50, 1
      %p89 = por %p87, %p88
      %p90 = scmp.ne.s32.totalorder %s81, %s82
      %p91 = scmp.eq.s32.totalorder %s50, 0
      %p92 = por %p90, %p91
      %p93 = scmp.ne.s32.totalorder %s81, %s82
      %p94 = scmp.eq.s32.totalorder %s51, 1
      %p95 = por %p93, %p94
      %p97 = scmp.ne.s32.totalorder %s82, %s96
      %p98 = scmp.eq.s32.totalorder %s51, 0
      %p99 = por %p97, %p98
      %s101 = sadd.s32 %s100, 1
      %p104 = scmp.eq.s32.totalorder %s45, 1
      %p105 = scmp.ne.s32.totalorder %s100, %s102
      %p106 = scmp.eq.s32.totalorder %s45, 0
      %p107 = por %p105, %p106
      %p108 = scmp.ne.s32.totalorder %s100, %s102
      %p109 = scmp.eq.s32.totalorder %s50, 1
      %p110 = por %p108, %p109
      %p111 = scmp.ne.s32.totalorder %s102, %s103
      %p112 = scmp.eq.s32.totalorder %s50, 0
      %p113 = por %p111, %p112
      %p114 = scmp.ne.s32.totalorder %s102, %s103
      %p115 = scmp.eq.s32.totalorder %s51, 1
      %p116 = por %p114, %p115
      %p118 = scmp.ne.s32.totalorder %s103, %s117
      %p119 = scmp.eq.s32.totalorder %s51, 0
      %p120 = por %p118, %p119
      %s122 = sadd.s32 %s121, 1
      %p125 = scmp.eq.s32.totalorder %s45, 1
      %p126 = scmp.ne.s32.totalorder %s121, %s123
      %p127 = scmp.eq.s32.totalorder %s45, 0
      %p128 = por %p126, %p127
      %p129 = scmp.ne.s32.totalorder %s121, %s123
      %p130 = scmp.eq.s32.totalorder %s50, 1
      %p131 = por %p129, %p130
      %p132 = scmp.ne.s32.totalorder %s123, %s124
      %p133 = scmp.eq.s32.totalorder %s50, 0
      %p134 = por %p132, %p133
      %p135 = scmp.ne.s32.totalorder %s123, %s124
      %p136 = scmp.eq.s32.totalorder %s51, 1
      %p137 = por %p135, %p136
      %p139 = scmp.ne.s32.totalorder %s124, %s138
      %p140 = scmp.eq.s32.totalorder %s51, 0
      %p141 = por %p139, %p140
      %s143 = sadd.s32 %s142, 1
      %p146 = scmp.eq.s32.totalorder %s45, 1
      %p147 = scmp.ne.s32.totalorder %s142, %s144
      %p148 = scmp.eq.s32.totalorder %s45, 0
      %p149 = por %p147, %p148
      %p150 = scmp.ne.s32.totalorder %s142, %s144
      %p151 = scmp.eq.s32.totalorder %s50, 1
      %p152 = por %p150, %p151
      %p153 = scmp.ne.s32.totalorder %s144, %s145
      %p154 = scmp.eq.s32.totalorder %s50, 0
      %p155 = por %p153, %p154
      %p156 = scmp.ne.s32.totalorder %s144, %s145
      %p157 = scmp.eq.s32.totalorder %s51, 1
      %p158 = por %p156, %p157
      %p160 = scmp.ne.s32.totalorder %s145, %s159
      %p161 = scmp.eq.s32.totalorder %s51, 0
      %p162 = por %p160, %p161
      %s164 = sadd.s32 %s163, 1
      %p167 = scmp.eq.s32.totalorder %s45, 1
      %p168 = scmp.ne.s32.totalorder %s163, %s165
      %p169 = scmp.eq.s32.totalorder %s45, 0
      %p170 = por %p168, %p169
      %p171 = scmp.ne.s32.totalorder %s163, %s165
      %p172 = scmp.eq.s32.totalorder %s50, 1
      %p173 = por %p171, %p172
      %p174 = scmp.ne.s32.totalorder %s165, %s166
      %p175 = scmp.eq.s32.totalorder %s50, 0
      %p176 = por %p174, %p175
      %p177 = scmp.ne.s32.totalorder %s165, %s166
      %p178 = scmp.eq.s32.totalorder %s51, 1
      %p179 = por %p177, %p178
      %p181 = scmp.ne.s32.totalorder %s166, %s180
      %p182 = scmp.eq.s32.totalorder %s51, 0
      %p183 = por %p181, %p182
      %s185 = sadd.s32 %s184, 1
      %p188 = scmp.eq.s32.totalorder %s45, 1
      %p189 = scmp.ne.s32.totalorder %s184, %s186
      %p190 = scmp.eq.s32.totalorder %s45, 0
      %p191 = por %p189, %p190
      %p192 = scmp.ne.s32.totalorder %s184, %s186
      %p193 = scmp.eq.s32.totalorder %s50, 1
      %p194 = por %p192, %p193
      %p195 = scmp.ne.s32.totalorder %s186, %s187
      %p196 = scmp.eq.s32.totalorder %s50, 0
      %p197 = por %p195, %p196
      %p198 = scmp.ne.s32.totalorder %s186, %s187
      %p199 = scmp.eq.s32.totalorder %s51, 1
      %p200 = por %p198, %p199
      %p202 = scmp.ne.s32.totalorder %s187, %s201
      %p203 = scmp.eq.s32.totalorder %s51, 0
      %p204 = por %p202, %p203
      %s206 = sadd.s32 %s205, 1
      %p209 = scmp.eq.s32.totalorder %s45, 1
      %p210 = scmp.ne.s32.totalorder %s205, %s207
      %p211 = scmp.eq.s32.totalorder %s45, 0
      %p212 = por %p210, %p211
      %p213 = scmp.ne.s32.totalorder %s205, %s207
      %p214 = scmp.eq.s32.totalorder %s50, 1
      %p215 = por %p213, %p214
      %p216 = scmp.ne.s32.totalorder %s207, %s208
      %p217 = scmp.eq.s32.totalorder %s50, 0
      %p218 = por %p216, %p217
      %p219 = scmp.ne.s32.totalorder %s207, %s208
      %p220 = scmp.eq.s32.totalorder %s51, 1
      %p221 = por %p219, %p220
      %p223 = scmp.ne.s32.totalorder %s208, %s222
      %p224 = scmp.eq.s32.totalorder %s51, 0
      %p225 = por %p223, %p224
      %s227 = sadd.s32 %s226, 1
      %p230 = scmp.eq.s32.totalorder %s45, 1
      %p231 = scmp.ne.s32.totalorder %s226, %s228
      %p232 = scmp.eq.s32.totalorder %s45, 0
      %p233 = por %p231, %p232
      %p234 = scmp.ne.s32.totalorder %s226, %s228
      %p235 = scmp.eq.s32.totalorder %s50, 1
      %p236 = por %p234, %p235
      %p237 = scmp.ne.s32.totalorder %s228, %s229
      %p238 = scmp.eq.s32.totalorder %s50, 0
      %p239 = por %p237, %p238
      %p240 = scmp.ne.s32.totalorder %s228, %s229
      %p241 = scmp.eq.s32.totalorder %s51, 1
      %p242 = por %p240, %p241
      %p244 = scmp.ne.s32.totalorder %s229, %s243
      %p245 = scmp.eq.s32.totalorder %s51, 0
      %p246 = por %p244, %p245
      %s248 = sadd.s32 %s247, 1
      %p251 = scmp.eq.s32.totalorder %s45, 1
      %p252 = scmp.ne.s32.totalorder %s247, %s249
      %p253 = scmp.eq.s32.totalorder %s45, 0
      %p254 = por %p252, %p253
      %p255 = scmp.ne.s32.totalorder %s247, %s249
      %p256 = scmp.eq.s32.totalorder %s50, 1
      %p257 = por %p255, %p256
      %p258 = scmp.ne.s32.totalorder %s249, %s250
      %p259 = scmp.eq.s32.totalorder %s50, 0
      %p260 = por %p258, %p259
      %p261 = scmp.ne.s32.totalorder %s249, %s250
      %p262 = scmp.eq.s32.totalorder %s51, 1
      %p263 = por %p261, %p262
      %p265 = scmp.ne.s32.totalorder %s250, %s264
      %p266 = scmp.eq.s32.totalorder %s51, 0
      %p267 = por %p265, %p266
      %s269 = sadd.s32 %s268, 1
      %p272 = scmp.eq.s32.totalorder %s45, 1
      %p273 = scmp.ne.s32.totalorder %s268, %s270
      %p274 = scmp.eq.s32.totalorder %s45, 0
      %p275 = por %p273, %p274
      %p276 = scmp.ne.s32.totalorder %s268, %s270
      %p277 = scmp.eq.s32.totalorder %s50, 1
      %p278 = por %p276, %p277
      %p279 = scmp.ne.s32.totalorder %s270, %s271
      %p280 = scmp.eq.s32.totalorder %s50, 0
      %p281 = por %p279, %p280
      %p282 = scmp.ne.s32.totalorder %s270, %s271
      %p283 = scmp.eq.s32.totalorder %s51, 1
      %p284 = por %p282, %p283
      %p286 = scmp.ne.s32.totalorder %s271, %s285
      %p287 = scmp.eq.s32.totalorder %s51, 0
      %p288 = por %p286, %p287
      %s290 = sadd.s32 %s289, 1
      %p293 = scmp.eq.s32.totalorder %s45, 1
      %p294 = scmp.ne.s32.totalorder %s289, %s291
      %p295 = scmp.eq.s32.totalorder %s45, 0
      %p296 = por %p294, %p295
      %p297 = scmp.ne.s32.totalorder %s289, %s291
      %p298 = scmp.eq.s32.totalorder %s50, 1
      %p299 = por %p297, %p298
      %p300 = scmp.ne.s32.totalorder %s291, %s292
      %p301 = scmp.eq.s32.totalorder %s50, 0
      %p302 = por %p300, %p301
      %p303 = scmp.ne.s32.totalorder %s291, %s292
      %p304 = scmp.eq.s32.totalorder %s51, 1
      %p305 = por %p303, %p304
      %p307 = scmp.ne.s32.totalorder %s292, %s306
      %p308 = scmp.eq.s32.totalorder %s51, 0
      %p309 = por %p307, %p308
      %s311 = sadd.s32 %s310, 1
      %p314 = scmp.eq.s32.totalorder %s45, 1
      %p315 = scmp.ne.s32.totalorder %s310, %s312
      %p316 = scmp.eq.s32.totalorder %s45, 0
      %p317 = por %p315, %p316
      %p318 = scmp.ne.s32.totalorder %s310, %s312
      %p319 = scmp.eq.s32.totalorder %s50, 1
      %p320 = por %p318, %p319
      %p321 = scmp.ne.s32.totalorder %s312, %s313
      %p322 = scmp.eq.s32.totalorder %s50, 0
      %p323 = por %p321, %p322
      %p324 = scmp.ne.s32.totalorder %s312, %s313
      %p325 = scmp.eq.s32.totalorder %s51, 1
      %p326 = por %p324, %p325
      %p328 = scmp.ne.s32.totalorder %s313, %s327
      %p329 = scmp.eq.s32.totalorder %s51, 0
      %p330 = por %p328, %p329
      %s332 = sadd.s32 %s331, 1
      %p335 = scmp.eq.s32.totalorder %s45, 1
      %p336 = scmp.ne.s32.totalorder %s331, %s333
      %p337 = scmp.eq.s32.totalorder %s45, 0
      %p338 = por %p336, %p337
      %p339 = scmp.ne.s32.totalorder %s331, %s333
      %p340 = scmp.eq.s32.totalorder %s50, 1
      %p341 = por %p339, %p340
      %p342 = scmp.ne.s32.totalorder %s333, %s334
      %p343 = scmp.eq.s32.totalorder %s50, 0
      %p344 = por %p342, %p343
      %p345 = scmp.ne.s32.totalorder %s333, %s334
      %p346 = scmp.eq.s32.totalorder %s51, 1
      %p347 = por %p345, %p346
      %p349 = scmp.ne.s32.totalorder %s334, %s348
      %p350 = scmp.eq.s32.totalorder %s51, 0
      %p351 = por %p349, %p350
      %s353 = sadd.s32 %s352, 1
      %p356 = scmp.eq.s32.totalorder %s45, 1
      %p357 = scmp.ne.s32.totalorder %s352, %s354
      %p358 = scmp.eq.s32.totalorder %s45, 0
      %p359 = por %p357, %p358
      %p360 = scmp.ne.s32.totalorder %s352, %s354
      %p361 = scmp.eq.s32.totalorder %s50, 1
      %p362 = por %p360, %p361
      %p363 = scmp.ne.s32.totalorder %s354, %s355
      %p364 = scmp.eq.s32.totalorder %s50, 0
      %p365 = por %p363, %p364
      %p366 = scmp.ne.s32.totalorder %s354, %s355
      %p367 = scmp.eq.s32.totalorder %s51, 1
      %p368 = por %p366, %p367
      %p370 = scmp.ne.s32.totalorder %s355, %s369
      %p371 = scmp.eq.s32.totalorder %s51, 0
      %p372 = por %p370, %p371
      %s374 = sadd.s32 %s373, 1
      %p377 = scmp.eq.s32.totalorder %s45, 1
      %p378 = scmp.ne.s32.totalorder %s373, %s375
      %p379 = scmp.eq.s32.totalorder %s45, 0
      %p380 = por %p378, %p379
      %p381 = scmp.ne.s32.totalorder %s373, %s375
      %p382 = scmp.eq.s32.totalorder %s50, 1
      %p383 = por %p381, %p382
      %p384 = scmp.ne.s32.totalorder %s375, %s376
      %p385 = scmp.eq.s32.totalorder %s50, 0
      %p386 = por %p384, %p385
      %p387 = scmp.ne.s32.totalorder %s375, %s376
      %p388 = scmp.eq.s32.totalorder %s51, 1
      %p389 = por %p387, %p388
      %p391 = scmp.ne.s32.totalorder %s376, %s390
      %p392 = scmp.eq.s32.totalorder %s51, 0
      %p393 = por %p391, %p392
      %s395 = sadd.s32 %s394, 1
      %p398 = scmp.eq.s32.totalorder %s45, 1
      %p399 = scmp.ne.s32.totalorder %s394, %s396
      %p400 = scmp.eq.s32.totalorder %s45, 0
      %p401 = por %p399, %p400
      %p402 = scmp.ne.s32.totalorder %s394, %s396
      %p403 = scmp.eq.s32.totalorder %s50, 1
      %p404 = por %p402, %p403
      %p405 = scmp.ne.s32.totalorder %s396, %s397
      %p406 = scmp.eq.s32.totalorder %s50, 0
      %p407 = por %p405, %p406
      %p408 = scmp.ne.s32.totalorder %s396, %s397
      %p409 = scmp.eq.s32.totalorder %s51, 1
      %p410 = por %p408, %p409
      %p412 = scmp.ne.s32.totalorder %s397, %s411
      %p413 = scmp.eq.s32.totalorder %s51, 0
      %p414 = por %p412, %p413
      %s416 = sadd.s32 %s415, 1
      %p419 = scmp.eq.s32.totalorder %s45, 1
      %p420 = scmp.ne.s32.totalorder %s415, %s417
      %p421 = scmp.eq.s32.totalorder %s45, 0
      %p422 = por %p420, %p421
      %p423 = scmp.ne.s32.totalorder %s415, %s417
      %p424 = scmp.eq.s32.totalorder %s50, 1
      %p425 = por %p423, %p424
      %p426 = scmp.ne.s32.totalorder %s417, %s418
      %p427 = scmp.eq.s32.totalorder %s50, 0
      %p428 = por %p426, %p427
      %p429 = scmp.ne.s32.totalorder %s417, %s418
      %p430 = scmp.eq.s32.totalorder %s51, 1
      %p431 = por %p429, %p430
      %p433 = scmp.ne.s32.totalorder %s418, %s432
      %p434 = scmp.eq.s32.totalorder %s51, 0
      %p435 = por %p433, %p434
      %s437 = sadd.s32 %s436, 1
      %p440 = scmp.eq.s32.totalorder %s45, 1
      %p441 = scmp.ne.s32.totalorder %s436, %s438
      %p442 = scmp.eq.s32.totalorder %s45, 0
      %p443 = por %p441, %p442
      %p444 = scmp.ne.s32.totalorder %s436, %s438
      %p445 = scmp.eq.s32.totalorder %s50, 1
      %p446 = por %p444, %p445
      %p447 = scmp.ne.s32.totalorder %s438, %s439
      %p448 = scmp.eq.s32.totalorder %s50, 0
      %p449 = por %p447, %p448
      %p450 = scmp.ne.s32.totalorder %s438, %s439
      %p451 = scmp.eq.s32.totalorder %s51, 1
      %p452 = por %p450, %p451
      %p454 = scmp.ne.s32.totalorder %s439, %s453
      %p455 = scmp.eq.s32.totalorder %s51, 0
      %p456 = por %p454, %p455
      %s458 = sadd.s32 %s457, 1
      %p461 = scmp.eq.s32.totalorder %s45, 1
      %p462 = scmp.ne.s32.totalorder %s457, %s459
      %p463 = scmp.eq.s32.totalorder %s45, 0
      %p464 = por %p462, %p463
      %p465 = scmp.ne.s32.totalorder %s457, %s459
      %p466 = scmp.eq.s32.totalorder %s50, 1
      %p467 = por %p465, %p466
      %p468 = scmp.ne.s32.totalorder %s459, %s460
      %p469 = scmp.eq.s32.totalorder %s50, 0
      %p470 = por %p468, %p469
      %p471 = scmp.ne.s32.totalorder %s459, %s460
      %p472 = scmp.eq.s32.totalorder %s51, 1
      %p473 = por %p471, %p472
      %p475 = scmp.ne.s32.totalorder %s460, %s474
      %p476 = scmp.eq.s32.totalorder %s51, 0
      %p477 = por %p475, %p476
      %s479 = sadd.s32 %s478, 1
      %p482 = scmp.eq.s32.totalorder %s45, 1
      %p483 = scmp.ne.s32.totalorder %s478, %s480
      %p484 = scmp.eq.s32.totalorder %s45, 0
      %p485 = por %p483, %p484
      %p486 = scmp.ne.s32.totalorder %s478, %s480
      %p487 = scmp.eq.s32.totalorder %s50, 1
      %p488 = por %p486, %p487
      %p489 = scmp.ne.s32.totalorder %s480, %s481
      %p490 = scmp.eq.s32.totalorder %s50, 0
      %p491 = por %p489, %p490
      %p492 = scmp.ne.s32.totalorder %s480, %s481
      %p493 = scmp.eq.s32.totalorder %s51, 1
      %p494 = por %p492, %p493
      %p496 = scmp.ne.s32.totalorder %s481, %s495
      %p497 = scmp.eq.s32.totalorder %s51, 0
      %p498 = por %p496, %p497
      %s500 = sadd.s32 %s499, 1
      %p503 = scmp.eq.s32.totalorder %s45, 1
      %p504 = scmp.ne.s32.totalorder %s499, %s501
      %p505 = scmp.eq.s32.totalorder %s45, 0
      %p506 = por %p504, %p505
      %p507 = scmp.ne.s32.totalorder %s499, %s501
      %p508 = scmp.eq.s32.totalorder %s50, 1
      %p509 = por %p507, %p508
      %p510 = scmp.ne.s32.totalorder %s501, %s502
      %p511 = scmp.eq.s32.totalorder %s50, 0
      %p512 = por %p510, %p511
      %p513 = scmp.ne.s32.totalorder %s501, %s502
      %p514 = scmp.eq.s32.totalorder %s51, 1
      %p515 = por %p513, %p514
      %p517 = scmp.ne.s32.totalorder %s502, %s516
      %p518 = scmp.eq.s32.totalorder %s51, 0
      %p519 = por %p517, %p518
      %s521 = sadd.s32 %s520, 1
      %p524 = scmp.eq.s32.totalorder %s45, 1
      %p525 = scmp.ne.s32.totalorder %s520, %s522
      %p526 = scmp.eq.s32.totalorder %s45, 0
      %p527 = por %p525, %p526
      %p528 = scmp.ne.s32.totalorder %s520, %s522
      %p529 = scmp.eq.s32.totalorder %s50, 1
      %p530 = por %p528, %p529
      %p531 = scmp.ne.s32.totalorder %s522, %s523
      %p532 = scmp.eq.s32.totalorder %s50, 0
      %p533 = por %p531, %p532
      %p534 = scmp.ne.s32.totalorder %s522, %s523
      %p535 = scmp.eq.s32.totalorder %s51, 1
      %p536 = por %p534, %p535
      %p538 = scmp.ne.s32.totalorder %s523, %s537
      %p539 = scmp.eq.s32.totalorder %s51, 0
      %p540 = por %p538, %p539
      %s541 = ssub.s32 %s45, %s52
      %p542 = scmp.eq.s32.totalorder %s541, 0
      %s544 = sadd.s32 %s543, 1
      %s545 = scalar_select %p542, %s543, %s544
      %p548 = pneg %p542
      %p549 = scmp.eq.s32.totalorder %s45, 1
      %p550 = por %p548, %p549
      %p551 = scmp.ne.s32.totalorder %s543, %s546
      %p552 = scmp.eq.s32.totalorder %s45, 0
      %p553 = por %p551, %p552
      %p554 = scmp.ne.s32.totalorder %s543, %s546
      %p555 = scmp.eq.s32.totalorder %s50, 1
      %p556 = por %p554, %p555
      %p557 = scmp.ne.s32.totalorder %s546, %s547
      %p558 = scmp.eq.s32.totalorder %s50, 0
      %p559 = por %p557, %p558
      %p560 = scmp.ne.s32.totalorder %s546, %s547
      %p561 = scmp.eq.s32.totalorder %s51, 1
      %p562 = por %p560, %p561
      %p564 = scmp.ne.s32.totalorder %s547, %s563
      %p565 = scmp.eq.s32.totalorder %s51, 0
      %p566 = por %p564, %p565
      %s567 = ssub.s32 %s45, %s52
      %p568 = scmp.eq.s32.totalorder %s567, 0
      %s570 = sadd.s32 %s569, 1
      %s571 = scalar_select %p568, %s569, %s570
      %p574 = pneg %p568
      %p575 = scmp.eq.s32.totalorder %s45, 1
      %p576 = por %p574, %p575
      %p577 = scmp.ne.s32.totalorder %s569, %s572
      %p578 = scmp.eq.s32.totalorder %s45, 0
      %p579 = por %p577, %p578
      %p580 = scmp.ne.s32.totalorder %s569, %s572
      %p581 = scmp.eq.s32.totalorder %s50, 1
      %p582 = por %p580, %p581
      %p583 = scmp.ne.s32.totalorder %s572, %s573
      %p584 = scmp.eq.s32.totalorder %s50, 0
      %p585 = por %p583, %p584
      %p586 = scmp.ne.s32.totalorder %s572, %s573
      %p587 = scmp.eq.s32.totalorder %s51, 1
      %p588 = por %p586, %p587
      %p590 = scmp.ne.s32.totalorder %s573, %s589
      %p591 = scmp.eq.s32.totalorder %s51, 0
      %p592 = por %p590, %p591
      %p593 = scmp.le.s32.totalorder 1, %s45
      %p594 = scmp.lt.s32.totalorder %s45, 3
      %p595 = pnand %p593, %p594
      %p596 = pneg %p595
      // Predicated region
      $region9: #{tpu_custom_call.1} parent=5 // pred_check
        _
      $region10: #{tpu_custom_call.1} parent=5 // pred_check_branch
        %598 = sbr.rel (%p595) target = $region12
      $region11: #{tpu_custom_call.1} parent=5 // pred_region
        %s599 = ssub.s32 %s45, 1
        // Predicated region
        $region13: #{tpu_custom_call.1} parent=11 // pred_check
          %p600 = pneg %p92
        $region14: #{tpu_custom_call.1} parent=11 // pred_check_branch
          %602 = sbr.rel (%p600) target = $region16
        $region15: #{tpu_custom_call.1} parent=11 // pred_region
          _
        $region16: #{tpu_custom_call.1} parent=11 // pred_fallthru
          _
        // Predicated region
        $region17: #{tpu_custom_call.1} parent=11 // pred_check
          %p603 = pneg %p113
        $region18: #{tpu_custom_call.1} parent=11 // pred_check_branch
          %605 = sbr.rel (%p603) target = $region20
        $region19: #{tpu_custom_call.1} parent=11 // pred_region
          _
        $region20: #{tpu_custom_call.1} parent=11 // pred_fallthru
          _
        // Predicated region
        $region21: #{tpu_custom_call.1} parent=11 // pred_check
          %p606 = pneg %p134
        $region22: #{tpu_custom_call.1} parent=11 // pred_check_branch
          %608 = sbr.rel (%p606) target = $region24
        $region23: #{tpu_custom_call.1} parent=11 // pred_region
          _
        $region24: #{tpu_custom_call.1} parent=11 // pred_fallthru
          _
        // Predicated region
        $region25: #{tpu_custom_call.1} parent=11 // pred_check
          %p609 = pneg %p155
        $region26: #{tpu_custom_call.1} parent=11 // pred_check_branch
          %611 = sbr.rel (%p609) target = $region28
        $region27: #{tpu_custom_call.1} parent=11 // pred_region
          _
        $region28: #{tpu_custom_call.1} parent=11 // pred_fallthru
          _
        // Predicated region
        $region29: #{tpu_custom_call.1} parent=11 // pred_check
          %p612 = pneg %p176
        $region30: #{tpu_custom_call.1} parent=11 // pred_check_branch
          %614 = sbr.rel (%p612) target = $region32
        $region31: #{tpu_custom_call.1} parent=11 // pred_region
          _
        $region32: #{tpu_custom_call.1} parent=11 // pred_fallthru
          _
        // Predicated region
        $region33: #{tpu_custom_call.1} parent=11 // pred_check
          %p615 = pneg %p197
        $region34: #{tpu_custom_call.1} parent=11 // pred_check_branch
          %617 = sbr.rel (%p615) target = $region36
        $region35: #{tpu_custom_call.1} parent=11 // pred_region
          _
        $region36: #{tpu_custom_call.1} parent=11 // pred_fallthru
          _
        // Predicated region
        $region37: #{tpu_custom_call.1} parent=11 // pred_check
          %p618 = pneg %p218
        $region38: #{tpu_custom_call.1} parent=11 // pred_check_branch
          %620 = sbr.rel (%p618) target = $region40
        $region39: #{tpu_custom_call.1} parent=11 // pred_region
          _
        $region40: #{tpu_custom_call.1} parent=11 // pred_fallthru
          _
        // Predicated region
        $region41: #{tpu_custom_call.1} parent=11 // pred_check
          %p621 = pneg %p239
        $region42: #{tpu_custom_call.1} parent=11 // pred_check_branch
          %623 = sbr.rel (%p621) target = $region44
        $region43: #{tpu_custom_call.1} parent=11 // pred_region
          _
        $region44: #{tpu_custom_call.1} parent=11 // pred_fallthru
          _
        // Predicated region
        $region45: #{tpu_custom_call.1} parent=11 // pred_check
          %p624 = pneg %p260
        $region46: #{tpu_custom_call.1} parent=11 // pred_check_branch
          %626 = sbr.rel (%p624) target = $region48
        $region47: #{tpu_custom_call.1} parent=11 // pred_region
          _
        $region48: #{tpu_custom_call.1} parent=11 // pred_fallthru
          _
        // Predicated region
        $region49: #{tpu_custom_call.1} parent=11 // pred_check
          %p627 = pneg %p281
        $region50: #{tpu_custom_call.1} parent=11 // pred_check_branch
          %629 = sbr.rel (%p627) target = $region52
        $region51: #{tpu_custom_call.1} parent=11 // pred_region
          _
        $region52: #{tpu_custom_call.1} parent=11 // pred_fallthru
          _
        // Predicated region
        $region53: #{tpu_custom_call.1} parent=11 // pred_check
          %p630 = pneg %p302
        $region54: #{tpu_custom_call.1} parent=11 // pred_check_branch
          %632 = sbr.rel (%p630) target = $region56
        $region55: #{tpu_custom_call.1} parent=11 // pred_region
          _
        $region56: #{tpu_custom_call.1} parent=11 // pred_fallthru
          _
        // Predicated region
        $region57: #{tpu_custom_call.1} parent=11 // pred_check
          %p633 = pneg %p323
        $region58: #{tpu_custom_call.1} parent=11 // pred_check_branch
          %635 = sbr.rel (%p633) target = $region60
        $region59: #{tpu_custom_call.1} parent=11 // pred_region
          _
        $region60: #{tpu_custom_call.1} parent=11 // pred_fallthru
          _
        // Predicated region
        $region61: #{tpu_custom_call.1} parent=11 // pred_check
          %p636 = pneg %p344
        $region62: #{tpu_custom_call.1} parent=11 // pred_check_branch
          %638 = sbr.rel (%p636) target = $region64
        $region63: #{tpu_custom_call.1} parent=11 // pred_region
          _
        $region64: #{tpu_custom_call.1} parent=11 // pred_fallthru
          _
        // Predicated region
        $region65: #{tpu_custom_call.1} parent=11 // pred_check
          %p639 = pneg %p365
        $region66: #{tpu_custom_call.1} parent=11 // pred_check_branch
          %641 = sbr.rel (%p639) target = $region68
        $region67: #{tpu_custom_call.1} parent=11 // pred_region
          _
        $region68: #{tpu_custom_call.1} parent=11 // pred_fallthru
          _
        // Predicated region
        $region69: #{tpu_custom_call.1} parent=11 // pred_check
          %p642 = pneg %p386
        $region70: #{tpu_custom_call.1} parent=11 // pred_check_branch
          %644 = sbr.rel (%p642) target = $region72
        $region71: #{tpu_custom_call.1} parent=11 // pred_region
          _
        $region72: #{tpu_custom_call.1} parent=11 // pred_fallthru
          _
        // Predicated region
        $region73: #{tpu_custom_call.1} parent=11 // pred_check
          %p645 = pneg %p407
        $region74: #{tpu_custom_call.1} parent=11 // pred_check_branch
          %647 = sbr.rel (%p645) target = $region76
        $region75: #{tpu_custom_call.1} parent=11 // pred_region
          _
        $region76: #{tpu_custom_call.1} parent=11 // pred_fallthru
          _
        // Predicated region
        $region77: #{tpu_custom_call.1} parent=11 // pred_check
          %p648 = pneg %p428
        $region78: #{tpu_custom_call.1} parent=11 // pred_check_branch
          %650 = sbr.rel (%p648) target = $region80
        $region79: #{tpu_custom_call.1} parent=11 // pred_region
          _
        $region80: #{tpu_custom_call.1} parent=11 // pred_fallthru
          _
        // Predicated region
        $region81: #{tpu_custom_call.1} parent=11 // pred_check
          %p651 = pneg %p449
        $region82: #{tpu_custom_call.1} parent=11 // pred_check_branch
          %653 = sbr.rel (%p651) target = $region84
        $region83: #{tpu_custom_call.1} parent=11 // pred_region
          _
        $region84: #{tpu_custom_call.1} parent=11 // pred_fallthru
          _
        // Predicated region
        $region85: #{tpu_custom_call.1} parent=11 // pred_check
          %p654 = pneg %p470
        $region86: #{tpu_custom_call.1} parent=11 // pred_check_branch
          %656 = sbr.rel (%p654) target = $region88
        $region87: #{tpu_custom_call.1} parent=11 // pred_region
          _
        $region88: #{tpu_custom_call.1} parent=11 // pred_fallthru
          _
        // Predicated region
        $region89: #{tpu_custom_call.1} parent=11 // pred_check
          %p657 = pneg %p491
        $region90: #{tpu_custom_call.1} parent=11 // pred_check_branch
          %659 = sbr.rel (%p657) target = $region92
        $region91: #{tpu_custom_call.1} parent=11 // pred_region
          _
        $region92: #{tpu_custom_call.1} parent=11 // pred_fallthru
          _
        // Predicated region
        $region93: #{tpu_custom_call.1} parent=11 // pred_check
          %p660 = pneg %p512
        $region94: #{tpu_custom_call.1} parent=11 // pred_check_branch
          %662 = sbr.rel (%p660) target = $region96
        $region95: #{tpu_custom_call.1} parent=11 // pred_region
          _
        $region96: #{tpu_custom_call.1} parent=11 // pred_fallthru
          _
        // Predicated region
        $region97: #{tpu_custom_call.1} parent=11 // pred_check
          %p663 = pneg %p533
        $region98: #{tpu_custom_call.1} parent=11 // pred_check_branch
          %665 = sbr.rel (%p663) target = $region100
        $region99: #{tpu_custom_call.1} parent=11 // pred_region
          _
        $region100: #{tpu_custom_call.1} parent=11 // pred_fallthru
          _
      $region12: #{tpu_custom_call.1} parent=5 // pred_fallthru
        _
      %p666 = scmp.lt.s32.totalorder %s45, 2
      // Predicated region
      $region101: #{tpu_custom_call.1} parent=5 // pred_check
        %p667 = pneg %p666
      $region102: #{tpu_custom_call.1} parent=5 // pred_check_branch
        %669 = sbr.rel (%p667) target = $region104
      $region103: #{tpu_custom_call.1} parent=5 // pred_region
        // Predicated region
        $region105: #{tpu_custom_call.1} parent=103 // pred_check
          %p670 = pneg %p65
        $region106: #{tpu_custom_call.1} parent=103 // pred_check_branch
          %672 = sbr.rel (%p670) target = $region108
        $region107: #{tpu_custom_call.1} parent=103 // pred_region
          %s673 = sand.u32 %s55, 1
          %s674 = scalar_lea.sflag [#allocation8], %s673
          %s675 = sand.u32 %s55, 1
          %s676 = smul.addr %s675, 128
          %s677 = scalar_lea.vmem [#allocation7], %s676
          %s679 = ssub.s32 2048, 2048
          %680 = vsyncadd %s674, %s679
          %s681 = smul.addr %s45, 16
          %s682 = smul.addr %s681, 128
          %s683 = scalar_lea.hbm %s0, %s682
          %s684 = sshll.u32 %s677, 4
          %s685 = int_to_ptr.vmem [resolvable:$true] %s684
          %690 = dma.hbm_to_vmem [thread:$0]  %s683, 2048, %s685, %s674, 128, 128, 8
        $region108: #{tpu_custom_call.1} parent=103 // pred_fallthru
          _
      $region104: #{tpu_custom_call.1} parent=5 // pred_fallthru
        _
      %p691 = scmp.le.s32.totalorder 1, %s45
      %p692 = scmp.lt.s32.totalorder %s45, 3
      %p693 = pnand %p691, %p692
      %p694 = pneg %p693
      // Predicated region
      $region109: #{tpu_custom_call.1} parent=5 // pred_check
        _
      $region110: #{tpu_custom_call.1} parent=5 // pred_check_branch
        %696 = sbr.rel (%p693) target = $region112
      $region111: #{tpu_custom_call.1} parent=5 // pred_region
        %s697 = ssub.s32 %s45, 1
        %s698 = sand.u32 %s58, 1
        %s699 = scalar_lea.sflag [#allocation8], %s698
        %s700 = sand.u32 %s58, 1
        %s701 = smul.addr %s700, 128
        %s702 = scalar_lea.vmem [#allocation7], %s701
        // Predicated region
        $region113: #{tpu_custom_call.1} parent=111 // pred_check
          %p703 = pneg %p71
        $region114: #{tpu_custom_call.1} parent=111 // pred_check_branch
          %705 = sbr.rel (%p703) target = $region116
        $region115: #{tpu_custom_call.1} parent=111 // pred_region
          %706 = dma.done %s699, 2048
        $region116: #{tpu_custom_call.1} parent=111 // pred_fallthru
          _
        %s707 = sand.u32 %s58, 1
        %s708 = scalar_lea.sflag [#allocation8], %s707
        %s709 = sand.u32 %s58, 1
        %s710 = smul.addr %s709, 128
        %s711 = scalar_lea.vmem [#allocation7], %s710
        %p712 = pneg %p71
        %p713 = pneg %p68
        %p714 = pneg %p92
        %p715 = pneg %p89
        %p716 = pneg %p113
        %p717 = pneg %p110
        %p718 = pneg %p134
        %p719 = pneg %p131
        %p720 = pneg %p155
        %p721 = pneg %p152
        %p722 = pneg %p176
        %p723 = pneg %p173
        %p724 = pneg %p197
        %p725 = pneg %p194
        %p726 = pneg %p218
        %p727 = pneg %p215
        %p728 = pneg %p239
        %p729 = pneg %p236
        %p730 = pneg %p260
        %p731 = pneg %p257
        %p732 = pneg %p281
        %p733 = pneg %p278
        %p734 = pneg %p302
        %p735 = pneg %p299
        %p736 = pneg %p323
        %p737 = pneg %p320
        %p738 = pneg %p344
        %p739 = pneg %p341
        %p740 = pneg %p365
        %p741 = pneg %p362
        %p742 = pneg %p386
        %p743 = pneg %p383
        %p744 = pneg %p407
        %p745 = pneg %p404
        %p746 = pneg %p428
        %p747 = pneg %p425
        %p748 = pneg %p449
        %p749 = pneg %p446
        %p750 = pneg %p470
        %p751 = pneg %p467
        %p752 = pneg %p491
        %p753 = pneg %p488
        %p754 = pneg %p512
        %p755 = pneg %p509
        %p756 = pneg %p533
        %p757 = pneg %p530
        %p758 = pneg %p559
        %p759 = pneg %p556
        %s760 = sand.u32 %s546, 1
        %s761 = scalar_lea.sflag [#allocation9], %s760
        %s762 = sand.u32 %s546, 1
        %s763 = smul.addr %s762, 8
        %s764 = scalar_lea.vmem [#allocation10], %s763
        %p765 = pneg %p585
        %p766 = pneg %p582
        %p767 = scmp.lt.s32.totalorder %s50, 1
        %s768 = scalar_select %p767, %s50, 1
        %s769 = smul.addr %s768, 8
        %s770 = smul.addr %s769, 8
        %s771 = scalar_lea.vmem %s24, %s770
        %p772 = scmp.lt.s32.totalorder %s50, 1
        %s773 = scalar_select %p772, %s50, 1
        %s774 = smul.addr %s773, 8
        %s775 = smul.addr %s774, 8
        %s776 = scalar_lea.vmem %s24, %s775
        %v778 = vld [vmem:[%s702] sm:$0xff]
        %v779 = vld [vmem:[%s702 + $0x8] sm:$0xff]
        %v780 = vld [vmem:[%s702 + $0x10] sm:$0xff]
        %v781 = vld [vmem:[%s702 + $0x18] sm:$0xff]
        %v782 = vld [vmem:[%s702 + $0x20] sm:$0xff]
        %v783 = vld [vmem:[%s702 + $0x28] sm:$0xff]
        %v784 = vld [vmem:[%s702 + $0x30] sm:$0xff]
        %v785 = vld [vmem:[%s702 + $0x38] sm:$0xff]
        %v786 = vld [vmem:[%s702 + $0x40] sm:$0xff]
        %v787 = vld [vmem:[%s702 + $0x48] sm:$0xff]
        %v788 = vld [vmem:[%s702 + $0x50] sm:$0xff]
        %v789 = vld [vmem:[%s702 + $0x58] sm:$0xff]
        %v790 = vld [vmem:[%s702 + $0x60] sm:$0xff]
        %v791 = vld [vmem:[%s702 + $0x68] sm:$0xff]
        %v792 = vld [vmem:[%s702 + $0x70] sm:$0xff]
        %v793 = vld [vmem:[%s702 + $0x78] sm:$0xff]
        %802 = vrot.lane.b32.xlu0 %v778, 124
        %v803 = vpop.permute.xlu0 %802
        %804 = vrot.lane.b32.xlu0 %v780, 124
        %v805 = vpop.permute.xlu0 %804
        %806 = vrot.lane.b32.xlu0 %v782, 124
        %v807 = vpop.permute.xlu0 %806
        %808 = vrot.lane.b32.xlu0 %v784, 124
        %v809 = vpop.permute.xlu0 %808
        %810 = vrot.lane.b32.xlu0 %v786, 124
        %v811 = vpop.permute.xlu0 %810
        %812 = vrot.lane.b32.xlu0 %v788, 124
        %v813 = vpop.permute.xlu0 %812
        %814 = vrot.lane.b32.xlu0 %v790, 124
        %v815 = vpop.permute.xlu0 %814
        %816 = vrot.lane.b32.xlu0 %v792, 124
        %v817 = vpop.permute.xlu0 %816
        %v826 = vadd.f32 %v778, %v803
        %v827 = vadd.f32 %v780, %v805
        %v828 = vadd.f32 %v782, %v807
        %v829 = vadd.f32 %v784, %v809
        %v830 = vadd.f32 %v786, %v811
        %v831 = vadd.f32 %v788, %v813
        %v832 = vadd.f32 %v790, %v815
        %v833 = vadd.f32 %v792, %v817
        %v834 = vadd.f32 %v826, %v779
        %v835 = vadd.f32 %v827, %v781
        %v836 = vadd.f32 %v828, %v783
        %v837 = vadd.f32 %v829, %v785
        %v838 = vadd.f32 %v830, %v787
        %v839 = vadd.f32 %v831, %v789
        %v840 = vadd.f32 %v832, %v791
        %v841 = vadd.f32 %v833, %v793
        %850 = vrot.lane.b32.xlu0 %v779, 124
        %v851 = vpop.permute.xlu0 %850
        %852 = vrot.lane.b32.xlu0 %v781, 124
        %v853 = vpop.permute.xlu0 %852
        %854 = vrot.lane.b32.xlu0 %v783, 124
        %v855 = vpop.permute.xlu0 %854
        %856 = vrot.lane.b32.xlu0 %v785, 124
        %v857 = vpop.permute.xlu0 %856
        %858 = vrot.lane.b32.xlu0 %v787, 124
        %v859 = vpop.permute.xlu0 %858
        %860 = vrot.lane.b32.xlu0 %v789, 124
        %v861 = vpop.permute.xlu0 %860
        %862 = vrot.lane.b32.xlu0 %v791, 124
        %v863 = vpop.permute.xlu0 %862
        %864 = vrot.lane.b32.xlu0 %v793, 124
        %v865 = vpop.permute.xlu0 %864
        %v874 = vadd.f32 %v834, %v851
        %v875 = vadd.f32 %v835, %v853
        %v876 = vadd.f32 %v836, %v855
        %v877 = vadd.f32 %v837, %v857
        %v878 = vadd.f32 %v838, %v859
        %v879 = vadd.f32 %v839, %v861
        %v880 = vadd.f32 %v840, %v863
        %v881 = vadd.f32 %v841, %v865
        %v882 = vmul.f32 %v874, 0.5
        %v883 = vmul.f32 %v875, 0.5
        %v884 = vmul.f32 %v876, 0.5
        %v885 = vmul.f32 %v877, 0.5
        %v886 = vmul.f32 %v878, 0.5
        %v887 = vmul.f32 %v879, 0.5
        %v888 = vmul.f32 %v880, 0.5
        %v889 = vmul.f32 %v881, 0.5
        %v890 = vsub.f32 %v826, %v779
        %v891 = vsub.f32 %v827, %v781
        %v892 = vsub.f32 %v828, %v783
        %v893 = vsub.f32 %v829, %v785
        %v894 = vsub.f32 %v830, %v787
        %v895 = vsub.f32 %v831, %v789
        %v896 = vsub.f32 %v832, %v791
        %v897 = vsub.f32 %v833, %v793
        %v898 = vsub.f32 %v890, %v851
        %v899 = vsub.f32 %v891, %v853
        %v900 = vsub.f32 %v892, %v855
        %v901 = vsub.f32 %v893, %v857
        %v902 = vsub.f32 %v894, %v859
        %v903 = vsub.f32 %v895, %v861
        %v904 = vsub.f32 %v896, %v863
        %v905 = vsub.f32 %v897, %v865
        %v906 = vmul.f32 %v898, 0.5
        %v907 = vmul.f32 %v899, 0.5
        %v908 = vmul.f32 %v900, 0.5
        %v909 = vmul.f32 %v901, 0.5
        %v910 = vmul.f32 %v902, 0.5
        %v911 = vmul.f32 %v903, 0.5
        %v912 = vmul.f32 %v904, 0.5
        %v913 = vmul.f32 %v905, 0.5
        %v914 = vsub.f32 %v778, %v803
        %v915 = vsub.f32 %v780, %v805
        %v916 = vsub.f32 %v782, %v807
        %v917 = vsub.f32 %v784, %v809
        %v918 = vsub.f32 %v786, %v811
        %v919 = vsub.f32 %v788, %v813
        %v920 = vsub.f32 %v790, %v815
        %v921 = vsub.f32 %v792, %v817
        %v922 = vadd.f32 %v914, %v779
        %v923 = vadd.f32 %v915, %v781
        %v924 = vadd.f32 %v916, %v783
        %v925 = vadd.f32 %v917, %v785
        %v926 = vadd.f32 %v918, %v787
        %v927 = vadd.f32 %v919, %v789
        %v928 = vadd.f32 %v920, %v791
        %v929 = vadd.f32 %v921, %v793
        %v930 = vsub.f32 %v922, %v851
        %v931 = vsub.f32 %v923, %v853
        %v932 = vsub.f32 %v924, %v855
        %v933 = vsub.f32 %v925, %v857
        %v934 = vsub.f32 %v926, %v859
        %v935 = vsub.f32 %v927, %v861
        %v936 = vsub.f32 %v928, %v863
        %v937 = vsub.f32 %v929, %v865
        %v938 = vmul.f32 %v930, 0.5
        %v939 = vmul.f32 %v931, 0.5
        %v940 = vmul.f32 %v932, 0.5
        %v941 = vmul.f32 %v933, 0.5
        %v942 = vmul.f32 %v934, 0.5
        %v943 = vmul.f32 %v935, 0.5
        %v944 = vmul.f32 %v936, 0.5
        %v945 = vmul.f32 %v937, 0.5
        %v946 = vsub.f32 %v914, %v779
        %v947 = vsub.f32 %v915, %v781
        %v948 = vsub.f32 %v916, %v783
        %v949 = vsub.f32 %v917, %v785
        %v950 = vsub.f32 %v918, %v787
        %v951 = vsub.f32 %v919, %v789
        %v952 = vsub.f32 %v920, %v791
        %v953 = vsub.f32 %v921, %v793
        %v954 = vadd.f32 %v946, %v851
        %v955 = vadd.f32 %v947, %v853
        %v956 = vadd.f32 %v948, %v855
        %v957 = vadd.f32 %v949, %v857
        %v958 = vadd.f32 %v950, %v859
        %v959 = vadd.f32 %v951, %v861
        %v960 = vadd.f32 %v952, %v863
        %v961 = vadd.f32 %v953, %v865
        %v962 = vmul.f32 %v954, 0.5
        %v963 = vmul.f32 %v955, 0.5
        %v964 = vmul.f32 %v956, 0.5
        %v965 = vmul.f32 %v957, 0.5
        %v966 = vmul.f32 %v958, 0.5
        %v967 = vmul.f32 %v959, 0.5
        %v968 = vmul.f32 %v960, 0.5
        %v969 = vmul.f32 %v961, 0.5
        %vm970 = vcmask 162816
        %971 = vst.msk [vmem:[#allocation2] sm:$0xff] %vm970, 0.0
        %vm972 = vcmask 158720
        %973 = vst.msk [vmem:[#allocation2 + $0x8] sm:$0xf] %vm972, 0.0
        %974 = vst.msk [vmem:[#allocation2 + $0x10] sm:$0xff] %vm970, 0.0
        %975 = vst.msk [vmem:[#allocation2 + $0x18] sm:$0xf] %vm972, 0.0
        %976 = vst.msk [vmem:[#allocation2 + $0x20] sm:$0xff] %vm970, 0.0
        %977 = vst.msk [vmem:[#allocation2 + $0x28] sm:$0xf] %vm972, 0.0
        %978 = vst.msk [vmem:[#allocation2 + $0x30] sm:$0xff] %vm970, 0.0
        %979 = vst.msk [vmem:[#allocation2 + $0x38] sm:$0xf] %vm972, 0.0
        %980 = vst.msk [vmem:[#allocation2 + $0x40] sm:$0xff] %vm970, 0.0
        %981 = vst.msk [vmem:[#allocation2 + $0x48] sm:$0xf] %vm972, 0.0
        %982 = vst.msk [vmem:[#allocation2 + $0x50] sm:$0xff] %vm970, 0.0
        %983 = vst.msk [vmem:[#allocation2 + $0x58] sm:$0xf] %vm972, 0.0
        %984 = vst.msk [vmem:[#allocation2 + $0x60] sm:$0xff] %vm970, 0.0
        %985 = vst.msk [vmem:[#allocation2 + $0x68] sm:$0xf] %vm972, 0.0
        %986 = vst.msk [vmem:[#allocation2 + $0x70] sm:$0xff] %vm970, 0.0
        %987 = vst.msk [vmem:[#allocation2 + $0x78] sm:$0xf] %vm972, 0.0
        %988 = vst.msk [vmem:[#allocation2 + $0x80] sm:$0xff] %vm970, 0.0
        %989 = vst.msk [vmem:[#allocation2 + $0x88] sm:$0xf] %vm972, 0.0
        %990 = vst.msk [vmem:[#allocation2 + $0x90] sm:$0xff] %vm970, 0.0
        %991 = vst.msk [vmem:[#allocation2 + $0x98] sm:$0xf] %vm972, 0.0
        %992 = vst.msk [vmem:[#allocation2 + $0xa0] sm:$0xff] %vm970, 0.0
        %993 = vst.msk [vmem:[#allocation2 + $0xa8] sm:$0xf] %vm972, 0.0
        %994 = vst.msk [vmem:[#allocation2 + $0xb0] sm:$0xff] %vm970, 0.0
        %995 = vst.msk [vmem:[#allocation2 + $0xb8] sm:$0xf] %vm972, 0.0
        %v996 = vld [vmem:[%s1] sm:$0x3]
        %v997 = vld [vmem:[#allocation3] sm:$0x1]
        %v998 = vld [vmem:[%s3] sm:$0x1]
        %v999 = vld [vmem:[%s4] sm:$0x1]
        %v1000 = vpack.c.bf16 %v883, %v882
        %v1001 = vpack.c.bf16 %v885, %v884
        %v1002 = vpack.c.bf16 %v887, %v886
        %v1003 = vpack.c.bf16 %v889, %v888
        %v1005 = vlaneseq
        %v1006 = vshrl.u32 %v1005, 7
        %v1007 = vsub.s32 0, %v1006
        %v1008 = vrot.slane %v997, %v1007
        %vm1010 = vcmask 31744
        %v1012 = vsel %vm1010, %v1000, 0
        %v1015 = vsel %vm1010, %v1001, 0
        %v1018 = vsel %vm1010, %v1002, 0
        %v1021 = vsel %vm1010, %v1003, 0
        %vm1023 = vcmask 1041408
        %v1025 = vsel %vm1023, %v996, 0
        %1027 = vmatprep.subr.bf16.mxu0 0
        %1028 = vmatpush1.bf16.msra.mxu0 0
        %1029 = vmatprep.subr.bf16.mxu0 0
        %1030 = vmatpush1.bf16.msra.mxu0 0
        %1031 = vmatprep.subr.bf16.mxu0 0
        %1032 = vmatpush1.bf16.msra.mxu0 0
        %1033 = vmatprep.subr.bf16.mxu0 0
        %1034 = vmatpush1.bf16.msra.mxu0 0
        %1035 = vmatprep.subr.bf16.mxu0 0
        %1036 = vmatpush1.bf16.msra.mxu0 0
        %1037 = vmatprep.subr.bf16.mxu0 0
        %1038 = vmatpush1.bf16.msra.mxu0 0
        %1039 = vmatprep.subr.bf16.mxu0 0
        %1040 = vmatpush1.bf16.msra.mxu0 0
        %1041 = vmatprep.subr.bf16.mxu0 0
        %1042 = vmatpush1.bf16.msra.mxu0 %v1025
        %1043 = vmatprep.subr.bf16.mxu0 0
        %1044 = vmatpush2.bf16.msra.mxu0 0
        %1045 = vmatprep.subr.bf16.mxu0 0
        %1046 = vmatpush2.bf16.msra.mxu0 0
        %1047 = vmatprep.subr.bf16.mxu0 0
        %1048 = vmatpush2.bf16.msra.mxu0 0
        %1049 = vmatprep.subr.bf16.mxu0 0
        %1050 = vmatpush2.bf16.msra.mxu0 0
        %1051 = vmatprep.subr.bf16.mxu0 0
        %1052 = vmatpush2.bf16.msra.mxu0 0
        %1053 = vmatprep.subr.bf16.mxu0 0
        %1054 = vmatpush2.bf16.msra.mxu0 0
        %1055 = vmatprep.subr.bf16.mxu0 0
        %1056 = vmatpush2.bf16.msra.mxu0 0
        %1057 = vmatprep.subr.bf16.mxu0 0
        %1058 = vmatpush2.bf16.msra.mxu0 0
        %1059 = vmatprep.mubr.bf16.mxu0 0
        %1060 = vmatmul.mubr.bf16.gmra.mxu0 %v1012
        %v1061 = vpop.f32.mrf.mxu0
        %v1062 = vadd.f32 %v1008, %v1061
        %v1063 = vpop.f32.mrf.mxu0
        %v1064 = vpop.f32.mrf.mxu0
        %v1065 = vadd.f32 %v1008, %v1064
        %v1066 = vpop.f32.mrf.mxu0
        %1067 = vmatprep.mubr.bf16.mxu0 0
        %1068 = vmatmul.mubr.bf16.gmra.mxu0 %v1015
        %v1069 = vpop.f32.mrf.mxu0
        %v1070 = vadd.f32 %v1008, %v1069
        %v1071 = vpop.f32.mrf.mxu0
        %v1072 = vpop.f32.mrf.mxu0
        %v1073 = vadd.f32 %v1008, %v1072
        %v1074 = vpop.f32.mrf.mxu0
        %1075 = vmatprep.mubr.bf16.mxu0 0
        %1076 = vmatmul.mubr.bf16.gmra.mxu0 %v1018
        %v1077 = vpop.f32.mrf.mxu0
        %v1078 = vadd.f32 %v1008, %v1077
        %v1079 = vpop.f32.mrf.mxu0
        %v1080 = vpop.f32.mrf.mxu0
        %v1081 = vadd.f32 %v1008, %v1080
        %v1082 = vpop.f32.mrf.mxu0
        %1083 = vmatprep.mubr.bf16.mxu0 0
        %1084 = vmatmul.mubr.bf16.gmra.mxu0 %v1021
        %v1085 = vpop.f32.mrf.mxu0
        %v1086 = vadd.f32 %v1008, %v1085
        %v1087 = vpop.f32.mrf.mxu0
        %v1088 = vpop.f32.mrf.mxu0
        %v1089 = vadd.f32 %v1008, %v1088
        %v1090 = vpop.f32.mrf.mxu0
        %1091 = vdwg.mxu0
        %v1092 = vmax.f32 %v1062, 0.0
        %v1093 = vmax.f32 %v1065, 0.0
        %v1094 = vmax.f32 %v1070, 0.0
        %v1095 = vmax.f32 %v1073, 0.0
        %v1096 = vmax.f32 %v1078, 0.0
        %v1097 = vmax.f32 %v1081, 0.0
        %v1098 = vmax.f32 %v1086, 0.0
        %v1099 = vmax.f32 %v1089, 0.0
        %v1100 = vpack.c.bf16 %v1093, %v1092
        %v1101 = vpack.c.bf16 %v1095, %v1094
        %v1102 = vpack.c.bf16 %v1097, %v1096
        %v1103 = vpack.c.bf16 %v1099, %v1098
        %v1105 = vlaneseq
        %v1106 = vshrl.u32 %v1105, 7
        %v1107 = vsub.s32 0, %v1106
        %v1108 = vrot.slane %v999, %v1107
        %vm1110 = vcmask 7168
        %v1112 = vsel %vm1110, %v1100, 0
        %v1115 = vsel %vm1110, %v1101, 0
        %v1118 = vsel %vm1110, %v1102, 0
        %v1121 = vsel %vm1110, %v1103, 0
        %vm1123 = vcmask 1040384
        %v1124 = vsel 0, 4294967295, 65535
        %v1125 = vsel %vm1123, %v1124, 0
        %v1127 = vand.u32 %v998, %v1125
        %1129 = vmatprep.subr.bf16.mxu0 0
        %1130 = vmatpush1.bf16.msra.mxu0 0
        %1131 = vmatprep.subr.bf16.mxu0 0
        %1132 = vmatpush1.bf16.msra.mxu0 0
        %1133 = vmatprep.subr.bf16.mxu0 0
        %1134 = vmatpush1.bf16.msra.mxu0 0
        %1135 = vmatprep.subr.bf16.mxu0 0
        %1136 = vmatpush1.bf16.msra.mxu0 0
        %1137 = vmatprep.subr.bf16.mxu0 0
        %1138 = vmatpush1.bf16.msra.mxu0 0
        %1139 = vmatprep.subr.bf16.mxu0 0
        %1140 = vmatpush1.bf16.msra.mxu0 0
        %1141 = vmatprep.subr.bf16.mxu0 0
        %1142 = vmatpush1.bf16.msra.mxu0 0
        %1143 = vmatprep.subr.bf16.mxu0 0
        %1144 = vmatpush1.bf16.msra.mxu0 %v1127
        %1145 = vmatprep.subr.bf16.mxu0 0
        %1146 = vmatpush2.bf16.msra.mxu0 0
        %1147 = vmatprep.subr.bf16.mxu0 0
        %1148 = vmatpush2.bf16.msra.mxu0 0
        %1149 = vmatprep.subr.bf16.mxu0 0
        %1150 = vmatpush2.bf16.msra.mxu0 0
        %1151 = vmatprep.subr.bf16.mxu0 0
        %1152 = vmatpush2.bf16.msra.mxu0 0
        %1153 = vmatprep.subr.bf16.mxu0 0
        %1154 = vmatpush2.bf16.msra.mxu0 0
        %1155 = vmatprep.subr.bf16.mxu0 0
        %1156 = vmatpush2.bf16.msra.mxu0 0
        %1157 = vmatprep.subr.bf16.mxu0 0
        %1158 = vmatpush2.bf16.msra.mxu0 0
        %1159 = vmatprep.subr.bf16.mxu0 0
        %1160 = vmatpush2.bf16.msra.mxu0 0
        %1161 = vmatprep.mubr.bf16.mxu0 0
        %1162 = vmatmul.mubr.bf16.gmra.mxu0 %v1112
        %v1163 = vpop.f32.mrf.mxu0
        %v1164 = vadd.f32 %v1108, %v1163
        %v1165 = vpop.f32.mrf.mxu0
        %v1166 = vpop.f32.mrf.mxu0
        %v1167 = vadd.f32 %v1108, %v1166
        %v1168 = vpop.f32.mrf.mxu0
        %1169 = vmatprep.mubr.bf16.mxu0 0
        %1170 = vmatmul.mubr.bf16.gmra.mxu0 %v1115
        %v1171 = vpop.f32.mrf.mxu0
        %v1172 = vadd.f32 %v1108, %v1171
        %v1173 = vpop.f32.mrf.mxu0
        %v1174 = vpop.f32.mrf.mxu0
        %v1175 = vadd.f32 %v1108, %v1174
        %v1176 = vpop.f32.mrf.mxu0
        %1177 = vmatprep.mubr.bf16.mxu0 0
        %1178 = vmatmul.mubr.bf16.gmra.mxu0 %v1118
        %v1179 = vpop.f32.mrf.mxu0
        %v1180 = vadd.f32 %v1108, %v1179
        %v1181 = vpop.f32.mrf.mxu0
        %v1182 = vpop.f32.mrf.mxu0
        %v1183 = vadd.f32 %v1108, %v1182
        %v1184 = vpop.f32.mrf.mxu0
        %1185 = vmatprep.mubr.bf16.mxu0 0
        %1186 = vmatmul.mubr.bf16.gmra.mxu0 %v1121
        %v1187 = vpop.f32.mrf.mxu0
        %v1188 = vadd.f32 %v1108, %v1187
        %v1189 = vpop.f32.mrf.mxu0
        %v1190 = vpop.f32.mrf.mxu0
        %v1191 = vadd.f32 %v1108, %v1190
        %v1192 = vpop.f32.mrf.mxu0
        %1193 = vdwg.mxu0
        %v1194 = vxor.u32 %v1164, 2147483648
        %v1195 = vxor.u32 %v1167, 2147483648
        %v1196 = vxor.u32 %v1172, 2147483648
        %v1197 = vxor.u32 %v1175, 2147483648
        %v1198 = vxor.u32 %v1180, 2147483648
        %v1199 = vxor.u32 %v1183, 2147483648
        %v1200 = vxor.u32 %v1188, 2147483648
        %v1201 = vxor.u32 %v1191, 2147483648
        %v1202 = vmul.f32 %v1194, 1.442695
        %v1203 = vpow.pop %v1202
        %v1204 = vmul.f32 %v1195, 1.442695
        %v1205 = vpow.pop %v1204
        %v1206 = vmul.f32 %v1196, 1.442695
        %v1207 = vpow.pop %v1206
        %v1208 = vmul.f32 %v1197, 1.442695
        %v1209 = vpow.pop %v1208
        %v1210 = vmul.f32 %v1198, 1.442695
        %v1211 = vpow.pop %v1210
        %v1212 = vmul.f32 %v1199, 1.442695
        %v1213 = vpow.pop %v1212
        %v1214 = vmul.f32 %v1200, 1.442695
        %v1215 = vpow.pop %v1214
        %v1216 = vmul.f32 %v1201, 1.442695
        %v1217 = vpow.pop %v1216
        %v1218 = vadd.f32 %v1203, 1.0
        %v1219 = vadd.f32 %v1205, 1.0
        %v1220 = vadd.f32 %v1207, 1.0
        %v1221 = vadd.f32 %v1209, 1.0
        %v1222 = vadd.f32 %v1211, 1.0
        %v1223 = vadd.f32 %v1213, 1.0
        %v1224 = vadd.f32 %v1215, 1.0
        %v1225 = vadd.f32 %v1217, 1.0
        %v1226 = vrcp.pop %v1218
        %v1227 = vmul.f32 1.0, %v1226
        %v1228 = vrcp.pop %v1219
        %v1229 = vmul.f32 1.0, %v1228
        %v1230 = vrcp.pop %v1220
        %v1231 = vmul.f32 1.0, %v1230
        %v1232 = vrcp.pop %v1221
        %v1233 = vmul.f32 1.0, %v1232
        %v1234 = vrcp.pop %v1222
        %v1235 = vmul.f32 1.0, %v1234
        %v1236 = vrcp.pop %v1223
        %v1237 = vmul.f32 1.0, %v1236
        %v1238 = vrcp.pop %v1224
        %v1239 = vmul.f32 1.0, %v1238
        %v1240 = vrcp.pop %v1225
        %v1241 = vmul.f32 1.0, %v1240
        %v1242 = vmul.f32 %v882, %v1227
        %v1243 = vmul.f32 %v883, %v1229
        %v1244 = vmul.f32 %v884, %v1231
        %v1245 = vmul.f32 %v885, %v1233
        %v1246 = vmul.f32 %v886, %v1235
        %v1247 = vmul.f32 %v887, %v1237
        %v1248 = vmul.f32 %v888, %v1239
        %v1249 = vmul.f32 %v889, %v1241
        %s1250 = scalar_lea.vmem [#allocation2], 32
        %1251 = vst.msk [vmem:[%s1250 + $0x2] sm:$0xff] %vm1010, %v1242
        %1252 = vst.msk [vmem:[%s1250 + $0x12] sm:$0xff] %vm1010, %v1243
        %1253 = vst.msk [vmem:[%s1250 + $0x22] sm:$0xff] %vm1010, %v1244
        %1254 = vst.msk [vmem:[%s1250 + $0x32] sm:$0xff] %vm1010, %v1245
        %1255 = vst.msk [vmem:[%s1250 + $0x42] sm:$0xff] %vm1010, %v1246
        %1256 = vst.msk [vmem:[%s1250 + $0x52] sm:$0xff] %vm1010, %v1247
        %1257 = vst.msk [vmem:[%s1250 + $0x62] sm:$0xff] %vm1010, %v1248
        %1258 = vst.msk [vmem:[%s1250 + $0x72] sm:$0xff] %vm1010, %v1249
        %v1259 = vld [vmem:[%s5] sm:$0xf]
        %v1260 = vld [vmem:[%s5 + $0x4] sm:$0xf]
        %v1261 = vld [vmem:[%s5 + $0x8] sm:$0x3]
        %v1262 = vld [vmem:[#allocation4] sm:$0x1]
        %v1263 = vld [vmem:[%s7] sm:$0x7]
        %v1264 = vld [vmem:[%s8] sm:$0x1]
        %1273 = vrot.lane.b32.xlu0 %v906, 16
        %v1274 = vpop.permute.xlu0 %1273
        %1275 = vrot.lane.b32.xlu0 %v907, 16
        %v1276 = vpop.permute.xlu0 %1275
        %1277 = vrot.lane.b32.xlu0 %v908, 16
        %v1278 = vpop.permute.xlu0 %1277
        %1279 = vrot.lane.b32.xlu0 %v909, 16
        %v1280 = vpop.permute.xlu0 %1279
        %1281 = vrot.lane.b32.xlu0 %v910, 16
        %v1282 = vpop.permute.xlu0 %1281
        %1283 = vrot.lane.b32.xlu0 %v911, 16
        %v1284 = vpop.permute.xlu0 %1283
        %1285 = vrot.lane.b32.xlu0 %v912, 16
        %v1286 = vpop.permute.xlu0 %1285
        %1287 = vrot.lane.b32.xlu0 %v913, 16
        %v1288 = vpop.permute.xlu0 %1287
        %vm1297 = vcmask 162944
        %1298 = vst.msk [vmem:[%s1250 + $0x2] sm:$0xff] %vm1297, %v1274
        %1299 = vst.msk [vmem:[%s1250 + $0x12] sm:$0xff] %vm1297, %v1276
        %1300 = vst.msk [vmem:[%s1250 + $0x22] sm:$0xff] %vm1297, %v1278
        %1301 = vst.msk [vmem:[%s1250 + $0x32] sm:$0xff] %vm1297, %v1280
        %1302 = vst.msk [vmem:[%s1250 + $0x42] sm:$0xff] %vm1297, %v1282
        %1303 = vst.msk [vmem:[%s1250 + $0x52] sm:$0xff] %vm1297, %v1284
        %1304 = vst.msk [vmem:[%s1250 + $0x62] sm:$0xff] %vm1297, %v1286
        %1305 = vst.msk [vmem:[%s1250 + $0x72] sm:$0xff] %vm1297, %v1288
        %v1306 = vld [vmem:[%s1250] sm:$0xff]
        %v1307 = vld [vmem:[%s1250 + $0x10] sm:$0xff]
        %v1308 = vld [vmem:[%s1250 + $0x20] sm:$0xff]
        %v1309 = vld [vmem:[%s1250 + $0x30] sm:$0xff]
        %v1310 = vld [vmem:[%s1250 + $0x40] sm:$0xff]
        %v1311 = vld [vmem:[%s1250 + $0x50] sm:$0xff]
        %v1312 = vld [vmem:[%s1250 + $0x60] sm:$0xff]
        %v1313 = vld [vmem:[%s1250 + $0x70] sm:$0xff]
        %v1314 = vld [vmem:[%s1250 + $0x1] sm:$0xff]
        %v1315 = vld [vmem:[%s1250 + $0x11] sm:$0xff]
        %v1316 = vld [vmem:[%s1250 + $0x21] sm:$0xff]
        %v1317 = vld [vmem:[%s1250 + $0x31] sm:$0xff]
        %v1318 = vld [vmem:[%s1250 + $0x41] sm:$0xff]
        %v1319 = vld [vmem:[%s1250 + $0x51] sm:$0xff]
        %v1320 = vld [vmem:[%s1250 + $0x61] sm:$0xff]
        %v1321 = vld [vmem:[%s1250 + $0x71] sm:$0xff]
        %v1322 = vld [vmem:[%s1250 + $0x2] sm:$0xff]
        %v1323 = vld [vmem:[%s1250 + $0x12] sm:$0xff]
        %v1324 = vld [vmem:[%s1250 + $0x22] sm:$0xff]
        %v1325 = vld [vmem:[%s1250 + $0x32] sm:$0xff]
        %v1326 = vld [vmem:[%s1250 + $0x42] sm:$0xff]
        %v1327 = vld [vmem:[%s1250 + $0x52] sm:$0xff]
        %v1328 = vld [vmem:[%s1250 + $0x62] sm:$0xff]
        %v1329 = vld [vmem:[%s1250 + $0x72] sm:$0xff]
        %v1330 = vld [vmem:[%s1250 + $0x3] sm:$0xff]
        %v1331 = vld [vmem:[%s1250 + $0x13] sm:$0xff]
        %v1332 = vld [vmem:[%s1250 + $0x23] sm:$0xff]
        %v1333 = vld [vmem:[%s1250 + $0x33] sm:$0xff]
        %v1334 = vld [vmem:[%s1250 + $0x43] sm:$0xff]
        %v1335 = vld [vmem:[%s1250 + $0x53] sm:$0xff]
        %v1336 = vld [vmem:[%s1250 + $0x63] sm:$0xff]
        %v1337 = vld [vmem:[%s1250 + $0x73] sm:$0xff]
        %v1338 = vld [vmem:[%s1250 + $0x4] sm:$0xff]
        %v1339 = vld [vmem:[%s1250 + $0x14] sm:$0xff]
        %v1340 = vld [vmem:[%s1250 + $0x24] sm:$0xff]
        %v1341 = vld [vmem:[%s1250 + $0x34] sm:$0xff]
        %v1342 = vld [vmem:[%s1250 + $0x44] sm:$0xff]
        %v1343 = vld [vmem:[%s1250 + $0x54] sm:$0xff]
        %v1344 = vld [vmem:[%s1250 + $0x64] sm:$0xff]
        %v1345 = vld [vmem:[%s1250 + $0x74] sm:$0xff]
        %1354 = vrot.lane.b32.xlu0 %v1306, 112
        %v1355 = vpop.permute.xlu0 %1354
        %1356 = vrot.lane.b32.xlu0 %v1307, 112
        %v1357 = vpop.permute.xlu0 %1356
        %1358 = vrot.lane.b32.xlu0 %v1308, 112
        %v1359 = vpop.permute.xlu0 %1358
        %1360 = vrot.lane.b32.xlu0 %v1309, 112
        %v1361 = vpop.permute.xlu0 %1360
        %1362 = vrot.lane.b32.xlu0 %v1310, 112
        %v1363 = vpop.permute.xlu0 %1362
        %1364 = vrot.lane.b32.xlu0 %v1311, 112
        %v1365 = vpop.permute.xlu0 %1364
        %1366 = vrot.lane.b32.xlu0 %v1312, 112
        %v1367 = vpop.permute.xlu0 %1366
        %1368 = vrot.lane.b32.xlu0 %v1313, 112
        %v1369 = vpop.permute.xlu0 %1368
        %1386 = vrot.lane.b32.xlu0 %v1314, 116
        %v1387 = vpop.permute.xlu0 %1386
        %1388 = vrot.lane.b32.xlu0 %v1315, 116
        %v1389 = vpop.permute.xlu0 %1388
        %1390 = vrot.lane.b32.xlu0 %v1316, 116
        %v1391 = vpop.permute.xlu0 %1390
        %1392 = vrot.lane.b32.xlu0 %v1317, 116
        %v1393 = vpop.permute.xlu0 %1392
        %1394 = vrot.lane.b32.xlu0 %v1318, 116
        %v1395 = vpop.permute.xlu0 %1394
        %1396 = vrot.lane.b32.xlu0 %v1319, 116
        %v1397 = vpop.permute.xlu0 %1396
        %1398 = vrot.lane.b32.xlu0 %v1320, 116
        %v1399 = vpop.permute.xlu0 %1398
        %1400 = vrot.lane.b32.xlu0 %v1321, 116
        %v1401 = vpop.permute.xlu0 %1400
        %1418 = vrot.lane.b32.xlu0 %v1322, 120
        %v1419 = vpop.permute.xlu0 %1418
        %1420 = vrot.lane.b32.xlu0 %v1323, 120
        %v1421 = vpop.permute.xlu0 %1420
        %1422 = vrot.lane.b32.xlu0 %v1324, 120
        %v1423 = vpop.permute.xlu0 %1422
        %1424 = vrot.lane.b32.xlu0 %v1325, 120
        %v1425 = vpop.permute.xlu0 %1424
        %1426 = vrot.lane.b32.xlu0 %v1326, 120
        %v1427 = vpop.permute.xlu0 %1426
        %1428 = vrot.lane.b32.xlu0 %v1327, 120
        %v1429 = vpop.permute.xlu0 %1428
        %1430 = vrot.lane.b32.xlu0 %v1328, 120
        %v1431 = vpop.permute.xlu0 %1430
        %1432 = vrot.lane.b32.xlu0 %v1329, 120
        %v1433 = vpop.permute.xlu0 %1432
        %1450 = vrot.lane.b32.xlu0 %v1330, 124
        %v1451 = vpop.permute.xlu0 %1450
        %1452 = vrot.lane.b32.xlu0 %v1331, 124
        %v1453 = vpop.permute.xlu0 %1452
        %1454 = vrot.lane.b32.xlu0 %v1332, 124
        %v1455 = vpop.permute.xlu0 %1454
        %1456 = vrot.lane.b32.xlu0 %v1333, 124
        %v1457 = vpop.permute.xlu0 %1456
        %1458 = vrot.lane.b32.xlu0 %v1334, 124
        %v1459 = vpop.permute.xlu0 %1458
        %1460 = vrot.lane.b32.xlu0 %v1335, 124
        %v1461 = vpop.permute.xlu0 %1460
        %1462 = vrot.lane.b32.xlu0 %v1336, 124
        %v1463 = vpop.permute.xlu0 %1462
        %1464 = vrot.lane.b32.xlu0 %v1337, 124
        %v1465 = vpop.permute.xlu0 %1464
        %v1474 = vsel %vm1010, %v1355, %v1387
        %v1475 = vsel %vm1010, %v1357, %v1389
        %v1476 = vsel %vm1010, %v1359, %v1391
        %v1477 = vsel %vm1010, %v1361, %v1393
        %v1478 = vsel %vm1010, %v1363, %v1395
        %v1479 = vsel %vm1010, %v1365, %v1397
        %v1480 = vsel %vm1010, %v1367, %v1399
        %v1481 = vsel %vm1010, %v1369, %v1401
        %vm1482 = vcmask 64512
        %v1483 = vsel %vm1482, %v1474, %v1419
        %v1484 = vsel %vm1482, %v1475, %v1421
        %v1485 = vsel %vm1482, %v1476, %v1423
        %v1486 = vsel %vm1482, %v1477, %v1425
        %v1487 = vsel %vm1482, %v1478, %v1427
        %v1488 = vsel %vm1482, %v1479, %v1429
        %v1489 = vsel %vm1482, %v1480, %v1431
        %v1490 = vsel %vm1482, %v1481, %v1433
        %vm1491 = vcmask 97280
        %v1492 = vsel %vm1491, %v1483, %v1451
        %v1493 = vsel %vm1491, %v1484, %v1453
        %v1494 = vsel %vm1491, %v1485, %v1455
        %v1495 = vsel %vm1491, %v1486, %v1457
        %v1496 = vsel %vm1491, %v1487, %v1459
        %v1497 = vsel %vm1491, %v1488, %v1461
        %v1498 = vsel %vm1491, %v1489, %v1463
        %v1499 = vsel %vm1491, %v1490, %v1465
        %vm1500 = vcmask 130048
        %v1501 = vsel %vm1500, %v1492, %v1338
        %v1502 = vsel %vm1500, %v1493, %v1339
        %v1503 = vsel %vm1500, %v1494, %v1340
        %v1504 = vsel %vm1500, %v1495, %v1341
        %v1505 = vsel %vm1500, %v1496, %v1342
        %v1506 = vsel %vm1500, %v1497, %v1343
        %v1507 = vsel %vm1500, %v1498, %v1344
        %v1508 = vsel %vm1500, %v1499, %v1345
        %v1509 = vpack.c.bf16 %v1502, %v1501
        %v1510 = vpack.c.bf16 %v1504, %v1503
        %v1511 = vpack.c.bf16 %v1506, %v1505
        %v1512 = vpack.c.bf16 %v1508, %v1507
        %v1514 = vlaneseq
        %v1515 = vshrl.u32 %v1514, 7
        %v1516 = vsub.s32 0, %v1515
        %v1517 = vrot.slane %v1262, %v1516
        %v1522 = vunpack.c.l.b16 %v1259
        %v1523 = vunpack.c.l.b16 %v1260
        %v1524 = vunpack.c.l.b16 %v1261
        %v1525 = vpack.c.b16 %v1523, %v1522
        %v1526 = vpack.c.b16 %v1524, %v1524
        %v1529 = vsel %vm970, %v1509, 0
        %v1532 = vsel %vm970, %v1510, 0
        %v1535 = vsel %vm970, %v1511, 0
        %v1538 = vsel %vm970, %v1512, 0
        %v1541 = vsel %vm1023, %v1526, 0
        %1543 = vmatprep.subr.bf16.mxu0 0
        %1544 = vmatpush1.bf16.msra.mxu0 0
        %1545 = vmatprep.subr.bf16.mxu0 0
        %1546 = vmatpush1.bf16.msra.mxu0 0
        %1547 = vmatprep.subr.bf16.mxu0 0
        %1548 = vmatpush1.bf16.msra.mxu0 0
        %1549 = vmatprep.subr.bf16.mxu0 0
        %1550 = vmatpush1.bf16.msra.mxu0 0
        %1551 = vmatprep.subr.bf16.mxu0 0
        %1552 = vmatpush1.bf16.msra.mxu0 0
        %1553 = vmatprep.subr.bf16.mxu0 0
        %1554 = vmatpush1.bf16.msra.mxu0 0
        %1555 = vmatprep.subr.bf16.mxu0 0
        %1556 = vmatpush1.bf16.msra.mxu0 %v1541
        %1557 = vmatprep.subr.bf16.mxu0 0
        %1558 = vmatpush1.bf16.msra.mxu0 %v1525
        %1559 = vmatprep.subr.bf16.mxu0 0
        %1560 = vmatpush2.bf16.msra.mxu0 0
        %1561 = vmatprep.subr.bf16.mxu0 0
        %1562 = vmatpush2.bf16.msra.mxu0 0
        %1563 = vmatprep.subr.bf16.mxu0 0
        %1564 = vmatpush2.bf16.msra.mxu0 0
        %1565 = vmatprep.subr.bf16.mxu0 0
        %1566 = vmatpush2.bf16.msra.mxu0 0
        %1567 = vmatprep.subr.bf16.mxu0 0
        %1568 = vmatpush2.bf16.msra.mxu0 0
        %1569 = vmatprep.subr.bf16.mxu0 0
        %1570 = vmatpush2.bf16.msra.mxu0 0
        %1571 = vmatprep.subr.bf16.mxu0 0
        %1572 = vmatpush2.bf16.msra.mxu0 0
        %1573 = vmatprep.subr.bf16.mxu0 0
        %1574 = vmatpush2.bf16.msra.mxu0 0
        %1575 = vmatprep.mubr.bf16.mxu0 0
        %1576 = vmatmul.mubr.bf16.gmra.mxu0 %v1529
        %v1577 = vpop.f32.mrf.mxu0
        %v1578 = vadd.f32 %v1517, %v1577
        %v1579 = vpop.f32.mrf.mxu0
        %v1580 = vpop.f32.mrf.mxu0
        %v1581 = vadd.f32 %v1517, %v1580
        %v1582 = vpop.f32.mrf.mxu0
        %1583 = vmatprep.mubr.bf16.mxu0 0
        %1584 = vmatmul.mubr.bf16.gmra.mxu0 %v1532
        %v1585 = vpop.f32.mrf.mxu0
        %v1586 = vadd.f32 %v1517, %v1585
        %v1587 = vpop.f32.mrf.mxu0
        %v1588 = vpop.f32.mrf.mxu0
        %v1589 = vadd.f32 %v1517, %v1588
        %v1590 = vpop.f32.mrf.mxu0
        %1591 = vmatprep.mubr.bf16.mxu0 0
        %1592 = vmatmul.mubr.bf16.gmra.mxu0 %v1535
        %v1593 = vpop.f32.mrf.mxu0
        %v1594 = vadd.f32 %v1517, %v1593
        %v1595 = vpop.f32.mrf.mxu0
        %v1596 = vpop.f32.mrf.mxu0
        %v1597 = vadd.f32 %v1517, %v1596
        %v1598 = vpop.f32.mrf.mxu0
        %1599 = vmatprep.mubr.bf16.mxu0 0
        %1600 = vmatmul.mubr.bf16.gmra.mxu0 %v1538
        %v1601 = vpop.f32.mrf.mxu0
        %v1602 = vadd.f32 %v1517, %v1601
        %v1603 = vpop.f32.mrf.mxu0
        %v1604 = vpop.f32.mrf.mxu0
        %v1605 = vadd.f32 %v1517, %v1604
        %v1606 = vpop.f32.mrf.mxu0
        %1607 = vdwg.mxu0
        %v1608 = vmax.f32 %v1578, 0.0
        %v1609 = vmax.f32 %v1581, 0.0
        %v1610 = vmax.f32 %v1586, 0.0
        %v1611 = vmax.f32 %v1589, 0.0
        %v1612 = vmax.f32 %v1594, 0.0
        %v1613 = vmax.f32 %v1597, 0.0
        %v1614 = vmax.f32 %v1602, 0.0
        %v1615 = vmax.f32 %v1605, 0.0
        %1624 = vrot.lane.b32.xlu0 %v1608, 16
        %v1625 = vpop.permute.xlu0 %1624
        %1626 = vrot.lane.b32.xlu0 %v1609, 16
        %v1627 = vpop.permute.xlu0 %1626
        %1628 = vrot.lane.b32.xlu0 %v1610, 16
        %v1629 = vpop.permute.xlu0 %1628
        %1630 = vrot.lane.b32.xlu0 %v1611, 16
        %v1631 = vpop.permute.xlu0 %1630
        %1632 = vrot.lane.b32.xlu0 %v1612, 16
        %v1633 = vpop.permute.xlu0 %1632
        %1634 = vrot.lane.b32.xlu0 %v1613, 16
        %v1635 = vpop.permute.xlu0 %1634
        %1636 = vrot.lane.b32.xlu0 %v1614, 16
        %v1637 = vpop.permute.xlu0 %1636
        %1638 = vrot.lane.b32.xlu0 %v1615, 16
        %v1639 = vpop.permute.xlu0 %1638
        %vm1648 = vcmask 138368
        %1649 = vst.msk [vmem:[%s1250 + $0x2] sm:$0xff] %vm1648, %v1625
        %1650 = vst.msk [vmem:[%s1250 + $0x12] sm:$0xff] %vm1648, %v1627
        %1651 = vst.msk [vmem:[%s1250 + $0x22] sm:$0xff] %vm1648, %v1629
        %1652 = vst.msk [vmem:[%s1250 + $0x32] sm:$0xff] %vm1648, %v1631
        %1653 = vst.msk [vmem:[%s1250 + $0x42] sm:$0xff] %vm1648, %v1633
        %1654 = vst.msk [vmem:[%s1250 + $0x52] sm:$0xff] %vm1648, %v1635
        %1655 = vst.msk [vmem:[%s1250 + $0x62] sm:$0xff] %vm1648, %v1637
        %1656 = vst.msk [vmem:[%s1250 + $0x72] sm:$0xff] %vm1648, %v1639
        %v1657 = vld [vmem:[%s1250] sm:$0xff]
        %v1658 = vld [vmem:[%s1250 + $0x10] sm:$0xff]
        %v1659 = vld [vmem:[%s1250 + $0x20] sm:$0xff]
        %v1660 = vld [vmem:[%s1250 + $0x30] sm:$0xff]
        %v1661 = vld [vmem:[%s1250 + $0x40] sm:$0xff]
        %v1662 = vld [vmem:[%s1250 + $0x50] sm:$0xff]
        %v1663 = vld [vmem:[%s1250 + $0x60] sm:$0xff]
        %v1664 = vld [vmem:[%s1250 + $0x70] sm:$0xff]
        %v1665 = vld [vmem:[%s1250 + $0x1] sm:$0xff]
        %v1666 = vld [vmem:[%s1250 + $0x11] sm:$0xff]
        %v1667 = vld [vmem:[%s1250 + $0x21] sm:$0xff]
        %v1668 = vld [vmem:[%s1250 + $0x31] sm:$0xff]
        %v1669 = vld [vmem:[%s1250 + $0x41] sm:$0xff]
        %v1670 = vld [vmem:[%s1250 + $0x51] sm:$0xff]
        %v1671 = vld [vmem:[%s1250 + $0x61] sm:$0xff]
        %v1672 = vld [vmem:[%s1250 + $0x71] sm:$0xff]
        %v1673 = vld [vmem:[%s1250 + $0x2] sm:$0xff]
        %v1674 = vld [vmem:[%s1250 + $0x12] sm:$0xff]
        %v1675 = vld [vmem:[%s1250 + $0x22] sm:$0xff]
        %v1676 = vld [vmem:[%s1250 + $0x32] sm:$0xff]
        %v1677 = vld [vmem:[%s1250 + $0x42] sm:$0xff]
        %v1678 = vld [vmem:[%s1250 + $0x52] sm:$0xff]
        %v1679 = vld [vmem:[%s1250 + $0x62] sm:$0xff]
        %v1680 = vld [vmem:[%s1250 + $0x72] sm:$0xff]
        %v1681 = vld [vmem:[%s1250 + $0x3] sm:$0xff]
        %v1682 = vld [vmem:[%s1250 + $0x13] sm:$0xff]
        %v1683 = vld [vmem:[%s1250 + $0x23] sm:$0xff]
        %v1684 = vld [vmem:[%s1250 + $0x33] sm:$0xff]
        %v1685 = vld [vmem:[%s1250 + $0x43] sm:$0xff]
        %v1686 = vld [vmem:[%s1250 + $0x53] sm:$0xff]
        %v1687 = vld [vmem:[%s1250 + $0x63] sm:$0xff]
        %v1688 = vld [vmem:[%s1250 + $0x73] sm:$0xff]
        %v1689 = vld [vmem:[%s1250 + $0x4] sm:$0xff]
        %v1690 = vld [vmem:[%s1250 + $0x14] sm:$0xff]
        %v1691 = vld [vmem:[%s1250 + $0x24] sm:$0xff]
        %v1692 = vld [vmem:[%s1250 + $0x34] sm:$0xff]
        %v1693 = vld [vmem:[%s1250 + $0x44] sm:$0xff]
        %v1694 = vld [vmem:[%s1250 + $0x54] sm:$0xff]
        %v1695 = vld [vmem:[%s1250 + $0x64] sm:$0xff]
        %v1696 = vld [vmem:[%s1250 + $0x74] sm:$0xff]
        %1705 = vrot.lane.b32.xlu0 %v1657, 112
        %v1706 = vpop.permute.xlu0 %1705
        %1707 = vrot.lane.b32.xlu0 %v1658, 112
        %v1708 = vpop.permute.xlu0 %1707
        %1709 = vrot.lane.b32.xlu0 %v1659, 112
        %v1710 = vpop.permute.xlu0 %1709
        %1711 = vrot.lane.b32.xlu0 %v1660, 112
        %v1712 = vpop.permute.xlu0 %1711
        %1713 = vrot.lane.b32.xlu0 %v1661, 112
        %v1714 = vpop.permute.xlu0 %1713
        %1715 = vrot.lane.b32.xlu0 %v1662, 112
        %v1716 = vpop.permute.xlu0 %1715
        %1717 = vrot.lane.b32.xlu0 %v1663, 112
        %v1718 = vpop.permute.xlu0 %1717
        %1719 = vrot.lane.b32.xlu0 %v1664, 112
        %v1720 = vpop.permute.xlu0 %1719
        %1737 = vrot.lane.b32.xlu0 %v1665, 113
        %v1738 = vpop.permute.xlu0 %1737
        %1739 = vrot.lane.b32.xlu0 %v1666, 113
        %v1740 = vpop.permute.xlu0 %1739
        %1741 = vrot.lane.b32.xlu0 %v1667, 113
        %v1742 = vpop.permute.xlu0 %1741
        %1743 = vrot.lane.b32.xlu0 %v1668, 113
        %v1744 = vpop.permute.xlu0 %1743
        %1745 = vrot.lane.b32.xlu0 %v1669, 113
        %v1746 = vpop.permute.xlu0 %1745
        %1747 = vrot.lane.b32.xlu0 %v1670, 113
        %v1748 = vpop.permute.xlu0 %1747
        %1749 = vrot.lane.b32.xlu0 %v1671, 113
        %v1750 = vpop.permute.xlu0 %1749
        %1751 = vrot.lane.b32.xlu0 %v1672, 113
        %v1752 = vpop.permute.xlu0 %1751
        %1769 = vrot.lane.b32.xlu0 %v1673, 114
        %v1770 = vpop.permute.xlu0 %1769
        %1771 = vrot.lane.b32.xlu0 %v1674, 114
        %v1772 = vpop.permute.xlu0 %1771
        %1773 = vrot.lane.b32.xlu0 %v1675, 114
        %v1774 = vpop.permute.xlu0 %1773
        %1775 = vrot.lane.b32.xlu0 %v1676, 114
        %v1776 = vpop.permute.xlu0 %1775
        %1777 = vrot.lane.b32.xlu0 %v1677, 114
        %v1778 = vpop.permute.xlu0 %1777
        %1779 = vrot.lane.b32.xlu0 %v1678, 114
        %v1780 = vpop.permute.xlu0 %1779
        %1781 = vrot.lane.b32.xlu0 %v1679, 114
        %v1782 = vpop.permute.xlu0 %1781
        %1783 = vrot.lane.b32.xlu0 %v1680, 114
        %v1784 = vpop.permute.xlu0 %1783
        %1801 = vrot.lane.b32.xlu0 %v1681, 115
        %v1802 = vpop.permute.xlu0 %1801
        %1803 = vrot.lane.b32.xlu0 %v1682, 115
        %v1804 = vpop.permute.xlu0 %1803
        %1805 = vrot.lane.b32.xlu0 %v1683, 115
        %v1806 = vpop.permute.xlu0 %1805
        %1807 = vrot.lane.b32.xlu0 %v1684, 115
        %v1808 = vpop.permute.xlu0 %1807
        %1809 = vrot.lane.b32.xlu0 %v1685, 115
        %v1810 = vpop.permute.xlu0 %1809
        %1811 = vrot.lane.b32.xlu0 %v1686, 115
        %v1812 = vpop.permute.xlu0 %1811
        %1813 = vrot.lane.b32.xlu0 %v1687, 115
        %v1814 = vpop.permute.xlu0 %1813
        %1815 = vrot.lane.b32.xlu0 %v1688, 115
        %v1816 = vpop.permute.xlu0 %1815
        %1833 = vrot.lane.b32.xlu0 %v1689, 116
        %v1834 = vpop.permute.xlu0 %1833
        %1835 = vrot.lane.b32.xlu0 %v1690, 116
        %v1836 = vpop.permute.xlu0 %1835
        %1837 = vrot.lane.b32.xlu0 %v1691, 116
        %v1838 = vpop.permute.xlu0 %1837
        %1839 = vrot.lane.b32.xlu0 %v1692, 116
        %v1840 = vpop.permute.xlu0 %1839
        %1841 = vrot.lane.b32.xlu0 %v1693, 116
        %v1842 = vpop.permute.xlu0 %1841
        %1843 = vrot.lane.b32.xlu0 %v1694, 116
        %v1844 = vpop.permute.xlu0 %1843
        %1845 = vrot.lane.b32.xlu0 %v1695, 116
        %v1846 = vpop.permute.xlu0 %1845
        %1847 = vrot.lane.b32.xlu0 %v1696, 116
        %v1848 = vpop.permute.xlu0 %1847
        %v1857 = vsel %vm1110, %v1706, %v1738
        %v1858 = vsel %vm1110, %v1708, %v1740
        %v1859 = vsel %vm1110, %v1710, %v1742
        %v1860 = vsel %vm1110, %v1712, %v1744
        %v1861 = vsel %vm1110, %v1714, %v1746
        %v1862 = vsel %vm1110, %v1716, %v1748
        %v1863 = vsel %vm1110, %v1718, %v1750
        %v1864 = vsel %vm1110, %v1720, %v1752
        %vm1865 = vcmask 15360
        %v1866 = vsel %vm1865, %v1857, %v1770
        %v1867 = vsel %vm1865, %v1858, %v1772
        %v1868 = vsel %vm1865, %v1859, %v1774
        %v1869 = vsel %vm1865, %v1860, %v1776
        %v1870 = vsel %vm1865, %v1861, %v1778
        %v1871 = vsel %vm1865, %v1862, %v1780
        %v1872 = vsel %vm1865, %v1863, %v1782
        %v1873 = vsel %vm1865, %v1864, %v1784
        %vm1874 = vcmask 23552
        %v1875 = vsel %vm1874, %v1866, %v1802
        %v1876 = vsel %vm1874, %v1867, %v1804
        %v1877 = vsel %vm1874, %v1868, %v1806
        %v1878 = vsel %vm1874, %v1869, %v1808
        %v1879 = vsel %vm1874, %v1870, %v1810
        %v1880 = vsel %vm1874, %v1871, %v1812
        %v1881 = vsel %vm1874, %v1872, %v1814
        %v1882 = vsel %vm1874, %v1873, %v1816
        %v1883 = vsel %vm1010, %v1875, %v1834
        %v1884 = vsel %vm1010, %v1876, %v1836
        %v1885 = vsel %vm1010, %v1877, %v1838
        %v1886 = vsel %vm1010, %v1878, %v1840
        %v1887 = vsel %vm1010, %v1879, %v1842
        %v1888 = vsel %vm1010, %v1880, %v1844
        %v1889 = vsel %vm1010, %v1881, %v1846
        %v1890 = vsel %vm1010, %v1882, %v1848
        %v1891 = vpack.c.bf16 %v1884, %v1883
        %v1892 = vpack.c.bf16 %v1886, %v1885
        %v1893 = vpack.c.bf16 %v1888, %v1887
        %v1894 = vpack.c.bf16 %v1890, %v1889
        %v1896 = vlaneseq
        %v1897 = vshrl.u32 %v1896, 7
        %v1898 = vsub.s32 0, %v1897
        %v1899 = vrot.slane %v1264, %v1898
        %vm1901 = vcmask 39936
        %v1903 = vsel %vm1901, %v1891, 0
        %v1906 = vsel %vm1901, %v1892, 0
        %v1909 = vsel %vm1901, %v1893, 0
        %v1912 = vsel %vm1901, %v1894, 0
        %vm1914 = vcmask 1042432
        %v1915 = vsel %vm1023, 4294967295, 65535
        %v1916 = vsel %vm1914, %v1915, 0
        %v1918 = vand.u32 %v1263, %v1916
        %1920 = vmatprep.subr.bf16.mxu0 0
        %1921 = vmatpush1.bf16.msra.mxu0 0
        %1922 = vmatprep.subr.bf16.mxu0 0
        %1923 = vmatpush1.bf16.msra.mxu0 0
        %1924 = vmatprep.subr.bf16.mxu0 0
        %1925 = vmatpush1.bf16.msra.mxu0 0
        %1926 = vmatprep.subr.bf16.mxu0 0
        %1927 = vmatpush1.bf16.msra.mxu0 0
        %1928 = vmatprep.subr.bf16.mxu0 0
        %1929 = vmatpush1.bf16.msra.mxu0 0
        %1930 = vmatprep.subr.bf16.mxu0 0
        %1931 = vmatpush1.bf16.msra.mxu0 0
        %1932 = vmatprep.subr.bf16.mxu0 0
        %1933 = vmatpush1.bf16.msra.mxu0 0
        %1934 = vmatprep.subr.bf16.mxu0 0
        %1935 = vmatpush1.bf16.msra.mxu0 %v1918
        %1936 = vmatprep.subr.bf16.mxu0 0
        %1937 = vmatpush2.bf16.msra.mxu0 0
        %1938 = vmatprep.subr.bf16.mxu0 0
        %1939 = vmatpush2.bf16.msra.mxu0 0
        %1940 = vmatprep.subr.bf16.mxu0 0
        %1941 = vmatpush2.bf16.msra.mxu0 0
        %1942 = vmatprep.subr.bf16.mxu0 0
        %1943 = vmatpush2.bf16.msra.mxu0 0
        %1944 = vmatprep.subr.bf16.mxu0 0
        %1945 = vmatpush2.bf16.msra.mxu0 0
        %1946 = vmatprep.subr.bf16.mxu0 0
        %1947 = vmatpush2.bf16.msra.mxu0 0
        %1948 = vmatprep.subr.bf16.mxu0 0
        %1949 = vmatpush2.bf16.msra.mxu0 0
        %1950 = vmatprep.subr.bf16.mxu0 0
        %1951 = vmatpush2.bf16.msra.mxu0 0
        %1952 = vmatprep.mubr.bf16.mxu0 0
        %1953 = vmatmul.mubr.bf16.gmra.mxu0 %v1903
        %v1954 = vpop.f32.mrf.mxu0
        %v1955 = vadd.f32 %v1899, %v1954
        %v1956 = vpop.f32.mrf.mxu0
        %v1957 = vpop.f32.mrf.mxu0
        %v1958 = vadd.f32 %v1899, %v1957
        %v1959 = vpop.f32.mrf.mxu0
        %1960 = vmatprep.mubr.bf16.mxu0 0
        %1961 = vmatmul.mubr.bf16.gmra.mxu0 %v1906
        %v1962 = vpop.f32.mrf.mxu0
        %v1963 = vadd.f32 %v1899, %v1962
        %v1964 = vpop.f32.mrf.mxu0
        %v1965 = vpop.f32.mrf.mxu0
        %v1966 = vadd.f32 %v1899, %v1965
        %v1967 = vpop.f32.mrf.mxu0
        %1968 = vmatprep.mubr.bf16.mxu0 0
        %1969 = vmatmul.mubr.bf16.gmra.mxu0 %v1909
        %v1970 = vpop.f32.mrf.mxu0
        %v1971 = vadd.f32 %v1899, %v1970
        %v1972 = vpop.f32.mrf.mxu0
        %v1973 = vpop.f32.mrf.mxu0
        %v1974 = vadd.f32 %v1899, %v1973
        %v1975 = vpop.f32.mrf.mxu0
        %1976 = vmatprep.mubr.bf16.mxu0 0
        %1977 = vmatmul.mubr.bf16.gmra.mxu0 %v1912
        %v1978 = vpop.f32.mrf.mxu0
        %v1979 = vadd.f32 %v1899, %v1978
        %v1980 = vpop.f32.mrf.mxu0
        %v1981 = vpop.f32.mrf.mxu0
        %v1982 = vadd.f32 %v1899, %v1981
        %v1983 = vpop.f32.mrf.mxu0
        %1984 = vdwg.mxu0
        %v1985 = vxor.u32 %v1955, 2147483648
        %v1986 = vxor.u32 %v1958, 2147483648
        %v1987 = vxor.u32 %v1963, 2147483648
        %v1988 = vxor.u32 %v1966, 2147483648
        %v1989 = vxor.u32 %v1971, 2147483648
        %v1990 = vxor.u32 %v1974, 2147483648
        %v1991 = vxor.u32 %v1979, 2147483648
        %v1992 = vxor.u32 %v1982, 2147483648
        %v1993 = vmul.f32 %v1985, 1.442695
        %v1994 = vpow.pop %v1993
        %v1995 = vmul.f32 %v1986, 1.442695
        %v1996 = vpow.pop %v1995
        %v1997 = vmul.f32 %v1987, 1.442695
        %v1998 = vpow.pop %v1997
        %v1999 = vmul.f32 %v1988, 1.442695
        %v2000 = vpow.pop %v1999
        %v2001 = vmul.f32 %v1989, 1.442695
        %v2002 = vpow.pop %v2001
        %v2003 = vmul.f32 %v1990, 1.442695
        %v2004 = vpow.pop %v2003
        %v2005 = vmul.f32 %v1991, 1.442695
        %v2006 = vpow.pop %v2005
        %v2007 = vmul.f32 %v1992, 1.442695
        %v2008 = vpow.pop %v2007
        %v2009 = vadd.f32 %v1994, 1.0
        %v2010 = vadd.f32 %v1996, 1.0
        %v2011 = vadd.f32 %v1998, 1.0
        %v2012 = vadd.f32 %v2000, 1.0
        %v2013 = vadd.f32 %v2002, 1.0
        %v2014 = vadd.f32 %v2004, 1.0
        %v2015 = vadd.f32 %v2006, 1.0
        %v2016 = vadd.f32 %v2008, 1.0
        %v2017 = vrcp.pop %v2009
        %v2018 = vmul.f32 1.0, %v2017
        %v2019 = vrcp.pop %v2010
        %v2020 = vmul.f32 1.0, %v2019
        %v2021 = vrcp.pop %v2011
        %v2022 = vmul.f32 1.0, %v2021
        %v2023 = vrcp.pop %v2012
        %v2024 = vmul.f32 1.0, %v2023
        %v2025 = vrcp.pop %v2013
        %v2026 = vmul.f32 1.0, %v2025
        %v2027 = vrcp.pop %v2014
        %v2028 = vmul.f32 1.0, %v2027
        %v2029 = vrcp.pop %v2015
        %v2030 = vmul.f32 1.0, %v2029
        %v2031 = vrcp.pop %v2016
        %v2032 = vmul.f32 1.0, %v2031
        %v2033 = vmul.f32 %v906, %v2018
        %v2034 = vmul.f32 %v907, %v2020
        %v2035 = vmul.f32 %v908, %v2022
        %v2036 = vmul.f32 %v909, %v2024
        %v2037 = vmul.f32 %v910, %v2026
        %v2038 = vmul.f32 %v911, %v2028
        %v2039 = vmul.f32 %v912, %v2030
        %v2040 = vmul.f32 %v913, %v2032
        %2049 = vrot.lane.b32.xlu0 %v2033, 4
        %v2050 = vpop.permute.xlu0 %2049
        %2051 = vrot.lane.b32.xlu0 %v2034, 4
        %v2052 = vpop.permute.xlu0 %2051
        %2053 = vrot.lane.b32.xlu0 %v2035, 4
        %v2054 = vpop.permute.xlu0 %2053
        %2055 = vrot.lane.b32.xlu0 %v2036, 4
        %v2056 = vpop.permute.xlu0 %2055
        %2057 = vrot.lane.b32.xlu0 %v2037, 4
        %v2058 = vpop.permute.xlu0 %2057
        %2059 = vrot.lane.b32.xlu0 %v2038, 4
        %v2060 = vpop.permute.xlu0 %2059
        %2061 = vrot.lane.b32.xlu0 %v2039, 4
        %v2062 = vpop.permute.xlu0 %2061
        %2063 = vrot.lane.b32.xlu0 %v2040, 4
        %v2064 = vpop.permute.xlu0 %2063
        %vm2073 = vcmask 64544
        %2074 = vst.msk [vmem:[%s1250 + $0x2] sm:$0xff] %vm2073, %v2050
        %2075 = vst.msk [vmem:[%s1250 + $0x12] sm:$0xff] %vm2073, %v2052
        %2076 = vst.msk [vmem:[%s1250 + $0x22] sm:$0xff] %vm2073, %v2054
        %2077 = vst.msk [vmem:[%s1250 + $0x32] sm:$0xff] %vm2073, %v2056
        %2078 = vst.msk [vmem:[%s1250 + $0x42] sm:$0xff] %vm2073, %v2058
        %2079 = vst.msk [vmem:[%s1250 + $0x52] sm:$0xff] %vm2073, %v2060
        %2080 = vst.msk [vmem:[%s1250 + $0x62] sm:$0xff] %vm2073, %v2062
        %2081 = vst.msk [vmem:[%s1250 + $0x72] sm:$0xff] %vm2073, %v2064
        %v2082 = vld [vmem:[%s9] sm:$0xf]
        %v2083 = vld [vmem:[%s9 + $0x4] sm:$0xf]
        %v2084 = vld [vmem:[%s9 + $0x8] sm:$0x3]
        %v2085 = vld [vmem:[#allocation5] sm:$0x1]
        %v2086 = vld [vmem:[%s11] sm:$0x7]
        %v2087 = vld [vmem:[%s12] sm:$0x1]
        %2096 = vrot.lane.b32.xlu0 %v938, 16
        %v2097 = vpop.permute.xlu0 %2096
        %2098 = vrot.lane.b32.xlu0 %v939, 16
        %v2099 = vpop.permute.xlu0 %2098
        %2100 = vrot.lane.b32.xlu0 %v940, 16
        %v2101 = vpop.permute.xlu0 %2100
        %2102 = vrot.lane.b32.xlu0 %v941, 16
        %v2103 = vpop.permute.xlu0 %2102
        %2104 = vrot.lane.b32.xlu0 %v942, 16
        %v2105 = vpop.permute.xlu0 %2104
        %2106 = vrot.lane.b32.xlu0 %v943, 16
        %v2107 = vpop.permute.xlu0 %2106
        %2108 = vrot.lane.b32.xlu0 %v944, 16
        %v2109 = vpop.permute.xlu0 %2108
        %2110 = vrot.lane.b32.xlu0 %v945, 16
        %v2111 = vpop.permute.xlu0 %2110
        %2120 = vst.msk [vmem:[%s1250 + $0x2] sm:$0xff] %vm1297, %v2097
        %2121 = vst.msk [vmem:[%s1250 + $0x12] sm:$0xff] %vm1297, %v2099
        %2122 = vst.msk [vmem:[%s1250 + $0x22] sm:$0xff] %vm1297, %v2101
        %2123 = vst.msk [vmem:[%s1250 + $0x32] sm:$0xff] %vm1297, %v2103
        %2124 = vst.msk [vmem:[%s1250 + $0x42] sm:$0xff] %vm1297, %v2105
        %2125 = vst.msk [vmem:[%s1250 + $0x52] sm:$0xff] %vm1297, %v2107
        %2126 = vst.msk [vmem:[%s1250 + $0x62] sm:$0xff] %vm1297, %v2109
        %2127 = vst.msk [vmem:[%s1250 + $0x72] sm:$0xff] %vm1297, %v2111
        %v2128 = vld [vmem:[#allocation2 + $0x2] sm:$0xff]
        %v2129 = vld [vmem:[#allocation2 + $0x12] sm:$0xff]
        %v2130 = vld [vmem:[#allocation2 + $0x22] sm:$0xff]
        %v2131 = vld [vmem:[#allocation2 + $0x32] sm:$0xff]
        %v2132 = vld [vmem:[#allocation2 + $0x42] sm:$0xff]
        %v2133 = vld [vmem:[#allocation2 + $0x52] sm:$0xff]
        %v2134 = vld [vmem:[#allocation2 + $0x62] sm:$0xff]
        %v2135 = vld [vmem:[#allocation2 + $0x72] sm:$0xff]
        %s2136 = scalar_lea.vmem [#allocation2], 16
        %v2137 = vld [vmem:[%s2136 + $0x2] sm:$0xff]
        %v2138 = vld [vmem:[%s2136 + $0x12] sm:$0xff]
        %v2139 = vld [vmem:[%s2136 + $0x22] sm:$0xff]
        %v2140 = vld [vmem:[%s2136 + $0x32] sm:$0xff]
        %v2141 = vld [vmem:[%s2136 + $0x42] sm:$0xff]
        %v2142 = vld [vmem:[%s2136 + $0x52] sm:$0xff]
        %v2143 = vld [vmem:[%s2136 + $0x62] sm:$0xff]
        %v2144 = vld [vmem:[%s2136 + $0x72] sm:$0xff]
        %v2145 = vld [vmem:[%s1250 + $0x2] sm:$0xff]
        %v2146 = vld [vmem:[%s1250 + $0x12] sm:$0xff]
        %v2147 = vld [vmem:[%s1250 + $0x22] sm:$0xff]
        %v2148 = vld [vmem:[%s1250 + $0x32] sm:$0xff]
        %v2149 = vld [vmem:[%s1250 + $0x42] sm:$0xff]
        %v2150 = vld [vmem:[%s1250 + $0x52] sm:$0xff]
        %v2151 = vld [vmem:[%s1250 + $0x62] sm:$0xff]
        %v2152 = vld [vmem:[%s1250 + $0x72] sm:$0xff]
        %s2153 = scalar_lea.vmem [#allocation2], 48
        %v2154 = vld [vmem:[%s2153 + $0x2] sm:$0xff]
        %v2155 = vld [vmem:[%s2153 + $0x12] sm:$0xff]
        %v2156 = vld [vmem:[%s2153 + $0x22] sm:$0xff]
        %v2157 = vld [vmem:[%s2153 + $0x32] sm:$0xff]
        %v2158 = vld [vmem:[%s2153 + $0x42] sm:$0xff]
        %v2159 = vld [vmem:[%s2153 + $0x52] sm:$0xff]
        %v2160 = vld [vmem:[%s2153 + $0x62] sm:$0xff]
        %v2161 = vld [vmem:[%s2153 + $0x72] sm:$0xff]
        %s2162 = scalar_lea.vmem [#allocation2], 64
        %v2163 = vld [vmem:[%s2162 + $0x2] sm:$0xff]
        %v2164 = vld [vmem:[%s2162 + $0x12] sm:$0xff]
        %v2165 = vld [vmem:[%s2162 + $0x22] sm:$0xff]
        %v2166 = vld [vmem:[%s2162 + $0x32] sm:$0xff]
        %v2167 = vld [vmem:[%s2162 + $0x42] sm:$0xff]
        %v2168 = vld [vmem:[%s2162 + $0x52] sm:$0xff]
        %v2169 = vld [vmem:[%s2162 + $0x62] sm:$0xff]
        %v2170 = vld [vmem:[%s2162 + $0x72] sm:$0xff]
        %2179 = vrot.lane.b32.xlu0 %v2128, 112
        %v2180 = vpop.permute.xlu0 %2179
        %2181 = vrot.lane.b32.xlu0 %v2129, 112
        %v2182 = vpop.permute.xlu0 %2181
        %2183 = vrot.lane.b32.xlu0 %v2130, 112
        %v2184 = vpop.permute.xlu0 %2183
        %2185 = vrot.lane.b32.xlu0 %v2131, 112
        %v2186 = vpop.permute.xlu0 %2185
        %2187 = vrot.lane.b32.xlu0 %v2132, 112
        %v2188 = vpop.permute.xlu0 %2187
        %2189 = vrot.lane.b32.xlu0 %v2133, 112
        %v2190 = vpop.permute.xlu0 %2189
        %2191 = vrot.lane.b32.xlu0 %v2134, 112
        %v2192 = vpop.permute.xlu0 %2191
        %2193 = vrot.lane.b32.xlu0 %v2135, 112
        %v2194 = vpop.permute.xlu0 %2193
        %2211 = vrot.lane.b32.xlu0 %v2137, 116
        %v2212 = vpop.permute.xlu0 %2211
        %2213 = vrot.lane.b32.xlu0 %v2138, 116
        %v2214 = vpop.permute.xlu0 %2213
        %2215 = vrot.lane.b32.xlu0 %v2139, 116
        %v2216 = vpop.permute.xlu0 %2215
        %2217 = vrot.lane.b32.xlu0 %v2140, 116
        %v2218 = vpop.permute.xlu0 %2217
        %2219 = vrot.lane.b32.xlu0 %v2141, 116
        %v2220 = vpop.permute.xlu0 %2219
        %2221 = vrot.lane.b32.xlu0 %v2142, 116
        %v2222 = vpop.permute.xlu0 %2221
        %2223 = vrot.lane.b32.xlu0 %v2143, 116
        %v2224 = vpop.permute.xlu0 %2223
        %2225 = vrot.lane.b32.xlu0 %v2144, 116
        %v2226 = vpop.permute.xlu0 %2225
        %2243 = vrot.lane.b32.xlu0 %v2145, 120
        %v2244 = vpop.permute.xlu0 %2243
        %2245 = vrot.lane.b32.xlu0 %v2146, 120
        %v2246 = vpop.permute.xlu0 %2245
        %2247 = vrot.lane.b32.xlu0 %v2147, 120
        %v2248 = vpop.permute.xlu0 %2247
        %2249 = vrot.lane.b32.xlu0 %v2148, 120
        %v2250 = vpop.permute.xlu0 %2249
        %2251 = vrot.lane.b32.xlu0 %v2149, 120
        %v2252 = vpop.permute.xlu0 %2251
        %2253 = vrot.lane.b32.xlu0 %v2150, 120
        %v2254 = vpop.permute.xlu0 %2253
        %2255 = vrot.lane.b32.xlu0 %v2151, 120
        %v2256 = vpop.permute.xlu0 %2255
        %2257 = vrot.lane.b32.xlu0 %v2152, 120
        %v2258 = vpop.permute.xlu0 %2257
        %2275 = vrot.lane.b32.xlu0 %v2154, 124
        %v2276 = vpop.permute.xlu0 %2275
        %2277 = vrot.lane.b32.xlu0 %v2155, 124
        %v2278 = vpop.permute.xlu0 %2277
        %2279 = vrot.lane.b32.xlu0 %v2156, 124
        %v2280 = vpop.permute.xlu0 %2279
        %2281 = vrot.lane.b32.xlu0 %v2157, 124
        %v2282 = vpop.permute.xlu0 %2281
        %2283 = vrot.lane.b32.xlu0 %v2158, 124
        %v2284 = vpop.permute.xlu0 %2283
        %2285 = vrot.lane.b32.xlu0 %v2159, 124
        %v2286 = vpop.permute.xlu0 %2285
        %2287 = vrot.lane.b32.xlu0 %v2160, 124
        %v2288 = vpop.permute.xlu0 %2287
        %2289 = vrot.lane.b32.xlu0 %v2161, 124
        %v2290 = vpop.permute.xlu0 %2289
        %v2299 = vsel %vm1010, %v2180, %v2212
        %v2300 = vsel %vm1010, %v2182, %v2214
        %v2301 = vsel %vm1010, %v2184, %v2216
        %v2302 = vsel %vm1010, %v2186, %v2218
        %v2303 = vsel %vm1010, %v2188, %v2220
        %v2304 = vsel %vm1010, %v2190, %v2222
        %v2305 = vsel %vm1010, %v2192, %v2224
        %v2306 = vsel %vm1010, %v2194, %v2226
        %v2307 = vsel %vm1482, %v2299, %v2244
        %v2308 = vsel %vm1482, %v2300, %v2246
        %v2309 = vsel %vm1482, %v2301, %v2248
        %v2310 = vsel %vm1482, %v2302, %v2250
        %v2311 = vsel %vm1482, %v2303, %v2252
        %v2312 = vsel %vm1482, %v2304, %v2254
        %v2313 = vsel %vm1482, %v2305, %v2256
        %v2314 = vsel %vm1482, %v2306, %v2258
        %v2315 = vsel %vm1491, %v2307, %v2276
        %v2316 = vsel %vm1491, %v2308, %v2278
        %v2317 = vsel %vm1491, %v2309, %v2280
        %v2318 = vsel %vm1491, %v2310, %v2282
        %v2319 = vsel %vm1491, %v2311, %v2284
        %v2320 = vsel %vm1491, %v2312, %v2286
        %v2321 = vsel %vm1491, %v2313, %v2288
        %v2322 = vsel %vm1491, %v2314, %v2290
        %v2323 = vsel %vm1500, %v2315, %v2163
        %v2324 = vsel %vm1500, %v2316, %v2164
        %v2325 = vsel %vm1500, %v2317, %v2165
        %v2326 = vsel %vm1500, %v2318, %v2166
        %v2327 = vsel %vm1500, %v2319, %v2167
        %v2328 = vsel %vm1500, %v2320, %v2168
        %v2329 = vsel %vm1500, %v2321, %v2169
        %v2330 = vsel %vm1500, %v2322, %v2170
        %v2331 = vpack.c.bf16 %v2324, %v2323
        %v2332 = vpack.c.bf16 %v2326, %v2325
        %v2333 = vpack.c.bf16 %v2328, %v2327
        %v2334 = vpack.c.bf16 %v2330, %v2329
        %v2336 = vlaneseq
        %v2337 = vshrl.u32 %v2336, 7
        %v2338 = vsub.s32 0, %v2337
        %v2339 = vrot.slane %v2085, %v2338
        %v2344 = vunpack.c.l.b16 %v2082
        %v2345 = vunpack.c.l.b16 %v2083
        %v2346 = vunpack.c.l.b16 %v2084
        %v2347 = vpack.c.b16 %v2345, %v2344
        %v2348 = vpack.c.b16 %v2346, %v2346
        %v2351 = vsel %vm970, %v2331, 0
        %v2354 = vsel %vm970, %v2332, 0
        %v2357 = vsel %vm970, %v2333, 0
        %v2360 = vsel %vm970, %v2334, 0
        %v2363 = vsel %vm1023, %v2348, 0
        %2365 = vmatprep.subr.bf16.mxu0 0
        %2366 = vmatpush1.bf16.msra.mxu0 0
        %2367 = vmatprep.subr.bf16.mxu0 0
        %2368 = vmatpush1.bf16.msra.mxu0 0
        %2369 = vmatprep.subr.bf16.mxu0 0
        %2370 = vmatpush1.bf16.msra.mxu0 0
        %2371 = vmatprep.subr.bf16.mxu0 0
        %2372 = vmatpush1.bf16.msra.mxu0 0
        %2373 = vmatprep.subr.bf16.mxu0 0
        %2374 = vmatpush1.bf16.msra.mxu0 0
        %2375 = vmatprep.subr.bf16.mxu0 0
        %2376 = vmatpush1.bf16.msra.mxu0 0
        %2377 = vmatprep.subr.bf16.mxu0 0
        %2378 = vmatpush1.bf16.msra.mxu0 %v2363
        %2379 = vmatprep.subr.bf16.mxu0 0
        %2380 = vmatpush1.bf16.msra.mxu0 %v2347
        %2381 = vmatprep.subr.bf16.mxu0 0
        %2382 = vmatpush2.bf16.msra.mxu0 0
        %2383 = vmatprep.subr.bf16.mxu0 0
        %2384 = vmatpush2.bf16.msra.mxu0 0
        %2385 = vmatprep.subr.bf16.mxu0 0
        %2386 = vmatpush2.bf16.msra.mxu0 0
        %2387 = vmatprep.subr.bf16.mxu0 0
        %2388 = vmatpush2.bf16.msra.mxu0 0
        %2389 = vmatprep.subr.bf16.mxu0 0
        %2390 = vmatpush2.bf16.msra.mxu0 0
        %2391 = vmatprep.subr.bf16.mxu0 0
        %2392 = vmatpush2.bf16.msra.mxu0 0
        %2393 = vmatprep.subr.bf16.mxu0 0
        %2394 = vmatpush2.bf16.msra.mxu0 0
        %2395 = vmatprep.subr.bf16.mxu0 0
        %2396 = vmatpush2.bf16.msra.mxu0 0
        %2397 = vmatprep.mubr.bf16.mxu0 0
        %2398 = vmatmul.mubr.bf16.gmra.mxu0 %v2351
        %v2399 = vpop.f32.mrf.mxu0
        %v2400 = vadd.f32 %v2339, %v2399
        %v2401 = vpop.f32.mrf.mxu0
        %v2402 = vpop.f32.mrf.mxu0
        %v2403 = vadd.f32 %v2339, %v2402
        %v2404 = vpop.f32.mrf.mxu0
        %2405 = vmatprep.mubr.bf16.mxu0 0
        %2406 = vmatmul.mubr.bf16.gmra.mxu0 %v2354
        %v2407 = vpop.f32.mrf.mxu0
        %v2408 = vadd.f32 %v2339, %v2407
        %v2409 = vpop.f32.mrf.mxu0
        %v2410 = vpop.f32.mrf.mxu0
        %v2411 = vadd.f32 %v2339, %v2410
        %v2412 = vpop.f32.mrf.mxu0
        %2413 = vmatprep.mubr.bf16.mxu0 0
        %2414 = vmatmul.mubr.bf16.gmra.mxu0 %v2357
        %v2415 = vpop.f32.mrf.mxu0
        %v2416 = vadd.f32 %v2339, %v2415
        %v2417 = vpop.f32.mrf.mxu0
        %v2418 = vpop.f32.mrf.mxu0
        %v2419 = vadd.f32 %v2339, %v2418
        %v2420 = vpop.f32.mrf.mxu0
        %2421 = vmatprep.mubr.bf16.mxu0 0
        %2422 = vmatmul.mubr.bf16.gmra.mxu0 %v2360
        %v2423 = vpop.f32.mrf.mxu0
        %v2424 = vadd.f32 %v2339, %v2423
        %v2425 = vpop.f32.mrf.mxu0
        %v2426 = vpop.f32.mrf.mxu0
        %v2427 = vadd.f32 %v2339, %v2426
        %v2428 = vpop.f32.mrf.mxu0
        %2429 = vdwg.mxu0
        %v2430 = vmax.f32 %v2400, 0.0
        %v2431 = vmax.f32 %v2403, 0.0
        %v2432 = vmax.f32 %v2408, 0.0
        %v2433 = vmax.f32 %v2411, 0.0
        %v2434 = vmax.f32 %v2416, 0.0
        %v2435 = vmax.f32 %v2419, 0.0
        %v2436 = vmax.f32 %v2424, 0.0
        %v2437 = vmax.f32 %v2427, 0.0
        %2446 = vrot.lane.b32.xlu0 %v2430, 16
        %v2447 = vpop.permute.xlu0 %2446
        %2448 = vrot.lane.b32.xlu0 %v2431, 16
        %v2449 = vpop.permute.xlu0 %2448
        %2450 = vrot.lane.b32.xlu0 %v2432, 16
        %v2451 = vpop.permute.xlu0 %2450
        %2452 = vrot.lane.b32.xlu0 %v2433, 16
        %v2453 = vpop.permute.xlu0 %2452
        %2454 = vrot.lane.b32.xlu0 %v2434, 16
        %v2455 = vpop.permute.xlu0 %2454
        %2456 = vrot.lane.b32.xlu0 %v2435, 16
        %v2457 = vpop.permute.xlu0 %2456
        %2458 = vrot.lane.b32.xlu0 %v2436, 16
        %v2459 = vpop.permute.xlu0 %2458
        %2460 = vrot.lane.b32.xlu0 %v2437, 16
        %v2461 = vpop.permute.xlu0 %2460
        %2470 = vst.msk [vmem:[%s1250 + $0x2] sm:$0xff] %vm1648, %v2447
        %2471 = vst.msk [vmem:[%s1250 + $0x12] sm:$0xff] %vm1648, %v2449
        %2472 = vst.msk [vmem:[%s1250 + $0x22] sm:$0xff] %vm1648, %v2451
        %2473 = vst.msk [vmem:[%s1250 + $0x32] sm:$0xff] %vm1648, %v2453
        %2474 = vst.msk [vmem:[%s1250 + $0x42] sm:$0xff] %vm1648, %v2455
        %2475 = vst.msk [vmem:[%s1250 + $0x52] sm:$0xff] %vm1648, %v2457
        %2476 = vst.msk [vmem:[%s1250 + $0x62] sm:$0xff] %vm1648, %v2459
        %2477 = vst.msk [vmem:[%s1250 + $0x72] sm:$0xff] %vm1648, %v2461
        %v2478 = vld [vmem:[#allocation2 + $0x2] sm:$0xff]
        %v2479 = vld [vmem:[#allocation2 + $0x12] sm:$0xff]
        %v2480 = vld [vmem:[#allocation2 + $0x22] sm:$0xff]
        %v2481 = vld [vmem:[#allocation2 + $0x32] sm:$0xff]
        %v2482 = vld [vmem:[#allocation2 + $0x42] sm:$0xff]
        %v2483 = vld [vmem:[#allocation2 + $0x52] sm:$0xff]
        %v2484 = vld [vmem:[#allocation2 + $0x62] sm:$0xff]
        %v2485 = vld [vmem:[#allocation2 + $0x72] sm:$0xff]
        %v2486 = vld [vmem:[%s2136 + $0x2] sm:$0xff]
        %v2487 = vld [vmem:[%s2136 + $0x12] sm:$0xff]
        %v2488 = vld [vmem:[%s2136 + $0x22] sm:$0xff]
        %v2489 = vld [vmem:[%s2136 + $0x32] sm:$0xff]
        %v2490 = vld [vmem:[%s2136 + $0x42] sm:$0xff]
        %v2491 = vld [vmem:[%s2136 + $0x52] sm:$0xff]
        %v2492 = vld [vmem:[%s2136 + $0x62] sm:$0xff]
        %v2493 = vld [vmem:[%s2136 + $0x72] sm:$0xff]
        %v2494 = vld [vmem:[%s1250 + $0x2] sm:$0xff]
        %v2495 = vld [vmem:[%s1250 + $0x12] sm:$0xff]
        %v2496 = vld [vmem:[%s1250 + $0x22] sm:$0xff]
        %v2497 = vld [vmem:[%s1250 + $0x32] sm:$0xff]
        %v2498 = vld [vmem:[%s1250 + $0x42] sm:$0xff]
        %v2499 = vld [vmem:[%s1250 + $0x52] sm:$0xff]
        %v2500 = vld [vmem:[%s1250 + $0x62] sm:$0xff]
        %v2501 = vld [vmem:[%s1250 + $0x72] sm:$0xff]
        %v2502 = vld [vmem:[%s2153 + $0x2] sm:$0xff]
        %v2503 = vld [vmem:[%s2153 + $0x12] sm:$0xff]
        %v2504 = vld [vmem:[%s2153 + $0x22] sm:$0xff]
        %v2505 = vld [vmem:[%s2153 + $0x32] sm:$0xff]
        %v2506 = vld [vmem:[%s2153 + $0x42] sm:$0xff]
        %v2507 = vld [vmem:[%s2153 + $0x52] sm:$0xff]
        %v2508 = vld [vmem:[%s2153 + $0x62] sm:$0xff]
        %v2509 = vld [vmem:[%s2153 + $0x72] sm:$0xff]
        %v2510 = vld [vmem:[%s2162 + $0x2] sm:$0xff]
        %v2511 = vld [vmem:[%s2162 + $0x12] sm:$0xff]
        %v2512 = vld [vmem:[%s2162 + $0x22] sm:$0xff]
        %v2513 = vld [vmem:[%s2162 + $0x32] sm:$0xff]
        %v2514 = vld [vmem:[%s2162 + $0x42] sm:$0xff]
        %v2515 = vld [vmem:[%s2162 + $0x52] sm:$0xff]
        %v2516 = vld [vmem:[%s2162 + $0x62] sm:$0xff]
        %v2517 = vld [vmem:[%s2162 + $0x72] sm:$0xff]
        %2526 = vrot.lane.b32.xlu0 %v2478, 112
        %v2527 = vpop.permute.xlu0 %2526
        %2528 = vrot.lane.b32.xlu0 %v2479, 112
        %v2529 = vpop.permute.xlu0 %2528
        %2530 = vrot.lane.b32.xlu0 %v2480, 112
        %v2531 = vpop.permute.xlu0 %2530
        %2532 = vrot.lane.b32.xlu0 %v2481, 112
        %v2533 = vpop.permute.xlu0 %2532
        %2534 = vrot.lane.b32.xlu0 %v2482, 112
        %v2535 = vpop.permute.xlu0 %2534
        %2536 = vrot.lane.b32.xlu0 %v2483, 112
        %v2537 = vpop.permute.xlu0 %2536
        %2538 = vrot.lane.b32.xlu0 %v2484, 112
        %v2539 = vpop.permute.xlu0 %2538
        %2540 = vrot.lane.b32.xlu0 %v2485, 112
        %v2541 = vpop.permute.xlu0 %2540
        %2558 = vrot.lane.b32.xlu0 %v2486, 113
        %v2559 = vpop.permute.xlu0 %2558
        %2560 = vrot.lane.b32.xlu0 %v2487, 113
        %v2561 = vpop.permute.xlu0 %2560
        %2562 = vrot.lane.b32.xlu0 %v2488, 113
        %v2563 = vpop.permute.xlu0 %2562
        %2564 = vrot.lane.b32.xlu0 %v2489, 113
        %v2565 = vpop.permute.xlu0 %2564
        %2566 = vrot.lane.b32.xlu0 %v2490, 113
        %v2567 = vpop.permute.xlu0 %2566
        %2568 = vrot.lane.b32.xlu0 %v2491, 113
        %v2569 = vpop.permute.xlu0 %2568
        %2570 = vrot.lane.b32.xlu0 %v2492, 113
        %v2571 = vpop.permute.xlu0 %2570
        %2572 = vrot.lane.b32.xlu0 %v2493, 113
        %v2573 = vpop.permute.xlu0 %2572
        %2590 = vrot.lane.b32.xlu0 %v2494, 114
        %v2591 = vpop.permute.xlu0 %2590
        %2592 = vrot.lane.b32.xlu0 %v2495, 114
        %v2593 = vpop.permute.xlu0 %2592
        %2594 = vrot.lane.b32.xlu0 %v2496, 114
        %v2595 = vpop.permute.xlu0 %2594
        %2596 = vrot.lane.b32.xlu0 %v2497, 114
        %v2597 = vpop.permute.xlu0 %2596
        %2598 = vrot.lane.b32.xlu0 %v2498, 114
        %v2599 = vpop.permute.xlu0 %2598
        %2600 = vrot.lane.b32.xlu0 %v2499, 114
        %v2601 = vpop.permute.xlu0 %2600
        %2602 = vrot.lane.b32.xlu0 %v2500, 114
        %v2603 = vpop.permute.xlu0 %2602
        %2604 = vrot.lane.b32.xlu0 %v2501, 114
        %v2605 = vpop.permute.xlu0 %2604
        %2622 = vrot.lane.b32.xlu0 %v2502, 115
        %v2623 = vpop.permute.xlu0 %2622
        %2624 = vrot.lane.b32.xlu0 %v2503, 115
        %v2625 = vpop.permute.xlu0 %2624
        %2626 = vrot.lane.b32.xlu0 %v2504, 115
        %v2627 = vpop.permute.xlu0 %2626
        %2628 = vrot.lane.b32.xlu0 %v2505, 115
        %v2629 = vpop.permute.xlu0 %2628
        %2630 = vrot.lane.b32.xlu0 %v2506, 115
        %v2631 = vpop.permute.xlu0 %2630
        %2632 = vrot.lane.b32.xlu0 %v2507, 115
        %v2633 = vpop.permute.xlu0 %2632
        %2634 = vrot.lane.b32.xlu0 %v2508, 115
        %v2635 = vpop.permute.xlu0 %2634
        %2636 = vrot.lane.b32.xlu0 %v2509, 115
        %v2637 = vpop.permute.xlu0 %2636
        %2654 = vrot.lane.b32.xlu0 %v2510, 116
        %v2655 = vpop.permute.xlu0 %2654
        %2656 = vrot.lane.b32.xlu0 %v2511, 116
        %v2657 = vpop.permute.xlu0 %2656
        %2658 = vrot.lane.b32.xlu0 %v2512, 116
        %v2659 = vpop.permute.xlu0 %2658
        %2660 = vrot.lane.b32.xlu0 %v2513, 116
        %v2661 = vpop.permute.xlu0 %2660
        %2662 = vrot.lane.b32.xlu0 %v2514, 116
        %v2663 = vpop.permute.xlu0 %2662
        %2664 = vrot.lane.b32.xlu0 %v2515, 116
        %v2665 = vpop.permute.xlu0 %2664
        %2666 = vrot.lane.b32.xlu0 %v2516, 116
        %v2667 = vpop.permute.xlu0 %2666
        %2668 = vrot.lane.b32.xlu0 %v2517, 116
        %v2669 = vpop.permute.xlu0 %2668
        %v2678 = vsel %vm1110, %v2527, %v2559
        %v2679 = vsel %vm1110, %v2529, %v2561
        %v2680 = vsel %vm1110, %v2531, %v2563
        %v2681 = vsel %vm1110, %v2533, %v2565
        %v2682 = vsel %vm1110, %v2535, %v2567
        %v2683 = vsel %vm1110, %v2537, %v2569
        %v2684 = vsel %vm1110, %v2539, %v2571
        %v2685 = vsel %vm1110, %v2541, %v2573
        %v2686 = vsel %vm1865, %v2678, %v2591
        %v2687 = vsel %vm1865, %v2679, %v2593
        %v2688 = vsel %vm1865, %v2680, %v2595
        %v2689 = vsel %vm1865, %v2681, %v2597
        %v2690 = vsel %vm1865, %v2682, %v2599
        %v2691 = vsel %vm1865, %v2683, %v2601
        %v2692 = vsel %vm1865, %v2684, %v2603
        %v2693 = vsel %vm1865, %v2685, %v2605
        %v2694 = vsel %vm1874, %v2686, %v2623
        %v2695 = vsel %vm1874, %v2687, %v2625
        %v2696 = vsel %vm1874, %v2688, %v2627
        %v2697 = vsel %vm1874, %v2689, %v2629
        %v2698 = vsel %vm1874, %v2690, %v2631
        %v2699 = vsel %vm1874, %v2691, %v2633
        %v2700 = vsel %vm1874, %v2692, %v2635
        %v2701 = vsel %vm1874, %v2693, %v2637
        %v2702 = vsel %vm1010, %v2694, %v2655
        %v2703 = vsel %vm1010, %v2695, %v2657
        %v2704 = vsel %vm1010, %v2696, %v2659
        %v2705 = vsel %vm1010, %v2697, %v2661
        %v2706 = vsel %vm1010, %v2698, %v2663
        %v2707 = vsel %vm1010, %v2699, %v2665
        %v2708 = vsel %vm1010, %v2700, %v2667
        %v2709 = vsel %vm1010, %v2701, %v2669
        %v2710 = vpack.c.bf16 %v2703, %v2702
        %v2711 = vpack.c.bf16 %v2705, %v2704
        %v2712 = vpack.c.bf16 %v2707, %v2706
        %v2713 = vpack.c.bf16 %v2709, %v2708
        %v2715 = vlaneseq
        %v2716 = vshrl.u32 %v2715, 7
        %v2717 = vsub.s32 0, %v2716
        %v2718 = vrot.slane %v2087, %v2717
        %v2721 = vsel %vm1901, %v2710, 0
        %v2724 = vsel %vm1901, %v2711, 0
        %v2727 = vsel %vm1901, %v2712, 0
        %v2730 = vsel %vm1901, %v2713, 0
        %v2733 = vand.u32 %v2086, %v1916
        %2735 = vmatprep.subr.bf16.mxu0 0
        %2736 = vmatpush1.bf16.msra.mxu0 0
        %2737 = vmatprep.subr.bf16.mxu0 0
        %2738 = vmatpush1.bf16.msra.mxu0 0
        %2739 = vmatprep.subr.bf16.mxu0 0
        %2740 = vmatpush1.bf16.msra.mxu0 0
        %2741 = vmatprep.subr.bf16.mxu0 0
        %2742 = vmatpush1.bf16.msra.mxu0 0
        %2743 = vmatprep.subr.bf16.mxu0 0
        %2744 = vmatpush1.bf16.msra.mxu0 0
        %2745 = vmatprep.subr.bf16.mxu0 0
        %2746 = vmatpush1.bf16.msra.mxu0 0
        %2747 = vmatprep.subr.bf16.mxu0 0
        %2748 = vmatpush1.bf16.msra.mxu0 0
        %2749 = vmatprep.subr.bf16.mxu0 0
        %2750 = vmatpush1.bf16.msra.mxu0 %v2733
        %2751 = vmatprep.subr.bf16.mxu0 0
        %2752 = vmatpush2.bf16.msra.mxu0 0
        %2753 = vmatprep.subr.bf16.mxu0 0
        %2754 = vmatpush2.bf16.msra.mxu0 0
        %2755 = vmatprep.subr.bf16.mxu0 0
        %2756 = vmatpush2.bf16.msra.mxu0 0
        %2757 = vmatprep.subr.bf16.mxu0 0
        %2758 = vmatpush2.bf16.msra.mxu0 0
        %2759 = vmatprep.subr.bf16.mxu0 0
        %2760 = vmatpush2.bf16.msra.mxu0 0
        %2761 = vmatprep.subr.bf16.mxu0 0
        %2762 = vmatpush2.bf16.msra.mxu0 0
        %2763 = vmatprep.subr.bf16.mxu0 0
        %2764 = vmatpush2.bf16.msra.mxu0 0
        %2765 = vmatprep.subr.bf16.mxu0 0
        %2766 = vmatpush2.bf16.msra.mxu0 0
        %2767 = vmatprep.mubr.bf16.mxu0 0
        %2768 = vmatmul.mubr.bf16.gmra.mxu0 %v2721
        %v2769 = vpop.f32.mrf.mxu0
        %v2770 = vadd.f32 %v2718, %v2769
        %v2771 = vpop.f32.mrf.mxu0
        %v2772 = vpop.f32.mrf.mxu0
        %v2773 = vadd.f32 %v2718, %v2772
        %v2774 = vpop.f32.mrf.mxu0
        %2775 = vmatprep.mubr.bf16.mxu0 0
        %2776 = vmatmul.mubr.bf16.gmra.mxu0 %v2724
        %v2777 = vpop.f32.mrf.mxu0
        %v2778 = vadd.f32 %v2718, %v2777
        %v2779 = vpop.f32.mrf.mxu0
        %v2780 = vpop.f32.mrf.mxu0
        %v2781 = vadd.f32 %v2718, %v2780
        %v2782 = vpop.f32.mrf.mxu0
        %2783 = vmatprep.mubr.bf16.mxu0 0
        %2784 = vmatmul.mubr.bf16.gmra.mxu0 %v2727
        %v2785 = vpop.f32.mrf.mxu0
        %v2786 = vadd.f32 %v2718, %v2785
        %v2787 = vpop.f32.mrf.mxu0
        %v2788 = vpop.f32.mrf.mxu0
        %v2789 = vadd.f32 %v2718, %v2788
        %v2790 = vpop.f32.mrf.mxu0
        %2791 = vmatprep.mubr.bf16.mxu0 0
        %2792 = vmatmul.mubr.bf16.gmra.mxu0 %v2730
        %v2793 = vpop.f32.mrf.mxu0
        %v2794 = vadd.f32 %v2718, %v2793
        %v2795 = vpop.f32.mrf.mxu0
        %v2796 = vpop.f32.mrf.mxu0
        %v2797 = vadd.f32 %v2718, %v2796
        %v2798 = vpop.f32.mrf.mxu0
        %2799 = vdwg.mxu0
        %v2800 = vxor.u32 %v2770, 2147483648
        %v2801 = vxor.u32 %v2773, 2147483648
        %v2802 = vxor.u32 %v2778, 2147483648
        %v2803 = vxor.u32 %v2781, 2147483648
        %v2804 = vxor.u32 %v2786, 2147483648
        %v2805 = vxor.u32 %v2789, 2147483648
        %v2806 = vxor.u32 %v2794, 2147483648
        %v2807 = vxor.u32 %v2797, 2147483648
        %v2808 = vmul.f32 %v2800, 1.442695
        %v2809 = vpow.pop %v2808
        %v2810 = vmul.f32 %v2801, 1.442695
        %v2811 = vpow.pop %v2810
        %v2812 = vmul.f32 %v2802, 1.442695
        %v2813 = vpow.pop %v2812
        %v2814 = vmul.f32 %v2803, 1.442695
        %v2815 = vpow.pop %v2814
        %v2816 = vmul.f32 %v2804, 1.442695
        %v2817 = vpow.pop %v2816
        %v2818 = vmul.f32 %v2805, 1.442695
        %v2819 = vpow.pop %v2818
        %v2820 = vmul.f32 %v2806, 1.442695
        %v2821 = vpow.pop %v2820
        %v2822 = vmul.f32 %v2807, 1.442695
        %v2823 = vpow.pop %v2822
        %v2824 = vadd.f32 %v2809, 1.0
        %v2825 = vadd.f32 %v2811, 1.0
        %v2826 = vadd.f32 %v2813, 1.0
        %v2827 = vadd.f32 %v2815, 1.0
        %v2828 = vadd.f32 %v2817, 1.0
        %v2829 = vadd.f32 %v2819, 1.0
        %v2830 = vadd.f32 %v2821, 1.0
        %v2831 = vadd.f32 %v2823, 1.0
        %v2832 = vrcp.pop %v2824
        %v2833 = vmul.f32 1.0, %v2832
        %v2834 = vrcp.pop %v2825
        %v2835 = vmul.f32 1.0, %v2834
        %v2836 = vrcp.pop %v2826
        %v2837 = vmul.f32 1.0, %v2836
        %v2838 = vrcp.pop %v2827
        %v2839 = vmul.f32 1.0, %v2838
        %v2840 = vrcp.pop %v2828
        %v2841 = vmul.f32 1.0, %v2840
        %v2842 = vrcp.pop %v2829
        %v2843 = vmul.f32 1.0, %v2842
        %v2844 = vrcp.pop %v2830
        %v2845 = vmul.f32 1.0, %v2844
        %v2846 = vrcp.pop %v2831
        %v2847 = vmul.f32 1.0, %v2846
        %v2848 = vmul.f32 %v938, %v2833
        %v2849 = vmul.f32 %v939, %v2835
        %v2850 = vmul.f32 %v940, %v2837
        %v2851 = vmul.f32 %v941, %v2839
        %v2852 = vmul.f32 %v942, %v2841
        %v2853 = vmul.f32 %v943, %v2843
        %v2854 = vmul.f32 %v944, %v2845
        %v2855 = vmul.f32 %v945, %v2847
        %2864 = vrot.lane.b32.xlu0 %v2848, 8
        %v2865 = vpop.permute.xlu0 %2864
        %2866 = vrot.lane.b32.xlu0 %v2849, 8
        %v2867 = vpop.permute.xlu0 %2866
        %2868 = vrot.lane.b32.xlu0 %v2850, 8
        %v2869 = vpop.permute.xlu0 %2868
        %2870 = vrot.lane.b32.xlu0 %v2851, 8
        %v2871 = vpop.permute.xlu0 %2870
        %2872 = vrot.lane.b32.xlu0 %v2852, 8
        %v2873 = vpop.permute.xlu0 %2872
        %2874 = vrot.lane.b32.xlu0 %v2853, 8
        %v2875 = vpop.permute.xlu0 %2874
        %2876 = vrot.lane.b32.xlu0 %v2854, 8
        %v2877 = vpop.permute.xlu0 %2876
        %2878 = vrot.lane.b32.xlu0 %v2855, 8
        %v2879 = vpop.permute.xlu0 %2878
        %vm2888 = vcmask 97344
        %2889 = vst.msk [vmem:[%s1250 + $0x2] sm:$0xff] %vm2888, %v2865
        %2890 = vst.msk [vmem:[%s1250 + $0x12] sm:$0xff] %vm2888, %v2867
        %2891 = vst.msk [vmem:[%s1250 + $0x22] sm:$0xff] %vm2888, %v2869
        %2892 = vst.msk [vmem:[%s1250 + $0x32] sm:$0xff] %vm2888, %v2871
        %2893 = vst.msk [vmem:[%s1250 + $0x42] sm:$0xff] %vm2888, %v2873
        %2894 = vst.msk [vmem:[%s1250 + $0x52] sm:$0xff] %vm2888, %v2875
        %2895 = vst.msk [vmem:[%s1250 + $0x62] sm:$0xff] %vm2888, %v2877
        %2896 = vst.msk [vmem:[%s1250 + $0x72] sm:$0xff] %vm2888, %v2879
        %v2897 = vld [vmem:[%s13] sm:$0xf]
        %v2898 = vld [vmem:[%s13 + $0x4] sm:$0xf]
        %v2899 = vld [vmem:[%s13 + $0x8] sm:$0xf]
        %v2900 = vld [vmem:[%s13 + $0xc] sm:$0xf]
        %v2901 = vld [vmem:[%s13 + $0x10] sm:$0x3]
        %v2902 = vld [vmem:[#allocation6] sm:$0x1]
        %v2903 = vld [vmem:[%s15] sm:$0xf]
        %v2904 = vld [vmem:[%s15 + $0x4] sm:$0x1]
        %v2905 = vld [vmem:[%s16] sm:$0x1]
        %2914 = vrot.lane.b32.xlu0 %v962, 16
        %v2915 = vpop.permute.xlu0 %2914
        %2916 = vrot.lane.b32.xlu0 %v963, 16
        %v2917 = vpop.permute.xlu0 %2916
        %2918 = vrot.lane.b32.xlu0 %v964, 16
        %v2919 = vpop.permute.xlu0 %2918
        %2920 = vrot.lane.b32.xlu0 %v965, 16
        %v2921 = vpop.permute.xlu0 %2920
        %2922 = vrot.lane.b32.xlu0 %v966, 16
        %v2923 = vpop.permute.xlu0 %2922
        %2924 = vrot.lane.b32.xlu0 %v967, 16
        %v2925 = vpop.permute.xlu0 %2924
        %2926 = vrot.lane.b32.xlu0 %v968, 16
        %v2927 = vpop.permute.xlu0 %2926
        %2928 = vrot.lane.b32.xlu0 %v969, 16
        %v2929 = vpop.permute.xlu0 %2928
        %2938 = vst.msk [vmem:[%s1250 + $0x2] sm:$0xff] %vm1297, %v2915
        %2939 = vst.msk [vmem:[%s1250 + $0x12] sm:$0xff] %vm1297, %v2917
        %2940 = vst.msk [vmem:[%s1250 + $0x22] sm:$0xff] %vm1297, %v2919
        %2941 = vst.msk [vmem:[%s1250 + $0x32] sm:$0xff] %vm1297, %v2921
        %2942 = vst.msk [vmem:[%s1250 + $0x42] sm:$0xff] %vm1297, %v2923
        %2943 = vst.msk [vmem:[%s1250 + $0x52] sm:$0xff] %vm1297, %v2925
        %2944 = vst.msk [vmem:[%s1250 + $0x62] sm:$0xff] %vm1297, %v2927
        %2945 = vst.msk [vmem:[%s1250 + $0x72] sm:$0xff] %vm1297, %v2929
        %v2946 = vld [vmem:[%s2136 + $0x1] sm:$0xff]
        %v2947 = vld [vmem:[%s2136 + $0x11] sm:$0xff]
        %v2948 = vld [vmem:[%s2136 + $0x21] sm:$0xff]
        %v2949 = vld [vmem:[%s2136 + $0x31] sm:$0xff]
        %v2950 = vld [vmem:[%s2136 + $0x41] sm:$0xff]
        %v2951 = vld [vmem:[%s2136 + $0x51] sm:$0xff]
        %v2952 = vld [vmem:[%s2136 + $0x61] sm:$0xff]
        %v2953 = vld [vmem:[%s2136 + $0x71] sm:$0xff]
        %v2954 = vld [vmem:[%s2136 + $0x2] sm:$0xff]
        %v2955 = vld [vmem:[%s2136 + $0x12] sm:$0xff]
        %v2956 = vld [vmem:[%s2136 + $0x22] sm:$0xff]
        %v2957 = vld [vmem:[%s2136 + $0x32] sm:$0xff]
        %v2958 = vld [vmem:[%s2136 + $0x42] sm:$0xff]
        %v2959 = vld [vmem:[%s2136 + $0x52] sm:$0xff]
        %v2960 = vld [vmem:[%s2136 + $0x62] sm:$0xff]
        %v2961 = vld [vmem:[%s2136 + $0x72] sm:$0xff]
        %v2962 = vld [vmem:[%s2136 + $0x3] sm:$0xff]
        %v2963 = vld [vmem:[%s2136 + $0x13] sm:$0xff]
        %v2964 = vld [vmem:[%s2136 + $0x23] sm:$0xff]
        %v2965 = vld [vmem:[%s2136 + $0x33] sm:$0xff]
        %v2966 = vld [vmem:[%s2136 + $0x43] sm:$0xff]
        %v2967 = vld [vmem:[%s2136 + $0x53] sm:$0xff]
        %v2968 = vld [vmem:[%s2136 + $0x63] sm:$0xff]
        %v2969 = vld [vmem:[%s2136 + $0x73] sm:$0xff]
        %v2970 = vld [vmem:[%s1250 + $0x1] sm:$0xff]
        %v2971 = vld [vmem:[%s1250 + $0x11] sm:$0xff]
        %v2972 = vld [vmem:[%s1250 + $0x21] sm:$0xff]
        %v2973 = vld [vmem:[%s1250 + $0x31] sm:$0xff]
        %v2974 = vld [vmem:[%s1250 + $0x41] sm:$0xff]
        %v2975 = vld [vmem:[%s1250 + $0x51] sm:$0xff]
        %v2976 = vld [vmem:[%s1250 + $0x61] sm:$0xff]
        %v2977 = vld [vmem:[%s1250 + $0x71] sm:$0xff]
        %v2978 = vld [vmem:[%s1250 + $0x2] sm:$0xff]
        %v2979 = vld [vmem:[%s1250 + $0x12] sm:$0xff]
        %v2980 = vld [vmem:[%s1250 + $0x22] sm:$0xff]
        %v2981 = vld [vmem:[%s1250 + $0x32] sm:$0xff]
        %v2982 = vld [vmem:[%s1250 + $0x42] sm:$0xff]
        %v2983 = vld [vmem:[%s1250 + $0x52] sm:$0xff]
        %v2984 = vld [vmem:[%s1250 + $0x62] sm:$0xff]
        %v2985 = vld [vmem:[%s1250 + $0x72] sm:$0xff]
        %v2986 = vld [vmem:[%s1250 + $0x3] sm:$0xff]
        %v2987 = vld [vmem:[%s1250 + $0x13] sm:$0xff]
        %v2988 = vld [vmem:[%s1250 + $0x23] sm:$0xff]
        %v2989 = vld [vmem:[%s1250 + $0x33] sm:$0xff]
        %v2990 = vld [vmem:[%s1250 + $0x43] sm:$0xff]
        %v2991 = vld [vmem:[%s1250 + $0x53] sm:$0xff]
        %v2992 = vld [vmem:[%s1250 + $0x63] sm:$0xff]
        %v2993 = vld [vmem:[%s1250 + $0x73] sm:$0xff]
        %v2994 = vld [vmem:[%s2153 + $0x1] sm:$0xff]
        %v2995 = vld [vmem:[%s2153 + $0x11] sm:$0xff]
        %v2996 = vld [vmem:[%s2153 + $0x21] sm:$0xff]
        %v2997 = vld [vmem:[%s2153 + $0x31] sm:$0xff]
        %v2998 = vld [vmem:[%s2153 + $0x41] sm:$0xff]
        %v2999 = vld [vmem:[%s2153 + $0x51] sm:$0xff]
        %v3000 = vld [vmem:[%s2153 + $0x61] sm:$0xff]
        %v3001 = vld [vmem:[%s2153 + $0x71] sm:$0xff]
        %v3002 = vld [vmem:[%s2153 + $0x2] sm:$0xff]
        %v3003 = vld [vmem:[%s2153 + $0x12] sm:$0xff]
        %v3004 = vld [vmem:[%s2153 + $0x22] sm:$0xff]
        %v3005 = vld [vmem:[%s2153 + $0x32] sm:$0xff]
        %v3006 = vld [vmem:[%s2153 + $0x42] sm:$0xff]
        %v3007 = vld [vmem:[%s2153 + $0x52] sm:$0xff]
        %v3008 = vld [vmem:[%s2153 + $0x62] sm:$0xff]
        %v3009 = vld [vmem:[%s2153 + $0x72] sm:$0xff]
        %v3010 = vld [vmem:[%s2153 + $0x3] sm:$0xff]
        %v3011 = vld [vmem:[%s2153 + $0x13] sm:$0xff]
        %v3012 = vld [vmem:[%s2153 + $0x23] sm:$0xff]
        %v3013 = vld [vmem:[%s2153 + $0x33] sm:$0xff]
        %v3014 = vld [vmem:[%s2153 + $0x43] sm:$0xff]
        %v3015 = vld [vmem:[%s2153 + $0x53] sm:$0xff]
        %v3016 = vld [vmem:[%s2153 + $0x63] sm:$0xff]
        %v3017 = vld [vmem:[%s2153 + $0x73] sm:$0xff]
        %3026 = vrot.lane.b32.xlu0 %v2946, 112
        %v3027 = vpop.permute.xlu0 %3026
        %3028 = vrot.lane.b32.xlu0 %v2947, 112
        %v3029 = vpop.permute.xlu0 %3028
        %3030 = vrot.lane.b32.xlu0 %v2948, 112
        %v3031 = vpop.permute.xlu0 %3030
        %3032 = vrot.lane.b32.xlu0 %v2949, 112
        %v3033 = vpop.permute.xlu0 %3032
        %3034 = vrot.lane.b32.xlu0 %v2950, 112
        %v3035 = vpop.permute.xlu0 %3034
        %3036 = vrot.lane.b32.xlu0 %v2951, 112
        %v3037 = vpop.permute.xlu0 %3036
        %3038 = vrot.lane.b32.xlu0 %v2952, 112
        %v3039 = vpop.permute.xlu0 %3038
        %3040 = vrot.lane.b32.xlu0 %v2953, 112
        %v3041 = vpop.permute.xlu0 %3040
        %3058 = vrot.lane.b32.xlu0 %v2954, 116
        %v3059 = vpop.permute.xlu0 %3058
        %3060 = vrot.lane.b32.xlu0 %v2955, 116
        %v3061 = vpop.permute.xlu0 %3060
        %3062 = vrot.lane.b32.xlu0 %v2956, 116
        %v3063 = vpop.permute.xlu0 %3062
        %3064 = vrot.lane.b32.xlu0 %v2957, 116
        %v3065 = vpop.permute.xlu0 %3064
        %3066 = vrot.lane.b32.xlu0 %v2958, 116
        %v3067 = vpop.permute.xlu0 %3066
        %3068 = vrot.lane.b32.xlu0 %v2959, 116
        %v3069 = vpop.permute.xlu0 %3068
        %3070 = vrot.lane.b32.xlu0 %v2960, 116
        %v3071 = vpop.permute.xlu0 %3070
        %3072 = vrot.lane.b32.xlu0 %v2961, 116
        %v3073 = vpop.permute.xlu0 %3072
        %3090 = vrot.lane.b32.xlu0 %v2962, 120
        %v3091 = vpop.permute.xlu0 %3090
        %3092 = vrot.lane.b32.xlu0 %v2963, 120
        %v3093 = vpop.permute.xlu0 %3092
        %3094 = vrot.lane.b32.xlu0 %v2964, 120
        %v3095 = vpop.permute.xlu0 %3094
        %3096 = vrot.lane.b32.xlu0 %v2965, 120
        %v3097 = vpop.permute.xlu0 %3096
        %3098 = vrot.lane.b32.xlu0 %v2966, 120
        %v3099 = vpop.permute.xlu0 %3098
        %3100 = vrot.lane.b32.xlu0 %v2967, 120
        %v3101 = vpop.permute.xlu0 %3100
        %3102 = vrot.lane.b32.xlu0 %v2968, 120
        %v3103 = vpop.permute.xlu0 %3102
        %3104 = vrot.lane.b32.xlu0 %v2969, 120
        %v3105 = vpop.permute.xlu0 %3104
        %3122 = vrot.lane.b32.xlu0 %v2970, 124
        %v3123 = vpop.permute.xlu0 %3122
        %3124 = vrot.lane.b32.xlu0 %v2971, 124
        %v3125 = vpop.permute.xlu0 %3124
        %3126 = vrot.lane.b32.xlu0 %v2972, 124
        %v3127 = vpop.permute.xlu0 %3126
        %3128 = vrot.lane.b32.xlu0 %v2973, 124
        %v3129 = vpop.permute.xlu0 %3128
        %3130 = vrot.lane.b32.xlu0 %v2974, 124
        %v3131 = vpop.permute.xlu0 %3130
        %3132 = vrot.lane.b32.xlu0 %v2975, 124
        %v3133 = vpop.permute.xlu0 %3132
        %3134 = vrot.lane.b32.xlu0 %v2976, 124
        %v3135 = vpop.permute.xlu0 %3134
        %3136 = vrot.lane.b32.xlu0 %v2977, 124
        %v3137 = vpop.permute.xlu0 %3136
        %3154 = vrot.lane.b32.xlu0 %v2986, 4
        %v3155 = vpop.permute.xlu0 %3154
        %3156 = vrot.lane.b32.xlu0 %v2987, 4
        %v3157 = vpop.permute.xlu0 %3156
        %3158 = vrot.lane.b32.xlu0 %v2988, 4
        %v3159 = vpop.permute.xlu0 %3158
        %3160 = vrot.lane.b32.xlu0 %v2989, 4
        %v3161 = vpop.permute.xlu0 %3160
        %3162 = vrot.lane.b32.xlu0 %v2990, 4
        %v3163 = vpop.permute.xlu0 %3162
        %3164 = vrot.lane.b32.xlu0 %v2991, 4
        %v3165 = vpop.permute.xlu0 %3164
        %3166 = vrot.lane.b32.xlu0 %v2992, 4
        %v3167 = vpop.permute.xlu0 %3166
        %3168 = vrot.lane.b32.xlu0 %v2993, 4
        %v3169 = vpop.permute.xlu0 %3168
        %3186 = vrot.lane.b32.xlu0 %v2994, 8
        %v3187 = vpop.permute.xlu0 %3186
        %3188 = vrot.lane.b32.xlu0 %v2995, 8
        %v3189 = vpop.permute.xlu0 %3188
        %3190 = vrot.lane.b32.xlu0 %v2996, 8
        %v3191 = vpop.permute.xlu0 %3190
        %3192 = vrot.lane.b32.xlu0 %v2997, 8
        %v3193 = vpop.permute.xlu0 %3192
        %3194 = vrot.lane.b32.xlu0 %v2998, 8
        %v3195 = vpop.permute.xlu0 %3194
        %3196 = vrot.lane.b32.xlu0 %v2999, 8
        %v3197 = vpop.permute.xlu0 %3196
        %3198 = vrot.lane.b32.xlu0 %v3000, 8
        %v3199 = vpop.permute.xlu0 %3198
        %3200 = vrot.lane.b32.xlu0 %v3001, 8
        %v3201 = vpop.permute.xlu0 %3200
        %3218 = vrot.lane.b32.xlu0 %v3002, 12
        %v3219 = vpop.permute.xlu0 %3218
        %3220 = vrot.lane.b32.xlu0 %v3003, 12
        %v3221 = vpop.permute.xlu0 %3220
        %3222 = vrot.lane.b32.xlu0 %v3004, 12
        %v3223 = vpop.permute.xlu0 %3222
        %3224 = vrot.lane.b32.xlu0 %v3005, 12
        %v3225 = vpop.permute.xlu0 %3224
        %3226 = vrot.lane.b32.xlu0 %v3006, 12
        %v3227 = vpop.permute.xlu0 %3226
        %3228 = vrot.lane.b32.xlu0 %v3007, 12
        %v3229 = vpop.permute.xlu0 %3228
        %3230 = vrot.lane.b32.xlu0 %v3008, 12
        %v3231 = vpop.permute.xlu0 %3230
        %3232 = vrot.lane.b32.xlu0 %v3009, 12
        %v3233 = vpop.permute.xlu0 %3232
        %3250 = vrot.lane.b32.xlu0 %v3010, 16
        %v3251 = vpop.permute.xlu0 %3250
        %3252 = vrot.lane.b32.xlu0 %v3011, 16
        %v3253 = vpop.permute.xlu0 %3252
        %3254 = vrot.lane.b32.xlu0 %v3012, 16
        %v3255 = vpop.permute.xlu0 %3254
        %3256 = vrot.lane.b32.xlu0 %v3013, 16
        %v3257 = vpop.permute.xlu0 %3256
        %3258 = vrot.lane.b32.xlu0 %v3014, 16
        %v3259 = vpop.permute.xlu0 %3258
        %3260 = vrot.lane.b32.xlu0 %v3015, 16
        %v3261 = vpop.permute.xlu0 %3260
        %3262 = vrot.lane.b32.xlu0 %v3016, 16
        %v3263 = vpop.permute.xlu0 %3262
        %3264 = vrot.lane.b32.xlu0 %v3017, 16
        %v3265 = vpop.permute.xlu0 %3264
        %v3274 = vsel %vm1010, %v3027, %v3059
        %v3275 = vsel %vm1010, %v3029, %v3061
        %v3276 = vsel %vm1010, %v3031, %v3063
        %v3277 = vsel %vm1010, %v3033, %v3065
        %v3278 = vsel %vm1010, %v3035, %v3067
        %v3279 = vsel %vm1010, %v3037, %v3069
        %v3280 = vsel %vm1010, %v3039, %v3071
        %v3281 = vsel %vm1010, %v3041, %v3073
        %v3282 = vsel %vm1482, %v3274, %v3091
        %v3283 = vsel %vm1482, %v3275, %v3093
        %v3284 = vsel %vm1482, %v3276, %v3095
        %v3285 = vsel %vm1482, %v3277, %v3097
        %v3286 = vsel %vm1482, %v3278, %v3099
        %v3287 = vsel %vm1482, %v3279, %v3101
        %v3288 = vsel %vm1482, %v3280, %v3103
        %v3289 = vsel %vm1482, %v3281, %v3105
        %v3290 = vsel %vm1491, %v3282, %v3123
        %v3291 = vsel %vm1491, %v3283, %v3125
        %v3292 = vsel %vm1491, %v3284, %v3127
        %v3293 = vsel %vm1491, %v3285, %v3129
        %v3294 = vsel %vm1491, %v3286, %v3131
        %v3295 = vsel %vm1491, %v3287, %v3133
        %v3296 = vsel %vm1491, %v3288, %v3135
        %v3297 = vsel %vm1491, %v3289, %v3137
        %v3298 = vsel %vm1500, %v3290, %v2978
        %v3299 = vsel %vm1500, %v3291, %v2979
        %v3300 = vsel %vm1500, %v3292, %v2980
        %v3301 = vsel %vm1500, %v3293, %v2981
        %v3302 = vsel %vm1500, %v3294, %v2982
        %v3303 = vsel %vm1500, %v3295, %v2983
        %v3304 = vsel %vm1500, %v3296, %v2984
        %v3305 = vsel %vm1500, %v3297, %v2985
        %v3306 = vsel %vm970, %v3298, %v3155
        %v3307 = vsel %vm970, %v3299, %v3157
        %v3308 = vsel %vm970, %v3300, %v3159
        %v3309 = vsel %vm970, %v3301, %v3161
        %v3310 = vsel %vm970, %v3302, %v3163
        %v3311 = vsel %vm970, %v3303, %v3165
        %v3312 = vsel %vm970, %v3304, %v3167
        %v3313 = vsel %vm970, %v3305, %v3169
        %vm3314 = vcmask 195584
        %v3315 = vsel %vm3314, %v3306, %v3187
        %v3316 = vsel %vm3314, %v3307, %v3189
        %v3317 = vsel %vm3314, %v3308, %v3191
        %v3318 = vsel %vm3314, %v3309, %v3193
        %v3319 = vsel %vm3314, %v3310, %v3195
        %v3320 = vsel %vm3314, %v3311, %v3197
        %v3321 = vsel %vm3314, %v3312, %v3199
        %v3322 = vsel %vm3314, %v3313, %v3201
        %vm3323 = vcmask 228352
        %v3324 = vsel %vm3323, %v3315, %v3219
        %v3325 = vsel %vm3323, %v3316, %v3221
        %v3326 = vsel %vm3323, %v3317, %v3223
        %v3327 = vsel %vm3323, %v3318, %v3225
        %v3328 = vsel %vm3323, %v3319, %v3227
        %v3329 = vsel %vm3323, %v3320, %v3229
        %v3330 = vsel %vm3323, %v3321, %v3231
        %v3331 = vsel %vm3323, %v3322, %v3233
        %vm3332 = vcmask 261120
        %v3333 = vsel %vm3332, %v3324, %v3251
        %v3334 = vsel %vm3332, %v3325, %v3253
        %v3335 = vsel %vm3332, %v3326, %v3255
        %v3336 = vsel %vm3332, %v3327, %v3257
        %v3337 = vsel %vm3332, %v3328, %v3259
        %v3338 = vsel %vm3332, %v3329, %v3261
        %v3339 = vsel %vm3332, %v3330, %v3263
        %v3340 = vsel %vm3332, %v3331, %v3265
        %v3341 = vpack.c.bf16 %v3334, %v3333
        %v3342 = vpack.c.bf16 %v3336, %v3335
        %v3343 = vpack.c.bf16 %v3338, %v3337
        %v3344 = vpack.c.bf16 %v3340, %v3339
        %v3346 = vlaneseq
        %v3347 = vshrl.u32 %v3346, 7
        %v3348 = vsub.s32 0, %v3347
        %v3349 = vrot.slane %v2902, %v3348
        %v3356 = vunpack.c.l.b16 %v2897
        %v3357 = vunpack.c.l.b16 %v2898
        %v3358 = vunpack.c.l.b16 %v2899
        %v3359 = vunpack.c.l.b16 %v2900
        %v3360 = vunpack.c.l.b16 %v2901
        %v3361 = vpack.c.b16 %v3357, %v3356
        %v3362 = vpack.c.b16 %v3359, %v3358
        %v3363 = vpack.c.b16 %v3360, %v3360
        %vm3366 = vcmask 293888
        %v3368 = vsel %vm3366, %v3341, 0
        %v3371 = vsel %vm3366, %v3342, 0
        %v3374 = vsel %vm3366, %v3343, 0
        %v3377 = vsel %vm3366, %v3344, 0
        %v3380 = vsel %vm1023, %v3363, 0
        %3382 = vmatprep.subr.bf16.mxu0 0
        %3383 = vmatpush1.bf16.msra.mxu0 0
        %3384 = vmatprep.subr.bf16.mxu0 0
        %3385 = vmatpush1.bf16.msra.mxu0 0
        %3386 = vmatprep.subr.bf16.mxu0 0
        %3387 = vmatpush1.bf16.msra.mxu0 0
        %3388 = vmatprep.subr.bf16.mxu0 0
        %3389 = vmatpush1.bf16.msra.mxu0 0
        %3390 = vmatprep.subr.bf16.mxu0 0
        %3391 = vmatpush1.bf16.msra.mxu0 0
        %3392 = vmatprep.subr.bf16.mxu0 0
        %3393 = vmatpush1.bf16.msra.mxu0 %v3380
        %3394 = vmatprep.subr.bf16.mxu0 0
        %3395 = vmatpush1.bf16.msra.mxu0 %v3362
        %3396 = vmatprep.subr.bf16.mxu0 0
        %3397 = vmatpush1.bf16.msra.mxu0 %v3361
        %3398 = vmatprep.subr.bf16.mxu0 0
        %3399 = vmatpush2.bf16.msra.mxu0 0
        %3400 = vmatprep.subr.bf16.mxu0 0
        %3401 = vmatpush2.bf16.msra.mxu0 0
        %3402 = vmatprep.subr.bf16.mxu0 0
        %3403 = vmatpush2.bf16.msra.mxu0 0
        %3404 = vmatprep.subr.bf16.mxu0 0
        %3405 = vmatpush2.bf16.msra.mxu0 0
        %3406 = vmatprep.subr.bf16.mxu0 0
        %3407 = vmatpush2.bf16.msra.mxu0 0
        %3408 = vmatprep.subr.bf16.mxu0 0
        %3409 = vmatpush2.bf16.msra.mxu0 0
        %3410 = vmatprep.subr.bf16.mxu0 0
        %3411 = vmatpush2.bf16.msra.mxu0 0
        %3412 = vmatprep.subr.bf16.mxu0 0
        %3413 = vmatpush2.bf16.msra.mxu0 0
        %3414 = vmatprep.mubr.bf16.mxu0 0
        %3415 = vmatmul.mubr.bf16.gmra.mxu0 %v3368
        %v3416 = vpop.f32.mrf.mxu0
        %v3417 = vadd.f32 %v3349, %v3416
        %v3418 = vpop.f32.mrf.mxu0
        %v3419 = vpop.f32.mrf.mxu0
        %v3420 = vadd.f32 %v3349, %v3419
        %v3421 = vpop.f32.mrf.mxu0
        %3422 = vmatprep.mubr.bf16.mxu0 0
        %3423 = vmatmul.mubr.bf16.gmra.mxu0 %v3371
        %v3424 = vpop.f32.mrf.mxu0
        %v3425 = vadd.f32 %v3349, %v3424
        %v3426 = vpop.f32.mrf.mxu0
        %v3427 = vpop.f32.mrf.mxu0
        %v3428 = vadd.f32 %v3349, %v3427
        %v3429 = vpop.f32.mrf.mxu0
        %3430 = vmatprep.mubr.bf16.mxu0 0
        %3431 = vmatmul.mubr.bf16.gmra.mxu0 %v3374
        %v3432 = vpop.f32.mrf.mxu0
        %v3433 = vadd.f32 %v3349, %v3432
        %v3434 = vpop.f32.mrf.mxu0
        %v3435 = vpop.f32.mrf.mxu0
        %v3436 = vadd.f32 %v3349, %v3435
        %v3437 = vpop.f32.mrf.mxu0
        %3438 = vmatprep.mubr.bf16.mxu0 0
        %3439 = vmatmul.mubr.bf16.gmra.mxu0 %v3377
        %v3440 = vpop.f32.mrf.mxu0
        %v3441 = vadd.f32 %v3349, %v3440
        %v3442 = vpop.f32.mrf.mxu0
        %v3443 = vpop.f32.mrf.mxu0
        %v3444 = vadd.f32 %v3349, %v3443
        %v3445 = vpop.f32.mrf.mxu0
        %3446 = vdwg.mxu0
        %v3447 = vmax.f32 %v3417, 0.0
        %v3448 = vmax.f32 %v3420, 0.0
        %v3449 = vmax.f32 %v3425, 0.0
        %v3450 = vmax.f32 %v3428, 0.0
        %v3451 = vmax.f32 %v3433, 0.0
        %v3452 = vmax.f32 %v3436, 0.0
        %v3453 = vmax.f32 %v3441, 0.0
        %v3454 = vmax.f32 %v3444, 0.0
        %3463 = vrot.lane.b32.xlu0 %v3447, 16
        %v3464 = vpop.permute.xlu0 %3463
        %3465 = vrot.lane.b32.xlu0 %v3448, 16
        %v3466 = vpop.permute.xlu0 %3465
        %3467 = vrot.lane.b32.xlu0 %v3449, 16
        %v3468 = vpop.permute.xlu0 %3467
        %3469 = vrot.lane.b32.xlu0 %v3450, 16
        %v3470 = vpop.permute.xlu0 %3469
        %3471 = vrot.lane.b32.xlu0 %v3451, 16
        %v3472 = vpop.permute.xlu0 %3471
        %3473 = vrot.lane.b32.xlu0 %v3452, 16
        %v3474 = vpop.permute.xlu0 %3473
        %3475 = vrot.lane.b32.xlu0 %v3453, 16
        %v3476 = vpop.permute.xlu0 %3475
        %3477 = vrot.lane.b32.xlu0 %v3454, 16
        %v3478 = vpop.permute.xlu0 %3477
        %3487 = vst.msk [vmem:[%s1250 + $0x2] sm:$0xff] %vm1648, %v3464
        %3488 = vst.msk [vmem:[%s1250 + $0x12] sm:$0xff] %vm1648, %v3466
        %3489 = vst.msk [vmem:[%s1250 + $0x22] sm:$0xff] %vm1648, %v3468
        %3490 = vst.msk [vmem:[%s1250 + $0x32] sm:$0xff] %vm1648, %v3470
        %3491 = vst.msk [vmem:[%s1250 + $0x42] sm:$0xff] %vm1648, %v3472
        %3492 = vst.msk [vmem:[%s1250 + $0x52] sm:$0xff] %vm1648, %v3474
        %3493 = vst.msk [vmem:[%s1250 + $0x62] sm:$0xff] %vm1648, %v3476
        %3494 = vst.msk [vmem:[%s1250 + $0x72] sm:$0xff] %vm1648, %v3478
        %v3495 = vld [vmem:[%s2136 + $0x1] sm:$0xff]
        %v3496 = vld [vmem:[%s2136 + $0x11] sm:$0xff]
        %v3497 = vld [vmem:[%s2136 + $0x21] sm:$0xff]
        %v3498 = vld [vmem:[%s2136 + $0x31] sm:$0xff]
        %v3499 = vld [vmem:[%s2136 + $0x41] sm:$0xff]
        %v3500 = vld [vmem:[%s2136 + $0x51] sm:$0xff]
        %v3501 = vld [vmem:[%s2136 + $0x61] sm:$0xff]
        %v3502 = vld [vmem:[%s2136 + $0x71] sm:$0xff]
        %v3503 = vld [vmem:[%s2136 + $0x2] sm:$0xff]
        %v3504 = vld [vmem:[%s2136 + $0x12] sm:$0xff]
        %v3505 = vld [vmem:[%s2136 + $0x22] sm:$0xff]
        %v3506 = vld [vmem:[%s2136 + $0x32] sm:$0xff]
        %v3507 = vld [vmem:[%s2136 + $0x42] sm:$0xff]
        %v3508 = vld [vmem:[%s2136 + $0x52] sm:$0xff]
        %v3509 = vld [vmem:[%s2136 + $0x62] sm:$0xff]
        %v3510 = vld [vmem:[%s2136 + $0x72] sm:$0xff]
        %v3511 = vld [vmem:[%s2136 + $0x3] sm:$0xff]
        %v3512 = vld [vmem:[%s2136 + $0x13] sm:$0xff]
        %v3513 = vld [vmem:[%s2136 + $0x23] sm:$0xff]
        %v3514 = vld [vmem:[%s2136 + $0x33] sm:$0xff]
        %v3515 = vld [vmem:[%s2136 + $0x43] sm:$0xff]
        %v3516 = vld [vmem:[%s2136 + $0x53] sm:$0xff]
        %v3517 = vld [vmem:[%s2136 + $0x63] sm:$0xff]
        %v3518 = vld [vmem:[%s2136 + $0x73] sm:$0xff]
        %v3519 = vld [vmem:[%s1250 + $0x1] sm:$0xff]
        %v3520 = vld [vmem:[%s1250 + $0x11] sm:$0xff]
        %v3521 = vld [vmem:[%s1250 + $0x21] sm:$0xff]
        %v3522 = vld [vmem:[%s1250 + $0x31] sm:$0xff]
        %v3523 = vld [vmem:[%s1250 + $0x41] sm:$0xff]
        %v3524 = vld [vmem:[%s1250 + $0x51] sm:$0xff]
        %v3525 = vld [vmem:[%s1250 + $0x61] sm:$0xff]
        %v3526 = vld [vmem:[%s1250 + $0x71] sm:$0xff]
        %v3527 = vld [vmem:[%s1250 + $0x2] sm:$0xff]
        %v3528 = vld [vmem:[%s1250 + $0x12] sm:$0xff]
        %v3529 = vld [vmem:[%s1250 + $0x22] sm:$0xff]
        %v3530 = vld [vmem:[%s1250 + $0x32] sm:$0xff]
        %v3531 = vld [vmem:[%s1250 + $0x42] sm:$0xff]
        %v3532 = vld [vmem:[%s1250 + $0x52] sm:$0xff]
        %v3533 = vld [vmem:[%s1250 + $0x62] sm:$0xff]
        %v3534 = vld [vmem:[%s1250 + $0x72] sm:$0xff]
        %v3535 = vld [vmem:[%s1250 + $0x3] sm:$0xff]
        %v3536 = vld [vmem:[%s1250 + $0x13] sm:$0xff]
        %v3537 = vld [vmem:[%s1250 + $0x23] sm:$0xff]
        %v3538 = vld [vmem:[%s1250 + $0x33] sm:$0xff]
        %v3539 = vld [vmem:[%s1250 + $0x43] sm:$0xff]
        %v3540 = vld [vmem:[%s1250 + $0x53] sm:$0xff]
        %v3541 = vld [vmem:[%s1250 + $0x63] sm:$0xff]
        %v3542 = vld [vmem:[%s1250 + $0x73] sm:$0xff]
        %v3543 = vld [vmem:[%s2153 + $0x1] sm:$0xff]
        %v3544 = vld [vmem:[%s2153 + $0x11] sm:$0xff]
        %v3545 = vld [vmem:[%s2153 + $0x21] sm:$0xff]
        %v3546 = vld [vmem:[%s2153 + $0x31] sm:$0xff]
        %v3547 = vld [vmem:[%s2153 + $0x41] sm:$0xff]
        %v3548 = vld [vmem:[%s2153 + $0x51] sm:$0xff]
        %v3549 = vld [vmem:[%s2153 + $0x61] sm:$0xff]
        %v3550 = vld [vmem:[%s2153 + $0x71] sm:$0xff]
        %v3551 = vld [vmem:[%s2153 + $0x2] sm:$0xff]
        %v3552 = vld [vmem:[%s2153 + $0x12] sm:$0xff]
        %v3553 = vld [vmem:[%s2153 + $0x22] sm:$0xff]
        %v3554 = vld [vmem:[%s2153 + $0x32] sm:$0xff]
        %v3555 = vld [vmem:[%s2153 + $0x42] sm:$0xff]
        %v3556 = vld [vmem:[%s2153 + $0x52] sm:$0xff]
        %v3557 = vld [vmem:[%s2153 + $0x62] sm:$0xff]
        %v3558 = vld [vmem:[%s2153 + $0x72] sm:$0xff]
        %v3559 = vld [vmem:[%s2153 + $0x3] sm:$0xff]
        %v3560 = vld [vmem:[%s2153 + $0x13] sm:$0xff]
        %v3561 = vld [vmem:[%s2153 + $0x23] sm:$0xff]
        %v3562 = vld [vmem:[%s2153 + $0x33] sm:$0xff]
        %v3563 = vld [vmem:[%s2153 + $0x43] sm:$0xff]
        %v3564 = vld [vmem:[%s2153 + $0x53] sm:$0xff]
        %v3565 = vld [vmem:[%s2153 + $0x63] sm:$0xff]
        %v3566 = vld [vmem:[%s2153 + $0x73] sm:$0xff]
        %3575 = vrot.lane.b32.xlu0 %v3495, 112
        %v3576 = vpop.permute.xlu0 %3575
        %3577 = vrot.lane.b32.xlu0 %v3496, 112
        %v3578 = vpop.permute.xlu0 %3577
        %3579 = vrot.lane.b32.xlu0 %v3497, 112
        %v3580 = vpop.permute.xlu0 %3579
        %3581 = vrot.lane.b32.xlu0 %v3498, 112
        %v3582 = vpop.permute.xlu0 %3581
        %3583 = vrot.lane.b32.xlu0 %v3499, 112
        %v3584 = vpop.permute.xlu0 %3583
        %3585 = vrot.lane.b32.xlu0 %v3500, 112
        %v3586 = vpop.permute.xlu0 %3585
        %3587 = vrot.lane.b32.xlu0 %v3501, 112
        %v3588 = vpop.permute.xlu0 %3587
        %3589 = vrot.lane.b32.xlu0 %v3502, 112
        %v3590 = vpop.permute.xlu0 %3589
        %3607 = vrot.lane.b32.xlu0 %v3503, 113
        %v3608 = vpop.permute.xlu0 %3607
        %3609 = vrot.lane.b32.xlu0 %v3504, 113
        %v3610 = vpop.permute.xlu0 %3609
        %3611 = vrot.lane.b32.xlu0 %v3505, 113
        %v3612 = vpop.permute.xlu0 %3611
        %3613 = vrot.lane.b32.xlu0 %v3506, 113
        %v3614 = vpop.permute.xlu0 %3613
        %3615 = vrot.lane.b32.xlu0 %v3507, 113
        %v3616 = vpop.permute.xlu0 %3615
        %3617 = vrot.lane.b32.xlu0 %v3508, 113
        %v3618 = vpop.permute.xlu0 %3617
        %3619 = vrot.lane.b32.xlu0 %v3509, 113
        %v3620 = vpop.permute.xlu0 %3619
        %3621 = vrot.lane.b32.xlu0 %v3510, 113
        %v3622 = vpop.permute.xlu0 %3621
        %3639 = vrot.lane.b32.xlu0 %v3511, 114
        %v3640 = vpop.permute.xlu0 %3639
        %3641 = vrot.lane.b32.xlu0 %v3512, 114
        %v3642 = vpop.permute.xlu0 %3641
        %3643 = vrot.lane.b32.xlu0 %v3513, 114
        %v3644 = vpop.permute.xlu0 %3643
        %3645 = vrot.lane.b32.xlu0 %v3514, 114
        %v3646 = vpop.permute.xlu0 %3645
        %3647 = vrot.lane.b32.xlu0 %v3515, 114
        %v3648 = vpop.permute.xlu0 %3647
        %3649 = vrot.lane.b32.xlu0 %v3516, 114
        %v3650 = vpop.permute.xlu0 %3649
        %3651 = vrot.lane.b32.xlu0 %v3517, 114
        %v3652 = vpop.permute.xlu0 %3651
        %3653 = vrot.lane.b32.xlu0 %v3518, 114
        %v3654 = vpop.permute.xlu0 %3653
        %3671 = vrot.lane.b32.xlu0 %v3519, 115
        %v3672 = vpop.permute.xlu0 %3671
        %3673 = vrot.lane.b32.xlu0 %v3520, 115
        %v3674 = vpop.permute.xlu0 %3673
        %3675 = vrot.lane.b32.xlu0 %v3521, 115
        %v3676 = vpop.permute.xlu0 %3675
        %3677 = vrot.lane.b32.xlu0 %v3522, 115
        %v3678 = vpop.permute.xlu0 %3677
        %3679 = vrot.lane.b32.xlu0 %v3523, 115
        %v3680 = vpop.permute.xlu0 %3679
        %3681 = vrot.lane.b32.xlu0 %v3524, 115
        %v3682 = vpop.permute.xlu0 %3681
        %3683 = vrot.lane.b32.xlu0 %v3525, 115
        %v3684 = vpop.permute.xlu0 %3683
        %3685 = vrot.lane.b32.xlu0 %v3526, 115
        %v3686 = vpop.permute.xlu0 %3685
        %3703 = vrot.lane.b32.xlu0 %v3527, 116
        %v3704 = vpop.permute.xlu0 %3703
        %3705 = vrot.lane.b32.xlu0 %v3528, 116
        %v3706 = vpop.permute.xlu0 %3705
        %3707 = vrot.lane.b32.xlu0 %v3529, 116
        %v3708 = vpop.permute.xlu0 %3707
        %3709 = vrot.lane.b32.xlu0 %v3530, 116
        %v3710 = vpop.permute.xlu0 %3709
        %3711 = vrot.lane.b32.xlu0 %v3531, 116
        %v3712 = vpop.permute.xlu0 %3711
        %3713 = vrot.lane.b32.xlu0 %v3532, 116
        %v3714 = vpop.permute.xlu0 %3713
        %3715 = vrot.lane.b32.xlu0 %v3533, 116
        %v3716 = vpop.permute.xlu0 %3715
        %3717 = vrot.lane.b32.xlu0 %v3534, 116
        %v3718 = vpop.permute.xlu0 %3717
        %3735 = vrot.lane.b32.xlu0 %v3535, 117
        %v3736 = vpop.permute.xlu0 %3735
        %3737 = vrot.lane.b32.xlu0 %v3536, 117
        %v3738 = vpop.permute.xlu0 %3737
        %3739 = vrot.lane.b32.xlu0 %v3537, 117
        %v3740 = vpop.permute.xlu0 %3739
        %3741 = vrot.lane.b32.xlu0 %v3538, 117
        %v3742 = vpop.permute.xlu0 %3741
        %3743 = vrot.lane.b32.xlu0 %v3539, 117
        %v3744 = vpop.permute.xlu0 %3743
        %3745 = vrot.lane.b32.xlu0 %v3540, 117
        %v3746 = vpop.permute.xlu0 %3745
        %3747 = vrot.lane.b32.xlu0 %v3541, 117
        %v3748 = vpop.permute.xlu0 %3747
        %3749 = vrot.lane.b32.xlu0 %v3542, 117
        %v3750 = vpop.permute.xlu0 %3749
        %3767 = vrot.lane.b32.xlu0 %v3543, 118
        %v3768 = vpop.permute.xlu0 %3767
        %3769 = vrot.lane.b32.xlu0 %v3544, 118
        %v3770 = vpop.permute.xlu0 %3769
        %3771 = vrot.lane.b32.xlu0 %v3545, 118
        %v3772 = vpop.permute.xlu0 %3771
        %3773 = vrot.lane.b32.xlu0 %v3546, 118
        %v3774 = vpop.permute.xlu0 %3773
        %3775 = vrot.lane.b32.xlu0 %v3547, 118
        %v3776 = vpop.permute.xlu0 %3775
        %3777 = vrot.lane.b32.xlu0 %v3548, 118
        %v3778 = vpop.permute.xlu0 %3777
        %3779 = vrot.lane.b32.xlu0 %v3549, 118
        %v3780 = vpop.permute.xlu0 %3779
        %3781 = vrot.lane.b32.xlu0 %v3550, 118
        %v3782 = vpop.permute.xlu0 %3781
        %3799 = vrot.lane.b32.xlu0 %v3551, 119
        %v3800 = vpop.permute.xlu0 %3799
        %3801 = vrot.lane.b32.xlu0 %v3552, 119
        %v3802 = vpop.permute.xlu0 %3801
        %3803 = vrot.lane.b32.xlu0 %v3553, 119
        %v3804 = vpop.permute.xlu0 %3803
        %3805 = vrot.lane.b32.xlu0 %v3554, 119
        %v3806 = vpop.permute.xlu0 %3805
        %3807 = vrot.lane.b32.xlu0 %v3555, 119
        %v3808 = vpop.permute.xlu0 %3807
        %3809 = vrot.lane.b32.xlu0 %v3556, 119
        %v3810 = vpop.permute.xlu0 %3809
        %3811 = vrot.lane.b32.xlu0 %v3557, 119
        %v3812 = vpop.permute.xlu0 %3811
        %3813 = vrot.lane.b32.xlu0 %v3558, 119
        %v3814 = vpop.permute.xlu0 %3813
        %3831 = vrot.lane.b32.xlu0 %v3559, 120
        %v3832 = vpop.permute.xlu0 %3831
        %3833 = vrot.lane.b32.xlu0 %v3560, 120
        %v3834 = vpop.permute.xlu0 %3833
        %3835 = vrot.lane.b32.xlu0 %v3561, 120
        %v3836 = vpop.permute.xlu0 %3835
        %3837 = vrot.lane.b32.xlu0 %v3562, 120
        %v3838 = vpop.permute.xlu0 %3837
        %3839 = vrot.lane.b32.xlu0 %v3563, 120
        %v3840 = vpop.permute.xlu0 %3839
        %3841 = vrot.lane.b32.xlu0 %v3564, 120
        %v3842 = vpop.permute.xlu0 %3841
        %3843 = vrot.lane.b32.xlu0 %v3565, 120
        %v3844 = vpop.permute.xlu0 %3843
        %3845 = vrot.lane.b32.xlu0 %v3566, 120
        %v3846 = vpop.permute.xlu0 %3845
        %v3855 = vsel %vm1110, %v3576, %v3608
        %v3856 = vsel %vm1110, %v3578, %v3610
        %v3857 = vsel %vm1110, %v3580, %v3612
        %v3858 = vsel %vm1110, %v3582, %v3614
        %v3859 = vsel %vm1110, %v3584, %v3616
        %v3860 = vsel %vm1110, %v3586, %v3618
        %v3861 = vsel %vm1110, %v3588, %v3620
        %v3862 = vsel %vm1110, %v3590, %v3622
        %v3863 = vsel %vm1865, %v3855, %v3640
        %v3864 = vsel %vm1865, %v3856, %v3642
        %v3865 = vsel %vm1865, %v3857, %v3644
        %v3866 = vsel %vm1865, %v3858, %v3646
        %v3867 = vsel %vm1865, %v3859, %v3648
        %v3868 = vsel %vm1865, %v3860, %v3650
        %v3869 = vsel %vm1865, %v3861, %v3652
        %v3870 = vsel %vm1865, %v3862, %v3654
        %v3871 = vsel %vm1874, %v3863, %v3672
        %v3872 = vsel %vm1874, %v3864, %v3674
        %v3873 = vsel %vm1874, %v3865, %v3676
        %v3874 = vsel %vm1874, %v3866, %v3678
        %v3875 = vsel %vm1874, %v3867, %v3680
        %v3876 = vsel %vm1874, %v3868, %v3682
        %v3877 = vsel %vm1874, %v3869, %v3684
        %v3878 = vsel %vm1874, %v3870, %v3686
        %v3879 = vsel %vm1010, %v3871, %v3704
        %v3880 = vsel %vm1010, %v3872, %v3706
        %v3881 = vsel %vm1010, %v3873, %v3708
        %v3882 = vsel %vm1010, %v3874, %v3710
        %v3883 = vsel %vm1010, %v3875, %v3712
        %v3884 = vsel %vm1010, %v3876, %v3714
        %v3885 = vsel %vm1010, %v3877, %v3716
        %v3886 = vsel %vm1010, %v3878, %v3718
        %v3887 = vsel %vm1901, %v3879, %v3736
        %v3888 = vsel %vm1901, %v3880, %v3738
        %v3889 = vsel %vm1901, %v3881, %v3740
        %v3890 = vsel %vm1901, %v3882, %v3742
        %v3891 = vsel %vm1901, %v3883, %v3744
        %v3892 = vsel %vm1901, %v3884, %v3746
        %v3893 = vsel %vm1901, %v3885, %v3748
        %v3894 = vsel %vm1901, %v3886, %v3750
        %vm3895 = vcmask 48128
        %v3896 = vsel %vm3895, %v3887, %v3768
        %v3897 = vsel %vm3895, %v3888, %v3770
        %v3898 = vsel %vm3895, %v3889, %v3772
        %v3899 = vsel %vm3895, %v3890, %v3774
        %v3900 = vsel %vm3895, %v3891, %v3776
        %v3901 = vsel %vm3895, %v3892, %v3778
        %v3902 = vsel %vm3895, %v3893, %v3780
        %v3903 = vsel %vm3895, %v3894, %v3782
        %vm3904 = vcmask 56320
        %v3905 = vsel %vm3904, %v3896, %v3800
        %v3906 = vsel %vm3904, %v3897, %v3802
        %v3907 = vsel %vm3904, %v3898, %v3804
        %v3908 = vsel %vm3904, %v3899, %v3806
        %v3909 = vsel %vm3904, %v3900, %v3808
        %v3910 = vsel %vm3904, %v3901, %v3810
        %v3911 = vsel %vm3904, %v3902, %v3812
        %v3912 = vsel %vm3904, %v3903, %v3814
        %v3913 = vsel %vm1482, %v3905, %v3832
        %v3914 = vsel %vm1482, %v3906, %v3834
        %v3915 = vsel %vm1482, %v3907, %v3836
        %v3916 = vsel %vm1482, %v3908, %v3838
        %v3917 = vsel %vm1482, %v3909, %v3840
        %v3918 = vsel %vm1482, %v3910, %v3842
        %v3919 = vsel %vm1482, %v3911, %v3844
        %v3920 = vsel %vm1482, %v3912, %v3846
        %v3921 = vpack.c.bf16 %v3914, %v3913
        %v3922 = vpack.c.bf16 %v3916, %v3915
        %v3923 = vpack.c.bf16 %v3918, %v3917
        %v3924 = vpack.c.bf16 %v3920, %v3919
        %v3926 = vlaneseq
        %v3927 = vshrl.u32 %v3926, 7
        %v3928 = vsub.s32 0, %v3927
        %v3929 = vrot.slane %v2905, %v3928
        %v3933 = vunpack.c.l.b16 %v2903
        %v3934 = vunpack.c.l.b16 %v2904
        %v3935 = vpack.c.b16 %v3934, %v3933
        %vm3936 = vcmask 72704
        %v3938 = vsel %vm3936, %v3921, 0
        %v3941 = vsel %vm3936, %v3922, 0
        %v3944 = vsel %vm3936, %v3923, 0
        %v3947 = vsel %vm3936, %v3924, 0
        %vm3949 = vcmask 1043456
        %vm3950 = vcmask 1044480
        %v3951 = vsel %vm3949, 4294967295, 65535
        %v3952 = vsel %vm3950, %v3951, 0
        %v3954 = vand.u32 %v3935, %v3952
        %3956 = vmatprep.subr.bf16.mxu0 0
        %3957 = vmatpush1.bf16.msra.mxu0 0
        %3958 = vmatprep.subr.bf16.mxu0 0
        %3959 = vmatpush1.bf16.msra.mxu0 0
        %3960 = vmatprep.subr.bf16.mxu0 0
        %3961 = vmatpush1.bf16.msra.mxu0 0
        %3962 = vmatprep.subr.bf16.mxu0 0
        %3963 = vmatpush1.bf16.msra.mxu0 0
        %3964 = vmatprep.subr.bf16.mxu0 0
        %3965 = vmatpush1.bf16.msra.mxu0 0
        %3966 = vmatprep.subr.bf16.mxu0 0
        %3967 = vmatpush1.bf16.msra.mxu0 0
        %3968 = vmatprep.subr.bf16.mxu0 0
        %3969 = vmatpush1.bf16.msra.mxu0 0
        %3970 = vmatprep.subr.bf16.mxu0 0
        %3971 = vmatpush1.bf16.msra.mxu0 %v3954
        %3972 = vmatprep.subr.bf16.mxu0 0
        %3973 = vmatpush2.bf16.msra.mxu0 0
        %3974 = vmatprep.subr.bf16.mxu0 0
        %3975 = vmatpush2.bf16.msra.mxu0 0
        %3976 = vmatprep.subr.bf16.mxu0 0
        %3977 = vmatpush2.bf16.msra.mxu0 0
        %3978 = vmatprep.subr.bf16.mxu0 0
        %3979 = vmatpush2.bf16.msra.mxu0 0
        %3980 = vmatprep.subr.bf16.mxu0 0
        %3981 = vmatpush2.bf16.msra.mxu0 0
        %3982 = vmatprep.subr.bf16.mxu0 0
        %3983 = vmatpush2.bf16.msra.mxu0 0
        %3984 = vmatprep.subr.bf16.mxu0 0
        %3985 = vmatpush2.bf16.msra.mxu0 0
        %3986 = vmatprep.subr.bf16.mxu0 0
        %3987 = vmatpush2.bf16.msra.mxu0 0
        %3988 = vmatprep.mubr.bf16.mxu0 0
        %3989 = vmatmul.mubr.bf16.gmra.mxu0 %v3938
        %v3990 = vpop.f32.mrf.mxu0
        %v3991 = vadd.f32 %v3929, %v3990
        %v3992 = vpop.f32.mrf.mxu0
        %v3993 = vpop.f32.mrf.mxu0
        %v3994 = vadd.f32 %v3929, %v3993
        %v3995 = vpop.f32.mrf.mxu0
        %3996 = vmatprep.mubr.bf16.mxu0 0
        %3997 = vmatmul.mubr.bf16.gmra.mxu0 %v3941
        %v3998 = vpop.f32.mrf.mxu0
        %v3999 = vadd.f32 %v3929, %v3998
        %v4000 = vpop.f32.mrf.mxu0
        %v4001 = vpop.f32.mrf.mxu0
        %v4002 = vadd.f32 %v3929, %v4001
        %v4003 = vpop.f32.mrf.mxu0
        %4004 = vmatprep.mubr.bf16.mxu0 0
        %4005 = vmatmul.mubr.bf16.gmra.mxu0 %v3944
        %v4006 = vpop.f32.mrf.mxu0
        %v4007 = vadd.f32 %v3929, %v4006
        %v4008 = vpop.f32.mrf.mxu0
        %v4009 = vpop.f32.mrf.mxu0
        %v4010 = vadd.f32 %v3929, %v4009
        %v4011 = vpop.f32.mrf.mxu0
        %4012 = vmatprep.mubr.bf16.mxu0 0
        %4013 = vmatmul.mubr.bf16.gmra.mxu0 %v3947
        %v4014 = vpop.f32.mrf.mxu0
        %v4015 = vadd.f32 %v3929, %v4014
        %v4016 = vpop.f32.mrf.mxu0
        %v4017 = vpop.f32.mrf.mxu0
        %v4018 = vadd.f32 %v3929, %v4017
        %v4019 = vpop.f32.mrf.mxu0
        %4020 = vdwg.mxu0
        %v4021 = vxor.u32 %v3991, 2147483648
        %v4022 = vxor.u32 %v3994, 2147483648
        %v4023 = vxor.u32 %v3999, 2147483648
        %v4024 = vxor.u32 %v4002, 2147483648
        %v4025 = vxor.u32 %v4007, 2147483648
        %v4026 = vxor.u32 %v4010, 2147483648
        %v4027 = vxor.u32 %v4015, 2147483648
        %v4028 = vxor.u32 %v4018, 2147483648
        %v4029 = vmul.f32 %v4021, 1.442695
        %v4030 = vpow.pop %v4029
        %v4031 = vmul.f32 %v4022, 1.442695
        %v4032 = vpow.pop %v4031
        %v4033 = vmul.f32 %v4023, 1.442695
        %v4034 = vpow.pop %v4033
        %v4035 = vmul.f32 %v4024, 1.442695
        %v4036 = vpow.pop %v4035
        %v4037 = vmul.f32 %v4025, 1.442695
        %v4038 = vpow.pop %v4037
        %v4039 = vmul.f32 %v4026, 1.442695
        %v4040 = vpow.pop %v4039
        %v4041 = vmul.f32 %v4027, 1.442695
        %v4042 = vpow.pop %v4041
        %v4043 = vmul.f32 %v4028, 1.442695
        %v4044 = vpow.pop %v4043
        %v4045 = vadd.f32 %v4030, 1.0
        %v4046 = vadd.f32 %v4032, 1.0
        %v4047 = vadd.f32 %v4034, 1.0
        %v4048 = vadd.f32 %v4036, 1.0
        %v4049 = vadd.f32 %v4038, 1.0
        %v4050 = vadd.f32 %v4040, 1.0
        %v4051 = vadd.f32 %v4042, 1.0
        %v4052 = vadd.f32 %v4044, 1.0
        %v4053 = vrcp.pop %v4045
        %v4054 = vmul.f32 1.0, %v4053
        %v4055 = vrcp.pop %v4046
        %v4056 = vmul.f32 1.0, %v4055
        %v4057 = vrcp.pop %v4047
        %v4058 = vmul.f32 1.0, %v4057
        %v4059 = vrcp.pop %v4048
        %v4060 = vmul.f32 1.0, %v4059
        %v4061 = vrcp.pop %v4049
        %v4062 = vmul.f32 1.0, %v4061
        %v4063 = vrcp.pop %v4050
        %v4064 = vmul.f32 1.0, %v4063
        %v4065 = vrcp.pop %v4051
        %v4066 = vmul.f32 1.0, %v4065
        %v4067 = vrcp.pop %v4052
        %v4068 = vmul.f32 1.0, %v4067
        %v4069 = vmul.f32 %v962, %v4054
        %v4070 = vmul.f32 %v963, %v4056
        %v4071 = vmul.f32 %v964, %v4058
        %v4072 = vmul.f32 %v965, %v4060
        %v4073 = vmul.f32 %v966, %v4062
        %v4074 = vmul.f32 %v967, %v4064
        %v4075 = vmul.f32 %v968, %v4066
        %v4076 = vmul.f32 %v969, %v4068
        %4085 = vrot.lane.b32.xlu0 %v4069, 12
        %v4086 = vpop.permute.xlu0 %4085
        %4087 = vrot.lane.b32.xlu0 %v4070, 12
        %v4088 = vpop.permute.xlu0 %4087
        %4089 = vrot.lane.b32.xlu0 %v4071, 12
        %v4090 = vpop.permute.xlu0 %4089
        %4091 = vrot.lane.b32.xlu0 %v4072, 12
        %v4092 = vpop.permute.xlu0 %4091
        %4093 = vrot.lane.b32.xlu0 %v4073, 12
        %v4094 = vpop.permute.xlu0 %4093
        %4095 = vrot.lane.b32.xlu0 %v4074, 12
        %v4096 = vpop.permute.xlu0 %4095
        %4097 = vrot.lane.b32.xlu0 %v4075, 12
        %v4098 = vpop.permute.xlu0 %4097
        %4099 = vrot.lane.b32.xlu0 %v4076, 12
        %v4100 = vpop.permute.xlu0 %4099
        %vm4109 = vcmask 130144
        %4110 = vst.msk [vmem:[%s1250 + $0x2] sm:$0xff] %vm4109, %v4086
        %4111 = vst.msk [vmem:[%s1250 + $0x12] sm:$0xff] %vm4109, %v4088
        %4112 = vst.msk [vmem:[%s1250 + $0x22] sm:$0xff] %vm4109, %v4090
        %4113 = vst.msk [vmem:[%s1250 + $0x32] sm:$0xff] %vm4109, %v4092
        %4114 = vst.msk [vmem:[%s1250 + $0x42] sm:$0xff] %vm4109, %v4094
        %4115 = vst.msk [vmem:[%s1250 + $0x52] sm:$0xff] %vm4109, %v4096
        %4116 = vst.msk [vmem:[%s1250 + $0x62] sm:$0xff] %vm4109, %v4098
        %4117 = vst.msk [vmem:[%s1250 + $0x72] sm:$0xff] %vm4109, %v4100
        %v4118 = vld [vmem:[%s17] sm:$0xf]
        %v4119 = vld [vmem:[%s17 + $0x4] sm:$0xf]
        %v4120 = vld [vmem:[%s17 + $0x8] sm:$0xf]
        %v4121 = vld [vmem:[%s17 + $0xc] sm:$0xf]
        %v4122 = vld [vmem:[%s17 + $0x10] sm:$0xf]
        %v4123 = vld [vmem:[%s17 + $0x14] sm:$0xf]
        %v4124 = vld [vmem:[%s17 + $0x18] sm:$0xf]
        %v4125 = vld [vmem:[%s17 + $0x1c] sm:$0xf]
        %v4126 = vld [vmem:[%s17 + $0x20] sm:$0xf]
        %v4127 = vld [vmem:[%s17 + $0x24] sm:$0xf]
        %v4128 = vld [vmem:[%s17 + $0x28] sm:$0xf]
        %v4129 = vld [vmem:[%s17 + $0x2c] sm:$0xf]
        %v4130 = vld [vmem:[%s17 + $0x30] sm:$0xf]
        %v4131 = vld [vmem:[%s17 + $0x34] sm:$0xf]
        %v4132 = vld [vmem:[%s17 + $0x38] sm:$0xf]
        %v4133 = vld [vmem:[%s17 + $0x3c] sm:$0xf]
        %v4134 = vld [vmem:[%s17 + $0x40] sm:$0xf]
        %v4135 = vld [vmem:[%s17 + $0x44] sm:$0xf]
        %v4136 = vld [vmem:[%s18] sm:$0x1]
        %v4137 = vld [vmem:[%s2136 + $0x1] sm:$0xff]
        %v4138 = vld [vmem:[%s2136 + $0x11] sm:$0xff]
        %v4139 = vld [vmem:[%s2136 + $0x21] sm:$0xff]
        %v4140 = vld [vmem:[%s2136 + $0x31] sm:$0xff]
        %v4141 = vld [vmem:[%s2136 + $0x41] sm:$0xff]
        %v4142 = vld [vmem:[%s2136 + $0x51] sm:$0xff]
        %v4143 = vld [vmem:[%s2136 + $0x61] sm:$0xff]
        %v4144 = vld [vmem:[%s2136 + $0x71] sm:$0xff]
        %v4145 = vld [vmem:[%s2136 + $0x2] sm:$0xff]
        %v4146 = vld [vmem:[%s2136 + $0x12] sm:$0xff]
        %v4147 = vld [vmem:[%s2136 + $0x22] sm:$0xff]
        %v4148 = vld [vmem:[%s2136 + $0x32] sm:$0xff]
        %v4149 = vld [vmem:[%s2136 + $0x42] sm:$0xff]
        %v4150 = vld [vmem:[%s2136 + $0x52] sm:$0xff]
        %v4151 = vld [vmem:[%s2136 + $0x62] sm:$0xff]
        %v4152 = vld [vmem:[%s2136 + $0x72] sm:$0xff]
        %v4153 = vld [vmem:[%s2136 + $0x3] sm:$0xff]
        %v4154 = vld [vmem:[%s2136 + $0x13] sm:$0xff]
        %v4155 = vld [vmem:[%s2136 + $0x23] sm:$0xff]
        %v4156 = vld [vmem:[%s2136 + $0x33] sm:$0xff]
        %v4157 = vld [vmem:[%s2136 + $0x43] sm:$0xff]
        %v4158 = vld [vmem:[%s2136 + $0x53] sm:$0xff]
        %v4159 = vld [vmem:[%s2136 + $0x63] sm:$0xff]
        %v4160 = vld [vmem:[%s2136 + $0x73] sm:$0xff]
        %v4161 = vld [vmem:[%s1250 + $0x1] sm:$0xff]
        %v4162 = vld [vmem:[%s1250 + $0x11] sm:$0xff]
        %v4163 = vld [vmem:[%s1250 + $0x21] sm:$0xff]
        %v4164 = vld [vmem:[%s1250 + $0x31] sm:$0xff]
        %v4165 = vld [vmem:[%s1250 + $0x41] sm:$0xff]
        %v4166 = vld [vmem:[%s1250 + $0x51] sm:$0xff]
        %v4167 = vld [vmem:[%s1250 + $0x61] sm:$0xff]
        %v4168 = vld [vmem:[%s1250 + $0x71] sm:$0xff]
        %v4169 = vld [vmem:[%s1250 + $0x2] sm:$0xff]
        %v4170 = vld [vmem:[%s1250 + $0x12] sm:$0xff]
        %v4171 = vld [vmem:[%s1250 + $0x22] sm:$0xff]
        %v4172 = vld [vmem:[%s1250 + $0x32] sm:$0xff]
        %v4173 = vld [vmem:[%s1250 + $0x42] sm:$0xff]
        %v4174 = vld [vmem:[%s1250 + $0x52] sm:$0xff]
        %v4175 = vld [vmem:[%s1250 + $0x62] sm:$0xff]
        %v4176 = vld [vmem:[%s1250 + $0x72] sm:$0xff]
        %v4177 = vld [vmem:[%s1250 + $0x3] sm:$0xff]
        %v4178 = vld [vmem:[%s1250 + $0x13] sm:$0xff]
        %v4179 = vld [vmem:[%s1250 + $0x23] sm:$0xff]
        %v4180 = vld [vmem:[%s1250 + $0x33] sm:$0xff]
        %v4181 = vld [vmem:[%s1250 + $0x43] sm:$0xff]
        %v4182 = vld [vmem:[%s1250 + $0x53] sm:$0xff]
        %v4183 = vld [vmem:[%s1250 + $0x63] sm:$0xff]
        %v4184 = vld [vmem:[%s1250 + $0x73] sm:$0xff]
        %v4185 = vld [vmem:[%s2153 + $0x1] sm:$0xff]
        %v4186 = vld [vmem:[%s2153 + $0x11] sm:$0xff]
        %v4187 = vld [vmem:[%s2153 + $0x21] sm:$0xff]
        %v4188 = vld [vmem:[%s2153 + $0x31] sm:$0xff]
        %v4189 = vld [vmem:[%s2153 + $0x41] sm:$0xff]
        %v4190 = vld [vmem:[%s2153 + $0x51] sm:$0xff]
        %v4191 = vld [vmem:[%s2153 + $0x61] sm:$0xff]
        %v4192 = vld [vmem:[%s2153 + $0x71] sm:$0xff]
        %v4193 = vld [vmem:[%s2153 + $0x2] sm:$0xff]
        %v4194 = vld [vmem:[%s2153 + $0x12] sm:$0xff]
        %v4195 = vld [vmem:[%s2153 + $0x22] sm:$0xff]
        %v4196 = vld [vmem:[%s2153 + $0x32] sm:$0xff]
        %v4197 = vld [vmem:[%s2153 + $0x42] sm:$0xff]
        %v4198 = vld [vmem:[%s2153 + $0x52] sm:$0xff]
        %v4199 = vld [vmem:[%s2153 + $0x62] sm:$0xff]
        %v4200 = vld [vmem:[%s2153 + $0x72] sm:$0xff]
        %v4201 = vld [vmem:[%s2153 + $0x3] sm:$0xff]
        %v4202 = vld [vmem:[%s2153 + $0x13] sm:$0xff]
        %v4203 = vld [vmem:[%s2153 + $0x23] sm:$0xff]
        %v4204 = vld [vmem:[%s2153 + $0x33] sm:$0xff]
        %v4205 = vld [vmem:[%s2153 + $0x43] sm:$0xff]
        %v4206 = vld [vmem:[%s2153 + $0x53] sm:$0xff]
        %v4207 = vld [vmem:[%s2153 + $0x63] sm:$0xff]
        %v4208 = vld [vmem:[%s2153 + $0x73] sm:$0xff]
        %4217 = vrot.lane.b32.xlu0 %v4145, 16
        %v4218 = vpop.permute.xlu0 %4217
        %4219 = vrot.lane.b32.xlu0 %v4146, 16
        %v4220 = vpop.permute.xlu0 %4219
        %4221 = vrot.lane.b32.xlu0 %v4147, 16
        %v4222 = vpop.permute.xlu0 %4221
        %4223 = vrot.lane.b32.xlu0 %v4148, 16
        %v4224 = vpop.permute.xlu0 %4223
        %4225 = vrot.lane.b32.xlu0 %v4149, 16
        %v4226 = vpop.permute.xlu0 %4225
        %4227 = vrot.lane.b32.xlu0 %v4150, 16
        %v4228 = vpop.permute.xlu0 %4227
        %4229 = vrot.lane.b32.xlu0 %v4151, 16
        %v4230 = vpop.permute.xlu0 %4229
        %4231 = vrot.lane.b32.xlu0 %v4152, 16
        %v4232 = vpop.permute.xlu0 %4231
        %4249 = vrot.lane.b32.xlu0 %v4153, 32
        %v4250 = vpop.permute.xlu0 %4249
        %4251 = vrot.lane.b32.xlu0 %v4154, 32
        %v4252 = vpop.permute.xlu0 %4251
        %4253 = vrot.lane.b32.xlu0 %v4155, 32
        %v4254 = vpop.permute.xlu0 %4253
        %4255 = vrot.lane.b32.xlu0 %v4156, 32
        %v4256 = vpop.permute.xlu0 %4255
        %4257 = vrot.lane.b32.xlu0 %v4157, 32
        %v4258 = vpop.permute.xlu0 %4257
        %4259 = vrot.lane.b32.xlu0 %v4158, 32
        %v4260 = vpop.permute.xlu0 %4259
        %4261 = vrot.lane.b32.xlu0 %v4159, 32
        %v4262 = vpop.permute.xlu0 %4261
        %4263 = vrot.lane.b32.xlu0 %v4160, 32
        %v4264 = vpop.permute.xlu0 %4263
        %4281 = vrot.lane.b32.xlu0 %v4161, 48
        %v4282 = vpop.permute.xlu0 %4281
        %4283 = vrot.lane.b32.xlu0 %v4162, 48
        %v4284 = vpop.permute.xlu0 %4283
        %4285 = vrot.lane.b32.xlu0 %v4163, 48
        %v4286 = vpop.permute.xlu0 %4285
        %4287 = vrot.lane.b32.xlu0 %v4164, 48
        %v4288 = vpop.permute.xlu0 %4287
        %4289 = vrot.lane.b32.xlu0 %v4165, 48
        %v4290 = vpop.permute.xlu0 %4289
        %4291 = vrot.lane.b32.xlu0 %v4166, 48
        %v4292 = vpop.permute.xlu0 %4291
        %4293 = vrot.lane.b32.xlu0 %v4167, 48
        %v4294 = vpop.permute.xlu0 %4293
        %4295 = vrot.lane.b32.xlu0 %v4168, 48
        %v4296 = vpop.permute.xlu0 %4295
        %4313 = vrot.lane.b32.xlu0 %v4169, 64
        %v4314 = vpop.permute.xlu0 %4313
        %4315 = vrot.lane.b32.xlu0 %v4170, 64
        %v4316 = vpop.permute.xlu0 %4315
        %4317 = vrot.lane.b32.xlu0 %v4171, 64
        %v4318 = vpop.permute.xlu0 %4317
        %4319 = vrot.lane.b32.xlu0 %v4172, 64
        %v4320 = vpop.permute.xlu0 %4319
        %4321 = vrot.lane.b32.xlu0 %v4173, 64
        %v4322 = vpop.permute.xlu0 %4321
        %4323 = vrot.lane.b32.xlu0 %v4174, 64
        %v4324 = vpop.permute.xlu0 %4323
        %4325 = vrot.lane.b32.xlu0 %v4175, 64
        %v4326 = vpop.permute.xlu0 %4325
        %4327 = vrot.lane.b32.xlu0 %v4176, 64
        %v4328 = vpop.permute.xlu0 %4327
        %4345 = vrot.lane.b32.xlu0 %v4177, 80
        %v4346 = vpop.permute.xlu0 %4345
        %4347 = vrot.lane.b32.xlu0 %v4178, 80
        %v4348 = vpop.permute.xlu0 %4347
        %4349 = vrot.lane.b32.xlu0 %v4179, 80
        %v4350 = vpop.permute.xlu0 %4349
        %4351 = vrot.lane.b32.xlu0 %v4180, 80
        %v4352 = vpop.permute.xlu0 %4351
        %4353 = vrot.lane.b32.xlu0 %v4181, 80
        %v4354 = vpop.permute.xlu0 %4353
        %4355 = vrot.lane.b32.xlu0 %v4182, 80
        %v4356 = vpop.permute.xlu0 %4355
        %4357 = vrot.lane.b32.xlu0 %v4183, 80
        %v4358 = vpop.permute.xlu0 %4357
        %4359 = vrot.lane.b32.xlu0 %v4184, 80
        %v4360 = vpop.permute.xlu0 %4359
        %4377 = vrot.lane.b32.xlu0 %v4185, 96
        %v4378 = vpop.permute.xlu0 %4377
        %4379 = vrot.lane.b32.xlu0 %v4186, 96
        %v4380 = vpop.permute.xlu0 %4379
        %4381 = vrot.lane.b32.xlu0 %v4187, 96
        %v4382 = vpop.permute.xlu0 %4381
        %4383 = vrot.lane.b32.xlu0 %v4188, 96
        %v4384 = vpop.permute.xlu0 %4383
        %4385 = vrot.lane.b32.xlu0 %v4189, 96
        %v4386 = vpop.permute.xlu0 %4385
        %4387 = vrot.lane.b32.xlu0 %v4190, 96
        %v4388 = vpop.permute.xlu0 %4387
        %4389 = vrot.lane.b32.xlu0 %v4191, 96
        %v4390 = vpop.permute.xlu0 %4389
        %4391 = vrot.lane.b32.xlu0 %v4192, 96
        %v4392 = vpop.permute.xlu0 %4391
        %4409 = vrot.lane.b32.xlu0 %v4193, 112
        %v4410 = vpop.permute.xlu0 %4409
        %4411 = vrot.lane.b32.xlu0 %v4194, 112
        %v4412 = vpop.permute.xlu0 %4411
        %4413 = vrot.lane.b32.xlu0 %v4195, 112
        %v4414 = vpop.permute.xlu0 %4413
        %4415 = vrot.lane.b32.xlu0 %v4196, 112
        %v4416 = vpop.permute.xlu0 %4415
        %4417 = vrot.lane.b32.xlu0 %v4197, 112
        %v4418 = vpop.permute.xlu0 %4417
        %4419 = vrot.lane.b32.xlu0 %v4198, 112
        %v4420 = vpop.permute.xlu0 %4419
        %4421 = vrot.lane.b32.xlu0 %v4199, 112
        %v4422 = vpop.permute.xlu0 %4421
        %4423 = vrot.lane.b32.xlu0 %v4200, 112
        %v4424 = vpop.permute.xlu0 %4423
        %v4433 = vsel %vm1500, %v4137, %v4218
        %v4434 = vsel %vm1500, %v4138, %v4220
        %v4435 = vsel %vm1500, %v4139, %v4222
        %v4436 = vsel %vm1500, %v4140, %v4224
        %v4437 = vsel %vm1500, %v4141, %v4226
        %v4438 = vsel %vm1500, %v4142, %v4228
        %v4439 = vsel %vm1500, %v4143, %v4230
        %v4440 = vsel %vm1500, %v4144, %v4232
        %v4441 = vsel %vm3332, %v4433, %v4250
        %v4442 = vsel %vm3332, %v4434, %v4252
        %v4443 = vsel %vm3332, %v4435, %v4254
        %v4444 = vsel %vm3332, %v4436, %v4256
        %v4445 = vsel %vm3332, %v4437, %v4258
        %v4446 = vsel %vm3332, %v4438, %v4260
        %v4447 = vsel %vm3332, %v4439, %v4262
        %v4448 = vsel %vm3332, %v4440, %v4264
        %vm4449 = vcmask 392192
        %v4450 = vsel %vm4449, %v4441, %v4282
        %v4451 = vsel %vm4449, %v4442, %v4284
        %v4452 = vsel %vm4449, %v4443, %v4286
        %v4453 = vsel %vm4449, %v4444, %v4288
        %v4454 = vsel %vm4449, %v4445, %v4290
        %v4455 = vsel %vm4449, %v4446, %v4292
        %v4456 = vsel %vm4449, %v4447, %v4294
        %v4457 = vsel %vm4449, %v4448, %v4296
        %vm4458 = vcmask 523264
        %v4459 = vsel %vm4458, %v4450, %v4314
        %v4460 = vsel %vm4458, %v4451, %v4316
        %v4461 = vsel %vm4458, %v4452, %v4318
        %v4462 = vsel %vm4458, %v4453, %v4320
        %v4463 = vsel %vm4458, %v4454, %v4322
        %v4464 = vsel %vm4458, %v4455, %v4324
        %v4465 = vsel %vm4458, %v4456, %v4326
        %v4466 = vsel %vm4458, %v4457, %v4328
        %vm4467 = vcmask 654336
        %v4468 = vsel %vm4467, %v4459, %v4346
        %v4469 = vsel %vm4467, %v4460, %v4348
        %v4470 = vsel %vm4467, %v4461, %v4350
        %v4471 = vsel %vm4467, %v4462, %v4352
        %v4472 = vsel %vm4467, %v4463, %v4354
        %v4473 = vsel %vm4467, %v4464, %v4356
        %v4474 = vsel %vm4467, %v4465, %v4358
        %v4475 = vsel %vm4467, %v4466, %v4360
        %vm4476 = vcmask 785408
        %v4477 = vsel %vm4476, %v4468, %v4378
        %v4478 = vsel %vm4476, %v4469, %v4380
        %v4479 = vsel %vm4476, %v4470, %v4382
        %v4480 = vsel %vm4476, %v4471, %v4384
        %v4481 = vsel %vm4476, %v4472, %v4386
        %v4482 = vsel %vm4476, %v4473, %v4388
        %v4483 = vsel %vm4476, %v4474, %v4390
        %v4484 = vsel %vm4476, %v4475, %v4392
        %vm4485 = vcmask 916480
        %v4486 = vsel %vm4485, %v4477, %v4410
        %v4487 = vsel %vm4485, %v4478, %v4412
        %v4488 = vsel %vm4485, %v4479, %v4414
        %v4489 = vsel %vm4485, %v4480, %v4416
        %v4490 = vsel %vm4485, %v4481, %v4418
        %v4491 = vsel %vm4485, %v4482, %v4420
        %v4492 = vsel %vm4485, %v4483, %v4422
        %v4493 = vsel %vm4485, %v4484, %v4424
        %v4494 = vpack.c.bf16 %v4487, %v4486
        %v4495 = vpack.c.bf16 %v4202, %v4201
        %v4496 = vpack.c.bf16 %v4489, %v4488
        %v4497 = vpack.c.bf16 %v4204, %v4203
        %v4498 = vpack.c.bf16 %v4491, %v4490
        %v4499 = vpack.c.bf16 %v4206, %v4205
        %v4500 = vpack.c.bf16 %v4493, %v4492
        %v4501 = vpack.c.bf16 %v4208, %v4207
        %v4503 = vlaneseq
        %v4504 = vshrl.u32 %v4503, 7
        %v4505 = vsub.s32 0, %v4504
        %v4506 = vrot.slane %v4136, %v4505
        %v4526 = vunpack.c.l.b16 %v4118
        %v4527 = vunpack.c.l.b16 %v4119
        %v4528 = vunpack.c.l.b16 %v4120
        %v4529 = vunpack.c.l.b16 %v4121
        %v4530 = vunpack.c.l.b16 %v4122
        %v4531 = vunpack.c.l.b16 %v4123
        %v4532 = vunpack.c.l.b16 %v4124
        %v4533 = vunpack.c.l.b16 %v4125
        %v4534 = vunpack.c.l.b16 %v4126
        %v4535 = vunpack.c.l.b16 %v4127
        %v4536 = vunpack.c.l.b16 %v4128
        %v4537 = vunpack.c.l.b16 %v4129
        %v4538 = vunpack.c.l.b16 %v4130
        %v4539 = vunpack.c.l.b16 %v4131
        %v4540 = vunpack.c.l.b16 %v4132
        %v4541 = vunpack.c.l.b16 %v4133
        %v4542 = vunpack.c.l.b16 %v4134
        %v4543 = vunpack.c.l.b16 %v4135
        %v4544 = vpack.c.b16 %v4527, %v4526
        %v4545 = vpack.c.b16 %v4529, %v4528
        %v4546 = vpack.c.b16 %v4531, %v4530
        %v4547 = vpack.c.b16 %v4533, %v4532
        %v4548 = vpack.c.b16 %v4535, %v4534
        %v4549 = vpack.c.b16 %v4537, %v4536
        %v4550 = vpack.c.b16 %v4539, %v4538
        %v4551 = vpack.c.b16 %v4541, %v4540
        %v4552 = vpack.c.b16 %v4543, %v4542
        %v4563 = vsel %vm1500, %v4495, 0
        %v4566 = vsel %vm1500, %v4497, 0
        %v4569 = vsel %vm1500, %v4499, 0
        %v4572 = vsel %vm1500, %v4501, 0
        %4574 = vmatprep.subr.bf16.mxu0 0
        %4575 = vmatpush1.bf16.msra.mxu0 %v4551
        %4576 = vmatprep.subr.bf16.mxu0 0
        %4577 = vmatpush1.bf16.msra.mxu0 %v4550
        %4578 = vmatprep.subr.bf16.mxu0 0
        %4579 = vmatpush1.bf16.msra.mxu0 %v4549
        %4580 = vmatprep.subr.bf16.mxu0 0
        %4581 = vmatpush1.bf16.msra.mxu0 %v4548
        %4582 = vmatprep.subr.bf16.mxu0 0
        %4583 = vmatpush1.bf16.msra.mxu0 %v4547
        %4584 = vmatprep.subr.bf16.mxu0 0
        %4585 = vmatpush1.bf16.msra.mxu0 %v4546
        %4586 = vmatprep.subr.bf16.mxu0 0
        %4587 = vmatpush1.bf16.msra.mxu0 %v4545
        %4588 = vmatprep.subr.bf16.mxu0 0
        %4589 = vmatpush1.bf16.msra.mxu0 %v4544
        %4590 = vmatprep.subr.bf16.mxu0 0
        %4591 = vmatpush2.bf16.msra.mxu0 0
        %4592 = vmatprep.subr.bf16.mxu0 0
        %4593 = vmatpush2.bf16.msra.mxu0 0
        %4594 = vmatprep.subr.bf16.mxu0 0
        %4595 = vmatpush2.bf16.msra.mxu0 0
        %4596 = vmatprep.subr.bf16.mxu0 0
        %4597 = vmatpush2.bf16.msra.mxu0 0
        %4598 = vmatprep.subr.bf16.mxu0 0
        %4599 = vmatpush2.bf16.msra.mxu0 0
        %4600 = vmatprep.subr.bf16.mxu0 0
        %4601 = vmatpush2.bf16.msra.mxu0 0
        %4602 = vmatprep.subr.bf16.mxu0 0
        %4603 = vmatpush2.bf16.msra.mxu0 0
        %4604 = vmatprep.subr.bf16.mxu0 0
        %4605 = vmatpush2.bf16.msra.mxu0 %v4552
        %4606 = vmatprep.mubr.bf16.mxu0 %v4563
        %4607 = vmatmul.mubr.bf16.gmra.mxu0 %v4494
        %v4608 = vpop.f32.mrf.mxu0
        %v4609 = vadd.f32 %v4506, %v4608
        %v4610 = vpop.f32.mrf.mxu0
        %v4611 = vpop.f32.mrf.mxu0
        %v4612 = vadd.f32 %v4506, %v4611
        %v4613 = vpop.f32.mrf.mxu0
        %4614 = vmatprep.mubr.bf16.mxu0 %v4566
        %4615 = vmatmul.mubr.bf16.gmra.mxu0 %v4496
        %v4616 = vpop.f32.mrf.mxu0
        %v4617 = vadd.f32 %v4506, %v4616
        %v4618 = vpop.f32.mrf.mxu0
        %v4619 = vpop.f32.mrf.mxu0
        %v4620 = vadd.f32 %v4506, %v4619
        %v4621 = vpop.f32.mrf.mxu0
        %4622 = vmatprep.mubr.bf16.mxu0 %v4569
        %4623 = vmatmul.mubr.bf16.gmra.mxu0 %v4498
        %v4624 = vpop.f32.mrf.mxu0
        %v4625 = vadd.f32 %v4506, %v4624
        %v4626 = vpop.f32.mrf.mxu0
        %v4627 = vpop.f32.mrf.mxu0
        %v4628 = vadd.f32 %v4506, %v4627
        %v4629 = vpop.f32.mrf.mxu0
        %4630 = vmatprep.mubr.bf16.mxu0 %v4572
        %4631 = vmatmul.mubr.bf16.gmra.mxu0 %v4500
        %v4632 = vpop.f32.mrf.mxu0
        %v4633 = vadd.f32 %v4506, %v4632
        %v4634 = vpop.f32.mrf.mxu0
        %v4635 = vpop.f32.mrf.mxu0
        %v4636 = vadd.f32 %v4506, %v4635
        %v4637 = vpop.f32.mrf.mxu0
        %4638 = vdwg.mxu0
        %v4639 = vld [vmem:[%s19] sm:$0x1]
        %v4641 = vlaneseq
        %v4642 = vshrl.u32 %v4641, 7
        %v4643 = vsub.s32 0, %v4642
        %v4644 = vrot.slane %v4639, %v4643
        %v4646 = vmul.f32 %v4609, %v4644
        %v4647 = vmul.f32 %v4612, %v4644
        %v4648 = vmul.f32 %v4617, %v4644
        %v4649 = vmul.f32 %v4620, %v4644
        %v4650 = vmul.f32 %v4625, %v4644
        %v4651 = vmul.f32 %v4628, %v4644
        %v4652 = vmul.f32 %v4633, %v4644
        %v4653 = vmul.f32 %v4636, %v4644
        %v4654 = vld [vmem:[%s20] sm:$0x1]
        %v4656 = vlaneseq
        %v4657 = vshrl.u32 %v4656, 7
        %v4658 = vsub.s32 0, %v4657
        %v4659 = vrot.slane %v4654, %v4658
        %v4661 = vadd.f32 %v4646, %v4659
        %v4662 = vadd.f32 %v4647, %v4659
        %v4663 = vadd.f32 %v4648, %v4659
        %v4664 = vadd.f32 %v4649, %v4659
        %v4665 = vadd.f32 %v4650, %v4659
        %v4666 = vadd.f32 %v4651, %v4659
        %v4667 = vadd.f32 %v4652, %v4659
        %v4668 = vadd.f32 %v4653, %v4659
        %v4669 = vmax.f32 %v4661, 0.0
        %v4670 = vmax.f32 %v4662, 0.0
        %v4671 = vmax.f32 %v4663, 0.0
        %v4672 = vmax.f32 %v4664, 0.0
        %v4673 = vmax.f32 %v4665, 0.0
        %v4674 = vmax.f32 %v4666, 0.0
        %v4675 = vmax.f32 %v4667, 0.0
        %v4676 = vmax.f32 %v4668, 0.0
        %4685 = vrot.lane.b32.xlu0 %v4669, 16
        %v4686 = vpop.permute.xlu0 %4685
        %4687 = vrot.lane.b32.xlu0 %v4670, 16
        %v4688 = vpop.permute.xlu0 %4687
        %4689 = vrot.lane.b32.xlu0 %v4671, 16
        %v4690 = vpop.permute.xlu0 %4689
        %4691 = vrot.lane.b32.xlu0 %v4672, 16
        %v4692 = vpop.permute.xlu0 %4691
        %4693 = vrot.lane.b32.xlu0 %v4673, 16
        %v4694 = vpop.permute.xlu0 %4693
        %4695 = vrot.lane.b32.xlu0 %v4674, 16
        %v4696 = vpop.permute.xlu0 %4695
        %4697 = vrot.lane.b32.xlu0 %v4675, 16
        %v4698 = vpop.permute.xlu0 %4697
        %4699 = vrot.lane.b32.xlu0 %v4676, 16
        %v4700 = vpop.permute.xlu0 %4699
        %4709 = vst.msk [vmem:[%s1250 + $0x2] sm:$0xff] %vm1297, %v4686
        %4710 = vst.msk [vmem:[%s1250 + $0x12] sm:$0xff] %vm1297, %v4688
        %4711 = vst.msk [vmem:[%s1250 + $0x22] sm:$0xff] %vm1297, %v4690
        %4712 = vst.msk [vmem:[%s1250 + $0x32] sm:$0xff] %vm1297, %v4692
        %4713 = vst.msk [vmem:[%s1250 + $0x42] sm:$0xff] %vm1297, %v4694
        %4714 = vst.msk [vmem:[%s1250 + $0x52] sm:$0xff] %vm1297, %v4696
        %4715 = vst.msk [vmem:[%s1250 + $0x62] sm:$0xff] %vm1297, %v4698
        %4716 = vst.msk [vmem:[%s1250 + $0x72] sm:$0xff] %vm1297, %v4700
        %v4717 = vld [vmem:[%s2136 + $0x1] sm:$0xff]
        %v4718 = vld [vmem:[%s2136 + $0x11] sm:$0xff]
        %v4719 = vld [vmem:[%s2136 + $0x21] sm:$0xff]
        %v4720 = vld [vmem:[%s2136 + $0x31] sm:$0xff]
        %v4721 = vld [vmem:[%s2136 + $0x41] sm:$0xff]
        %v4722 = vld [vmem:[%s2136 + $0x51] sm:$0xff]
        %v4723 = vld [vmem:[%s2136 + $0x61] sm:$0xff]
        %v4724 = vld [vmem:[%s2136 + $0x71] sm:$0xff]
        %v4725 = vld [vmem:[%s2136 + $0x2] sm:$0xff]
        %v4726 = vld [vmem:[%s2136 + $0x12] sm:$0xff]
        %v4727 = vld [vmem:[%s2136 + $0x22] sm:$0xff]
        %v4728 = vld [vmem:[%s2136 + $0x32] sm:$0xff]
        %v4729 = vld [vmem:[%s2136 + $0x42] sm:$0xff]
        %v4730 = vld [vmem:[%s2136 + $0x52] sm:$0xff]
        %v4731 = vld [vmem:[%s2136 + $0x62] sm:$0xff]
        %v4732 = vld [vmem:[%s2136 + $0x72] sm:$0xff]
        %v4733 = vld [vmem:[%s2136 + $0x3] sm:$0xff]
        %v4734 = vld [vmem:[%s2136 + $0x13] sm:$0xff]
        %v4735 = vld [vmem:[%s2136 + $0x23] sm:$0xff]
        %v4736 = vld [vmem:[%s2136 + $0x33] sm:$0xff]
        %v4737 = vld [vmem:[%s2136 + $0x43] sm:$0xff]
        %v4738 = vld [vmem:[%s2136 + $0x53] sm:$0xff]
        %v4739 = vld [vmem:[%s2136 + $0x63] sm:$0xff]
        %v4740 = vld [vmem:[%s2136 + $0x73] sm:$0xff]
        %v4741 = vld [vmem:[%s1250 + $0x1] sm:$0xff]
        %v4742 = vld [vmem:[%s1250 + $0x11] sm:$0xff]
        %v4743 = vld [vmem:[%s1250 + $0x21] sm:$0xff]
        %v4744 = vld [vmem:[%s1250 + $0x31] sm:$0xff]
        %v4745 = vld [vmem:[%s1250 + $0x41] sm:$0xff]
        %v4746 = vld [vmem:[%s1250 + $0x51] sm:$0xff]
        %v4747 = vld [vmem:[%s1250 + $0x61] sm:$0xff]
        %v4748 = vld [vmem:[%s1250 + $0x71] sm:$0xff]
        %v4749 = vld [vmem:[%s1250 + $0x2] sm:$0xff]
        %v4750 = vld [vmem:[%s1250 + $0x12] sm:$0xff]
        %v4751 = vld [vmem:[%s1250 + $0x22] sm:$0xff]
        %v4752 = vld [vmem:[%s1250 + $0x32] sm:$0xff]
        %v4753 = vld [vmem:[%s1250 + $0x42] sm:$0xff]
        %v4754 = vld [vmem:[%s1250 + $0x52] sm:$0xff]
        %v4755 = vld [vmem:[%s1250 + $0x62] sm:$0xff]
        %v4756 = vld [vmem:[%s1250 + $0x72] sm:$0xff]
        %v4757 = vld [vmem:[%s1250 + $0x3] sm:$0xff]
        %v4758 = vld [vmem:[%s1250 + $0x13] sm:$0xff]
        %v4759 = vld [vmem:[%s1250 + $0x23] sm:$0xff]
        %v4760 = vld [vmem:[%s1250 + $0x33] sm:$0xff]
        %v4761 = vld [vmem:[%s1250 + $0x43] sm:$0xff]
        %v4762 = vld [vmem:[%s1250 + $0x53] sm:$0xff]
        %v4763 = vld [vmem:[%s1250 + $0x63] sm:$0xff]
        %v4764 = vld [vmem:[%s1250 + $0x73] sm:$0xff]
        %v4765 = vld [vmem:[%s2153 + $0x1] sm:$0xff]
        %v4766 = vld [vmem:[%s2153 + $0x11] sm:$0xff]
        %v4767 = vld [vmem:[%s2153 + $0x21] sm:$0xff]
        %v4768 = vld [vmem:[%s2153 + $0x31] sm:$0xff]
        %v4769 = vld [vmem:[%s2153 + $0x41] sm:$0xff]
        %v4770 = vld [vmem:[%s2153 + $0x51] sm:$0xff]
        %v4771 = vld [vmem:[%s2153 + $0x61] sm:$0xff]
        %v4772 = vld [vmem:[%s2153 + $0x71] sm:$0xff]
        %v4773 = vld [vmem:[%s2153 + $0x2] sm:$0xff]
        %v4774 = vld [vmem:[%s2153 + $0x12] sm:$0xff]
        %v4775 = vld [vmem:[%s2153 + $0x22] sm:$0xff]
        %v4776 = vld [vmem:[%s2153 + $0x32] sm:$0xff]
        %v4777 = vld [vmem:[%s2153 + $0x42] sm:$0xff]
        %v4778 = vld [vmem:[%s2153 + $0x52] sm:$0xff]
        %v4779 = vld [vmem:[%s2153 + $0x62] sm:$0xff]
        %v4780 = vld [vmem:[%s2153 + $0x72] sm:$0xff]
        %v4781 = vld [vmem:[%s2153 + $0x3] sm:$0xff]
        %v4782 = vld [vmem:[%s2153 + $0x13] sm:$0xff]
        %v4783 = vld [vmem:[%s2153 + $0x23] sm:$0xff]
        %v4784 = vld [vmem:[%s2153 + $0x33] sm:$0xff]
        %v4785 = vld [vmem:[%s2153 + $0x43] sm:$0xff]
        %v4786 = vld [vmem:[%s2153 + $0x53] sm:$0xff]
        %v4787 = vld [vmem:[%s2153 + $0x63] sm:$0xff]
        %v4788 = vld [vmem:[%s2153 + $0x73] sm:$0xff]
        %4797 = vrot.lane.b32.xlu0 %v4717, 112
        %v4798 = vpop.permute.xlu0 %4797
        %4799 = vrot.lane.b32.xlu0 %v4718, 112
        %v4800 = vpop.permute.xlu0 %4799
        %4801 = vrot.lane.b32.xlu0 %v4719, 112
        %v4802 = vpop.permute.xlu0 %4801
        %4803 = vrot.lane.b32.xlu0 %v4720, 112
        %v4804 = vpop.permute.xlu0 %4803
        %4805 = vrot.lane.b32.xlu0 %v4721, 112
        %v4806 = vpop.permute.xlu0 %4805
        %4807 = vrot.lane.b32.xlu0 %v4722, 112
        %v4808 = vpop.permute.xlu0 %4807
        %4809 = vrot.lane.b32.xlu0 %v4723, 112
        %v4810 = vpop.permute.xlu0 %4809
        %4811 = vrot.lane.b32.xlu0 %v4724, 112
        %v4812 = vpop.permute.xlu0 %4811
        %4829 = vrot.lane.b32.xlu0 %v4725, 116
        %v4830 = vpop.permute.xlu0 %4829
        %4831 = vrot.lane.b32.xlu0 %v4726, 116
        %v4832 = vpop.permute.xlu0 %4831
        %4833 = vrot.lane.b32.xlu0 %v4727, 116
        %v4834 = vpop.permute.xlu0 %4833
        %4835 = vrot.lane.b32.xlu0 %v4728, 116
        %v4836 = vpop.permute.xlu0 %4835
        %4837 = vrot.lane.b32.xlu0 %v4729, 116
        %v4838 = vpop.permute.xlu0 %4837
        %4839 = vrot.lane.b32.xlu0 %v4730, 116
        %v4840 = vpop.permute.xlu0 %4839
        %4841 = vrot.lane.b32.xlu0 %v4731, 116
        %v4842 = vpop.permute.xlu0 %4841
        %4843 = vrot.lane.b32.xlu0 %v4732, 116
        %v4844 = vpop.permute.xlu0 %4843
        %4861 = vrot.lane.b32.xlu0 %v4733, 120
        %v4862 = vpop.permute.xlu0 %4861
        %4863 = vrot.lane.b32.xlu0 %v4734, 120
        %v4864 = vpop.permute.xlu0 %4863
        %4865 = vrot.lane.b32.xlu0 %v4735, 120
        %v4866 = vpop.permute.xlu0 %4865
        %4867 = vrot.lane.b32.xlu0 %v4736, 120
        %v4868 = vpop.permute.xlu0 %4867
        %4869 = vrot.lane.b32.xlu0 %v4737, 120
        %v4870 = vpop.permute.xlu0 %4869
        %4871 = vrot.lane.b32.xlu0 %v4738, 120
        %v4872 = vpop.permute.xlu0 %4871
        %4873 = vrot.lane.b32.xlu0 %v4739, 120
        %v4874 = vpop.permute.xlu0 %4873
        %4875 = vrot.lane.b32.xlu0 %v4740, 120
        %v4876 = vpop.permute.xlu0 %4875
        %4893 = vrot.lane.b32.xlu0 %v4741, 124
        %v4894 = vpop.permute.xlu0 %4893
        %4895 = vrot.lane.b32.xlu0 %v4742, 124
        %v4896 = vpop.permute.xlu0 %4895
        %4897 = vrot.lane.b32.xlu0 %v4743, 124
        %v4898 = vpop.permute.xlu0 %4897
        %4899 = vrot.lane.b32.xlu0 %v4744, 124
        %v4900 = vpop.permute.xlu0 %4899
        %4901 = vrot.lane.b32.xlu0 %v4745, 124
        %v4902 = vpop.permute.xlu0 %4901
        %4903 = vrot.lane.b32.xlu0 %v4746, 124
        %v4904 = vpop.permute.xlu0 %4903
        %4905 = vrot.lane.b32.xlu0 %v4747, 124
        %v4906 = vpop.permute.xlu0 %4905
        %4907 = vrot.lane.b32.xlu0 %v4748, 124
        %v4908 = vpop.permute.xlu0 %4907
        %4925 = vrot.lane.b32.xlu0 %v4757, 4
        %v4926 = vpop.permute.xlu0 %4925
        %4927 = vrot.lane.b32.xlu0 %v4758, 4
        %v4928 = vpop.permute.xlu0 %4927
        %4929 = vrot.lane.b32.xlu0 %v4759, 4
        %v4930 = vpop.permute.xlu0 %4929
        %4931 = vrot.lane.b32.xlu0 %v4760, 4
        %v4932 = vpop.permute.xlu0 %4931
        %4933 = vrot.lane.b32.xlu0 %v4761, 4
        %v4934 = vpop.permute.xlu0 %4933
        %4935 = vrot.lane.b32.xlu0 %v4762, 4
        %v4936 = vpop.permute.xlu0 %4935
        %4937 = vrot.lane.b32.xlu0 %v4763, 4
        %v4938 = vpop.permute.xlu0 %4937
        %4939 = vrot.lane.b32.xlu0 %v4764, 4
        %v4940 = vpop.permute.xlu0 %4939
        %4957 = vrot.lane.b32.xlu0 %v4765, 8
        %v4958 = vpop.permute.xlu0 %4957
        %4959 = vrot.lane.b32.xlu0 %v4766, 8
        %v4960 = vpop.permute.xlu0 %4959
        %4961 = vrot.lane.b32.xlu0 %v4767, 8
        %v4962 = vpop.permute.xlu0 %4961
        %4963 = vrot.lane.b32.xlu0 %v4768, 8
        %v4964 = vpop.permute.xlu0 %4963
        %4965 = vrot.lane.b32.xlu0 %v4769, 8
        %v4966 = vpop.permute.xlu0 %4965
        %4967 = vrot.lane.b32.xlu0 %v4770, 8
        %v4968 = vpop.permute.xlu0 %4967
        %4969 = vrot.lane.b32.xlu0 %v4771, 8
        %v4970 = vpop.permute.xlu0 %4969
        %4971 = vrot.lane.b32.xlu0 %v4772, 8
        %v4972 = vpop.permute.xlu0 %4971
        %4989 = vrot.lane.b32.xlu0 %v4773, 12
        %v4990 = vpop.permute.xlu0 %4989
        %4991 = vrot.lane.b32.xlu0 %v4774, 12
        %v4992 = vpop.permute.xlu0 %4991
        %4993 = vrot.lane.b32.xlu0 %v4775, 12
        %v4994 = vpop.permute.xlu0 %4993
        %4995 = vrot.lane.b32.xlu0 %v4776, 12
        %v4996 = vpop.permute.xlu0 %4995
        %4997 = vrot.lane.b32.xlu0 %v4777, 12
        %v4998 = vpop.permute.xlu0 %4997
        %4999 = vrot.lane.b32.xlu0 %v4778, 12
        %v5000 = vpop.permute.xlu0 %4999
        %5001 = vrot.lane.b32.xlu0 %v4779, 12
        %v5002 = vpop.permute.xlu0 %5001
        %5003 = vrot.lane.b32.xlu0 %v4780, 12
        %v5004 = vpop.permute.xlu0 %5003
        %5021 = vrot.lane.b32.xlu0 %v4781, 16
        %v5022 = vpop.permute.xlu0 %5021
        %5023 = vrot.lane.b32.xlu0 %v4782, 16
        %v5024 = vpop.permute.xlu0 %5023
        %5025 = vrot.lane.b32.xlu0 %v4783, 16
        %v5026 = vpop.permute.xlu0 %5025
        %5027 = vrot.lane.b32.xlu0 %v4784, 16
        %v5028 = vpop.permute.xlu0 %5027
        %5029 = vrot.lane.b32.xlu0 %v4785, 16
        %v5030 = vpop.permute.xlu0 %5029
        %5031 = vrot.lane.b32.xlu0 %v4786, 16
        %v5032 = vpop.permute.xlu0 %5031
        %5033 = vrot.lane.b32.xlu0 %v4787, 16
        %v5034 = vpop.permute.xlu0 %5033
        %5035 = vrot.lane.b32.xlu0 %v4788, 16
        %v5036 = vpop.permute.xlu0 %5035
        %v5045 = vsel %vm1010, %v4798, %v4830
        %v5046 = vsel %vm1010, %v4800, %v4832
        %v5047 = vsel %vm1010, %v4802, %v4834
        %v5048 = vsel %vm1010, %v4804, %v4836
        %v5049 = vsel %vm1010, %v4806, %v4838
        %v5050 = vsel %vm1010, %v4808, %v4840
        %v5051 = vsel %vm1010, %v4810, %v4842
        %v5052 = vsel %vm1010, %v4812, %v4844
        %v5053 = vsel %vm1482, %v5045, %v4862
        %v5054 = vsel %vm1482, %v5046, %v4864
        %v5055 = vsel %vm1482, %v5047, %v4866
        %v5056 = vsel %vm1482, %v5048, %v4868
        %v5057 = vsel %vm1482, %v5049, %v4870
        %v5058 = vsel %vm1482, %v5050, %v4872
        %v5059 = vsel %vm1482, %v5051, %v4874
        %v5060 = vsel %vm1482, %v5052, %v4876
        %v5061 = vsel %vm1491, %v5053, %v4894
        %v5062 = vsel %vm1491, %v5054, %v4896
        %v5063 = vsel %vm1491, %v5055, %v4898
        %v5064 = vsel %vm1491, %v5056, %v4900
        %v5065 = vsel %vm1491, %v5057, %v4902
        %v5066 = vsel %vm1491, %v5058, %v4904
        %v5067 = vsel %vm1491, %v5059, %v4906
        %v5068 = vsel %vm1491, %v5060, %v4908
        %v5069 = vsel %vm1500, %v5061, %v4749
        %v5070 = vsel %vm1500, %v5062, %v4750
        %v5071 = vsel %vm1500, %v5063, %v4751
        %v5072 = vsel %vm1500, %v5064, %v4752
        %v5073 = vsel %vm1500, %v5065, %v4753
        %v5074 = vsel %vm1500, %v5066, %v4754
        %v5075 = vsel %vm1500, %v5067, %v4755
        %v5076 = vsel %vm1500, %v5068, %v4756
        %v5077 = vsel %vm970, %v5069, %v4926
        %v5078 = vsel %vm970, %v5070, %v4928
        %v5079 = vsel %vm970, %v5071, %v4930
        %v5080 = vsel %vm970, %v5072, %v4932
        %v5081 = vsel %vm970, %v5073, %v4934
        %v5082 = vsel %vm970, %v5074, %v4936
        %v5083 = vsel %vm970, %v5075, %v4938
        %v5084 = vsel %vm970, %v5076, %v4940
        %v5085 = vsel %vm3314, %v5077, %v4958
        %v5086 = vsel %vm3314, %v5078, %v4960
        %v5087 = vsel %vm3314, %v5079, %v4962
        %v5088 = vsel %vm3314, %v5080, %v4964
        %v5089 = vsel %vm3314, %v5081, %v4966
        %v5090 = vsel %vm3314, %v5082, %v4968
        %v5091 = vsel %vm3314, %v5083, %v4970
        %v5092 = vsel %vm3314, %v5084, %v4972
        %v5093 = vsel %vm3323, %v5085, %v4990
        %v5094 = vsel %vm3323, %v5086, %v4992
        %v5095 = vsel %vm3323, %v5087, %v4994
        %v5096 = vsel %vm3323, %v5088, %v4996
        %v5097 = vsel %vm3323, %v5089, %v4998
        %v5098 = vsel %vm3323, %v5090, %v5000
        %v5099 = vsel %vm3323, %v5091, %v5002
        %v5100 = vsel %vm3323, %v5092, %v5004
        %v5101 = vsel %vm3332, %v5093, %v5022
        %v5102 = vsel %vm3332, %v5094, %v5024
        %v5103 = vsel %vm3332, %v5095, %v5026
        %v5104 = vsel %vm3332, %v5096, %v5028
        %v5105 = vsel %vm3332, %v5097, %v5030
        %v5106 = vsel %vm3332, %v5098, %v5032
        %v5107 = vsel %vm3332, %v5099, %v5034
        %v5108 = vsel %vm3332, %v5100, %v5036
        %v5109 = vpack.c.bf16 %v5102, %v5101
        %v5110 = vpack.c.bf16 %v5104, %v5103
        %v5111 = vpack.c.bf16 %v5106, %v5105
        %v5112 = vpack.c.bf16 %v5108, %v5107
        %v5113 = vld [vmem:[%s21] sm:$0xf]
        %v5114 = vld [vmem:[%s22] sm:$0xff]
        %5116 = vset.pattern.permute.xlu0 0
        %5117 = vperm.xlu0 %5116, %v5114
        %v5118 = vpop.permute.xlu0 %5117
        %v5121 = vsel %vm3366, %v5113, 0
        %v5124 = vsel %vm3366, %v5109, 0
        %v5127 = vsel %vm3366, %v5110, 0
        %v5130 = vsel %vm3366, %v5111, 0
        %v5133 = vsel %vm3366, %v5112, 0
        %5135 = vmatprep.subr.bf16.mxu0 0
        %5136 = vmatpush1.bf16.xpose.msra.mxu0 0
        %5137 = vmatprep.subr.bf16.mxu0 0
        %5138 = vmatpush1.bf16.xpose.msra.mxu0 0
        %5139 = vmatprep.subr.bf16.mxu0 0
        %5140 = vmatpush1.bf16.xpose.msra.mxu0 0
        %5141 = vmatprep.subr.bf16.mxu0 0
        %5142 = vmatpush1.bf16.xpose.msra.mxu0 0
        %5143 = vmatprep.subr.bf16.mxu0 0
        %5144 = vmatpush1.bf16.xpose.msra.mxu0 %v5133
        %5145 = vmatprep.subr.bf16.mxu0 0
        %5146 = vmatpush1.bf16.xpose.msra.mxu0 %v5130
        %5147 = vmatprep.subr.bf16.mxu0 0
        %5148 = vmatpush1.bf16.xpose.msra.mxu0 %v5127
        %5149 = vmatprep.subr.bf16.mxu0 0
        %5150 = vmatpush1.bf16.xpose.msra.mxu0 %v5124
        %5151 = vmatprep.subr.bf16.mxu0 0
        %5152 = vmatpush2.bf16.xpose.msra.mxu0 0
        %5153 = vmatprep.subr.bf16.mxu0 0
        %5154 = vmatpush2.bf16.xpose.msra.mxu0 0
        %5155 = vmatprep.subr.bf16.mxu0 0
        %5156 = vmatpush2.bf16.xpose.msra.mxu0 0
        %5157 = vmatprep.subr.bf16.mxu0 0
        %5158 = vmatpush2.bf16.xpose.msra.mxu0 0
        %5159 = vmatprep.subr.bf16.mxu0 0
        %5160 = vmatpush2.bf16.xpose.msra.mxu0 0
        %5161 = vmatprep.subr.bf16.mxu0 0
        %5162 = vmatpush2.bf16.xpose.msra.mxu0 0
        %5163 = vmatprep.subr.bf16.mxu0 0
        %5164 = vmatpush2.bf16.xpose.msra.mxu0 0
        %5165 = vmatprep.subr.bf16.mxu0 0
        %5166 = vmatpush2.bf16.xpose.msra.mxu0 0
        %5167 = vmatprep.mubr.bf16.mxu0 0
        %5168 = vmatmul.mubr.bf16.gmra.mxu0 %v5121
        %v5169 = vpop.f32.mrf.mxu0
        %v5170 = vadd.f32 %v5118, %v5169
        %v5171 = vpop.f32.mrf.mxu0
        %v5172 = vpop.f32.mrf.mxu0
        %v5173 = vpop.f32.mrf.mxu0
        %5174 = vdwg.mxu0
        %v5175 = vmax.f32 %v5170, 0.0
        %5176 = vst.msk [vmem:[%s764] sm:$0xff] %vm4458, %v5175
        %5177 = vst.msk [vmem:[%s776] sm:$0xff] %vm1010, %v4669
        %5178 = vst.msk [vmem:[%s776 + $0x8] sm:$0xff] %vm1010, %v4670
        %5179 = vst.msk [vmem:[%s776 + $0x10] sm:$0xff] %vm1010, %v4671
        %5180 = vst.msk [vmem:[%s776 + $0x18] sm:$0xff] %vm1010, %v4672
        %5181 = vst.msk [vmem:[%s776 + $0x20] sm:$0xff] %vm1010, %v4673
        %5182 = vst.msk [vmem:[%s776 + $0x28] sm:$0xff] %vm1010, %v4674
        %5183 = vst.msk [vmem:[%s776 + $0x30] sm:$0xff] %vm1010, %v4675
        %5184 = vst.msk [vmem:[%s776 + $0x38] sm:$0xff] %vm1010, %v4676
        %s5185 = sand.u32 %s546, 1
        %s5186 = scalar_lea.sflag [#allocation9], %s5185
        %s5187 = sand.u32 %s546, 1
        %s5188 = smul.addr %s5187, 8
        %s5189 = scalar_lea.vmem [#allocation10], %s5188
        %p5190 = scmp.lt.s32.totalorder %s50, 1
        %s5191 = scalar_select %p5190, %s50, 1
        %s5192 = smul.addr %s5191, 8
        %s5193 = smul.addr %s5192, 8
        %s5194 = scalar_lea.vmem %s24, %s5193
        // Predicated region
        $region117: #{tpu_custom_call.1} parent=111 // pred_check
          %p5195 = pneg %p556
        $region118: #{tpu_custom_call.1} parent=111 // pred_check_branch
          %5197 = sbr.rel (%p5195) target = $region120
        $region119: #{tpu_custom_call.1} parent=111 // pred_region
          %s5199 = ssub.s32 128, 128
          %5200 = vsyncadd %s5186, %s5199
          %s5201 = smul.addr %s50, 128
          %s5202 = scalar_lea.hbm %s23, %s5201
          %s5204 = sshll.u32 %s5189, 4
          %s5205 = int_to_ptr.vmem [resolvable:$true] %s5204
          %5207 = dma.vmem_to_hbm [thread:$0]  %s5205, 128, %s5202, %s5186
        $region120: #{tpu_custom_call.1} parent=111 // pred_fallthru
          _
        // Predicated region
        $region121: #{tpu_custom_call.1} parent=111 // pred_check
          %p5208 = pneg %p582
        $region122: #{tpu_custom_call.1} parent=111 // pred_check_branch
          %5210 = sbr.rel (%p5208) target = $region124
        $region123: #{tpu_custom_call.1} parent=111 // pred_region
          _
        $region124: #{tpu_custom_call.1} parent=111 // pred_fallthru
          _
      $region112: #{tpu_custom_call.1} parent=5 // pred_fallthru
        _
      %p5211 = scmp.le.s32.totalorder 2, %s45
      // Predicated region
      $region125: #{tpu_custom_call.1} parent=5 // pred_check
        %p5212 = pneg %p5211
      $region126: #{tpu_custom_call.1} parent=5 // pred_check_branch
        %5214 = sbr.rel (%p5212) target = $region128
      $region127: #{tpu_custom_call.1} parent=5 // pred_region
        %s5215 = ssub.s32 %s45, 2
        // Predicated region
        $region129: #{tpu_custom_call.1} parent=127 // pred_check
          %p5216 = pneg %p562
        $region130: #{tpu_custom_call.1} parent=127 // pred_check_branch
          %5218 = sbr.rel (%p5216) target = $region132
        $region131: #{tpu_custom_call.1} parent=127 // pred_region
          %s5219 = sand.u32 %s547, 1
          %s5220 = scalar_lea.sflag [#allocation9], %s5219
          %s5221 = sand.u32 %s547, 1
          %s5222 = smul.addr %s5221, 8
          %s5223 = scalar_lea.vmem [#allocation10], %s5222
          %5224 = dma.done %s5220, 128
        $region132: #{tpu_custom_call.1} parent=127 // pred_fallthru
          _
        // Predicated region
        $region133: #{tpu_custom_call.1} parent=127 // pred_check
          %p5225 = pneg %p588
        $region134: #{tpu_custom_call.1} parent=127 // pred_check_branch
          %5227 = sbr.rel (%p5225) target = $region136
        $region135: #{tpu_custom_call.1} parent=127 // pred_region
          %p5228 = scmp.lt.s32.totalorder %s51, 1
          %s5229 = scalar_select %p5228, %s51, 1
          %s5230 = smul.addr %s5229, 8
          %s5231 = smul.addr %s5230, 8
          %s5232 = scalar_lea.vmem %s24, %s5231
        $region136: #{tpu_custom_call.1} parent=127 // pred_fallthru
          _
      $region128: #{tpu_custom_call.1} parent=5 // pred_fallthru
        _
    $region6: #{tpu_custom_call.1} parent=1 // loop_footer
      %s49 = sadd.s32 1, %s45
    $region7: #{tpu_custom_call.1} parent=1 // loop_footer_branch
      %44 = sbr.rel target = $region3
    $region8: #{tpu_custom_call.1} parent=1 // loop_exit
      _
    %5233 = vsyncpa [#allocation8], 1
    %s5234 = scalar_lea.sflag [#allocation8], 1
    %5235 = vsyncpa %s5234, 1
    %5236 = vsyncpa [#allocation9], 1
    %s5237 = scalar_lea.sflag [#allocation9], 1
    %5238 = vsyncpa %s5237, 1

</llo_original>
